<compile_context>
chip_gen: v7x
topology: tpu7x:2x2x1
jax: 0.10.0
libtpu: 0.0.40
codegen_flags: <defaults>
</compile_context>

<pallas_src>
import math
import functools

import jax
import jax.numpy as jnp
from jax.experimental import pallas as pl
from jax.experimental.pallas import tpu as pltpu


# ----------------------------------------------------------------------------
# Fused kernel: LN1 -> +PE -> MHA -> residual -> LN2 -> residual -> conv FFN.
# One batch element per grid step; all tensors in channels-first (C, T).
# ----------------------------------------------------------------------------
def _global_attention_kernel(
        x_ref, pe_ref, g1_ref, b1_ref,
        wqt_ref, bq_ref, wkv_ref, bkv_ref,
        wo_ref, bo_ref, g2_ref, b2_ref,
        w1_ref, fb1_ref, wdw_ref, bdw_ref, w2_ref, fb2_ref,
        o_ref, *, n_head, ksize):
    eps = 1e-5
    bf16 = jnp.bfloat16

    x = x_ref[...].astype(jnp.float32)                       # (C, T), lane-dense
    C, T = x.shape
    dh = C // n_head

    # ---- LayerNorm 1 over channels (f32 stats are (1, T)) + positional enc ----
    mu = jnp.mean(x, axis=0, keepdims=True)
    var = jnp.mean(jnp.square(x - mu), axis=0, keepdims=True)
    y = (x - mu) * jax.lax.rsqrt(var + eps) * g1_ref[...] + b1_ref[...]
    y = y + pe_ref[...]
    residual = y                                              # (C, T)
    y16 = y.astype(bf16)

    # ---- Fused projections (weights already bf16 at rest) ----
    # K/V together: (2C, C) @ (C, T) -> (2C, T); bias folded into f32 accum.
    kv = jnp.dot(wkv_ref[...], y16,
                 preferred_element_type=jnp.float32) + bkv_ref[...]
    # Q in (T, C) orientation (one small transpose); 1/sqrt(dh) folded in Wq/bq.
    q_t = jnp.dot(y.T.astype(bf16), wqt_ref[...],
                  preferred_element_type=jnp.float32) + bq_ref[...]    # (T, C)
    q_t16 = q_t.astype(bf16)

    # ---- Per-head attention (scores stay f32, softmax denom via EUP recip) ----
    heads = []
    for h in range(n_head):                                   # small static unroll
        kh16 = kv[h * dh:(h + 1) * dh, :].astype(bf16)        # (dh, T) sublane slice
        vh16 = kv[C + h * dh:C + (h + 1) * dh, :].astype(bf16)
        qh16 = q_t16[:, h * dh:(h + 1) * dh]                  # (T, dh) view
        s = jnp.dot(qh16, kh16, preferred_element_type=jnp.float32)    # (T, T)
        s = s - jnp.max(s, axis=-1, keepdims=True)
        p = jnp.exp(s)
        p = p * pl.reciprocal(jnp.sum(p, axis=-1, keepdims=True), approx=True)
        # oh^T (dh, T_q): contract key axis of both operands (no relayout of p).
        oh = jax.lax.dot_general(vh16, p.astype(bf16),
                                 (((1,), (1,)), ((), ())),
                                 preferred_element_type=jnp.float32)
        heads.append(oh)
    heads16 = jnp.concatenate(heads, axis=0).astype(bf16)     # (C, T)

    # Single output projection: (C, C) @ (C, T) -> (C, T), bias folded in.
    attn = jnp.dot(wo_ref[...], heads16,
                   preferred_element_type=jnp.float32) + bo_ref[...]

    # dropout identity (eval) -> inner residual -> LN2 -> outer residual with x
    z = attn + residual
    mu2 = jnp.mean(z, axis=0, keepdims=True)
    var2 = jnp.mean(jnp.square(z - mu2), axis=0, keepdims=True)
    z = (z - mu2) * jax.lax.rsqrt(var2 + eps) * g2_ref[...] + b2_ref[...]
    z = z + x

    # ---- FFN: pointwise -> ReLU -> depthwise(k) -> ReLU -> pointwise (+res) ----
    h1 = jnp.dot(w1_ref[...], z.astype(bf16),
                 preferred_element_type=jnp.float32) + fb1_ref[...]
    h1 = jnp.maximum(h1, 0.0)                                 # (H, T)
    Hh = h1.shape[0]

    # Depthwise 'same' conv along time (lane axis) via XLU rolls + boundary
    # masks; iota hoisted once, center tap and bias folded into the init.
    pad = (ksize - 1) // 2
    col = jax.lax.broadcasted_iota(jnp.int32, (Hh, T), 1)
    wdw = wdw_ref[...]                                        # (H, ksize) f32
    acc = h1 * wdw[:, pad:pad + 1] + bdw_ref[...]             # shift-0 tap, no mask
    for k in range(ksize):
        shift = pad - k                                       # tap reads h1[t + k - pad]
        if shift == 0:
            continue
        rolled = pltpu.roll(h1, shift=shift % T, axis=1)
        if shift > 0:
            tap = jnp.where(col >= shift, rolled, 0.0)
        else:
            tap = jnp.where(col < T + shift, rolled, 0.0)
        acc = acc + tap * wdw[:, k:k + 1]
    h2 = jnp.maximum(acc, 0.0)

    out = jnp.dot(w2_ref[...], h2.astype(bf16),
                  preferred_element_type=jnp.float32) + fb2_ref[...]
    out = out + z                                             # FFN residual

    o_ref[...] = out.astype(o_ref.dtype)                      # (C, T) lane-dense store


# ----------------------------------------------------------------------------
# Wrapper
# ----------------------------------------------------------------------------
def global_attention_forward(x, kp, n_head, ksize):
    """x: (B, C, T) channels-first (PyTorch Conv1d convention) -> (B, C, T)."""
    B, C, T = x.shape
    assert C % n_head == 0, f"in_chan={C} not divisible by n_head={n_head}"
    assert ksize % 2 == 1, "depthwise 'same' padding assumes an odd kernel_size"
    assert T >= ksize, "roll+mask depthwise conv requires T >= kernel_size"
    H = kp["ffn_w1"].shape[0]

    def full2(shape):
        return pl.BlockSpec(shape, lambda b: (0, 0))

    kernel = functools.partial(_global_attention_kernel,
                               n_head=n_head, ksize=ksize)
    return pl.pallas_call(
        kernel,
        out_shape=jax.ShapeDtypeStruct((B, C, T), x.dtype),
        grid=(B,),                                    # one fused step per batch elem
        in_specs=[
            pl.BlockSpec((None, C, T), lambda b: (b, 0, 0)),   # x, native layout
            full2((C, T)),                                     # pe (transposed)
            full2((C, 1)), full2((C, 1)),                      # ln1 gamma/beta
            full2((C, C)), full2((1, C)),                      # WqT (scale folded), bq
            full2((2 * C, C)), full2((2 * C, 1)),              # fused Wk;Wv, bk;bv
            full2((C, C)), full2((C, 1)),                      # Wo, bo
            full2((C, 1)), full2((C, 1)),                      # ln2 gamma/beta
            full2((H, C)), full2((H, 1)),                      # FFN pointwise in
            full2((H, ksize)), full2((H, 1)),                  # FFN depthwise
            full2((C, H)), full2((C, 1)),                      # FFN pointwise out
        ],
        out_specs=pl.BlockSpec((None, C, T), lambda b: (b, 0, 0)),
        compiler_params=pltpu.CompilerParams(
            dimension_semantics=("parallel",),                 # megacore / v7x 2-TC over B
            vmem_limit_bytes=32 * 1024 * 1024),
    )(x, kp["pe"], kp["ln1_g"], kp["ln1_b"],
      kp["wq_t"], kp["bq"], kp["wkv"], kp["bkv"],
      kp["wo"], kp["bo"], kp["ln2_g"], kp["ln2_b"],
      kp["ffn_w1"], kp["ffn_b1"], kp["ffn_wdw"], kp["ffn_bdw"],
      kp["ffn_w2"], kp["ffn_b2"])


# ----------------------------------------------------------------------------
# Host-side parameter construction (PyTorch layouts) + kernel-friendly prep.
# ----------------------------------------------------------------------------
def make_params(key, in_chan, hid_chan, T, ksize, max_len=10000):
    """Parameters in (squeezed) PyTorch layouts, as the module would hold them."""
    C, H = in_chan, hid_chan
    ks = jax.random.split(key, 14)
    s = 0.05

    position = jnp.arange(T, dtype=jnp.float32)[:, None]
    div_term = jnp.exp(jnp.arange(0, C, 2, dtype=jnp.float32)
                       * -(jnp.log(jnp.float32(max_len)) / C))
    pe = jnp.zeros((T, C), jnp.float32)
    pe = pe.at[:, 0::2].set(jnp.sin(position * div_term))
    pe = pe.at[:, 1::2].set(jnp.cos(position * div_term))

    return {
        "pe": pe,
        "ln1_g": 1.0 + 0.1 * jax.random.normal(ks[0], (C,), jnp.float32),
        "ln1_b": 0.02 * jax.random.normal(ks[1], (C,), jnp.float32),
        "in_proj_w": s * jax.random.normal(ks[2], (3 * C, C), jnp.float32),
        "in_proj_b": 0.02 * jax.random.normal(ks[3], (3 * C,), jnp.float32),
        "out_proj_w": s * jax.random.normal(ks[4], (C, C), jnp.float32),
        "out_proj_b": 0.02 * jax.random.normal(ks[5], (C,), jnp.float32),
        "ln2_g": 1.0 + 0.1 * jax.random.normal(ks[6], (C,), jnp.float32),
        "ln2_b": 0.02 * jax.random.normal(ks[7], (C,), jnp.float32),
        "ffn_w1": s * jax.random.normal(ks[8], (H, C), jnp.float32),
        "ffn_b1": 0.02 * jax.random.normal(ks[9], (H,), jnp.float32),
        "ffn_wdw": s * jax.random.normal(ks[10], (H, ksize), jnp.float32),
        "ffn_bdw": 0.02 * jax.random.normal(ks[11], (H,), jnp.float32),
        "ffn_w2": s * jax.random.normal(ks[12], (C, H), jnp.float32),
        "ffn_b2": 0.02 * jax.random.normal(ks[13], (C,), jnp.float32),
    }


def prep_params(p, n_head):
    """Fuse / transpose / scale-fold weights into kernel layouts, bf16 at rest."""
    C = p["out_proj_w"].shape[0]
    dh = C // n_head
    scale = 1.0 / math.sqrt(dh)
    bf16 = jnp.bfloat16

    wq = p["in_proj_w"][:C] * scale             # scale folded into Wq and bq (f32)
    bq = p["in_proj_b"][:C] * scale
    wkv = p["in_proj_w"][C:]                    # (2C, C): K rows then V rows
    bkv = p["in_proj_b"][C:]

    def col(v):
        return v.reshape(-1, 1)

    return {
        "pe": p["pe"].T,                                     # (C, T) f32
        "ln1_g": col(p["ln1_g"]), "ln1_b": col(p["ln1_b"]),  # (C, 1) f32
        "wq_t": wq.T.astype(bf16),                           # (C, C): y_t @ WqT
        "bq": bq.reshape(1, C),                              # (1, C) f32
        "wkv": wkv.astype(bf16),                             # (2C, C)
        "bkv": col(bkv),                                     # (2C, 1) f32
        "wo": p["out_proj_w"].astype(bf16),                  # (C, C)
        "bo": col(p["out_proj_b"]),
        "ln2_g": col(p["ln2_g"]), "ln2_b": col(p["ln2_b"]),
        "ffn_w1": p["ffn_w1"].astype(bf16),                  # (H, C)
        "ffn_b1": col(p["ffn_b1"]),
        "ffn_wdw": p["ffn_wdw"],                             # (H, ksize) f32 (tiny)
        "ffn_bdw": col(p["ffn_bdw"]),
        "ffn_w2": p["ffn_w2"].astype(bf16),                  # (C, H)
        "ffn_b2": col(p["ffn_b2"]),
    }


# ----------------------------------------------------------------------------
# Pure-JAX reference mirroring the PyTorch module (bf16 matmuls like the MXU).
# ----------------------------------------------------------------------------
def _reference(x, p, n_head, ksize):
    C = p["out_proj_w"].shape[0]
    dh = C // n_head
    scale = 1.0 / math.sqrt(dh)
    eps = 1e-5

    def dot16(a, b):
        return jnp.dot(a.astype(jnp.bfloat16), b.astype(jnp.bfloat16),
                       preferred_element_type=jnp.float32)

    def ln(v, g, b):
        mu = jnp.mean(v, -1, keepdims=True)
        var = jnp.mean((v - mu) ** 2, -1, keepdims=True)
        return (v - mu) * jax.lax.rsqrt(var + eps) * g + b

    def one(x_ct):                               # (C, T)
        xt = x_ct.T                              # (T, C)
        y = ln(xt, p["ln1_g"], p["ln1_b"]) + p["pe"]
        res = y
        q = dot16(y, (p["in_proj_w"][:C] * scale).T) + p["in_proj_b"][:C] * scale
        k = dot16(y, p["in_proj_w"][C:2 * C].T) + p["in_proj_b"][C:2 * C]
        v = dot16(y, p["in_proj_w"][2 * C:].T) + p["in_proj_b"][2 * C:]
        outs = []
        for h in range(n_head):
            sl = slice(h * dh, (h + 1) * dh)
            s = dot16(q[:, sl], k[:, sl].T)
            pr = jax.nn.softmax(s, axis=-1)
            outs.append(dot16(pr, v[:, sl]))
        attn = dot16(jnp.concatenate(outs, -1), p["out_proj_w"].T) + p["out_proj_b"]
        z = ln(attn + res, p["ln2_g"], p["ln2_b"]) + xt
        # FFN (assumed pointwise -> ReLU -> depthwise -> ReLU -> pointwise + res)
        h1 = jnp.maximum(dot16(z, p["ffn_w1"].T) + p["ffn_b1"], 0.0)
        T, H = h1.shape
        pad = (ksize - 1) // 2
        hp = jnp.concatenate([jnp.zeros((pad, H)), h1, jnp.zeros((pad, H))], 0)
        acc = jnp.zeros_like(h1)
        wdw_t = p["ffn_wdw"].T                   # (ksize, H)
        for kk in range(ksize):
            acc = acc + hp[kk:kk + T, :] * wdw_t[kk, :]
        h2 = jnp.maximum(acc + p["ffn_bdw"], 0.0)
        out = dot16(h2, p["ffn_w2"].T) + p["ffn_b2"]
        return (out + z).T                       # back to (C, T)

    return jax.vmap(one)(x)


if __name__ == "__main__":
    B, C, T = 2, 64, 128          # channels-first; T=128 keeps lanes dense
    n_head = 8
    hid_chan = 2 * C              # 128
    ksize = 5

    key = jax.random.PRNGKey(0)
    kx, kp = jax.random.split(key)
    x = jax.random.normal(kx, (B, C, T), jnp.float32)
    params = make_params(kp, C, hid_chan, T, ksize)
    kparams = prep_params(params, n_head)

    out = global_attention_forward(x, kparams, n_head, ksize)
    out = jax.block_until_ready(out)
    assert out.shape == (B, C, T), out.shape

    ref = jax.block_until_ready(_reference(x, params, n_head, ksize))
    max_err = float(jnp.max(jnp.abs(out - ref)))
    assert jnp.allclose(out, ref, rtol=1e-2, atol=1e-2), max_err

    print("KERNEL_OK")
</pallas_src>

<mosaic_0001>
module attributes {stable_mosaic.version = 11 : i64} {
  func.func @_global_attention_kernel(%arg0: i32, %arg1: memref<1x64x128xf32, #tpu.memory_space<vmem>>, %arg2: memref<64x128xf32, #tpu.memory_space<vmem>>, %arg3: memref<64x1xf32, #tpu.memory_space<vmem>>, %arg4: memref<64x1xf32, #tpu.memory_space<vmem>>, %arg5: memref<64x64xbf16, #tpu.memory_space<vmem>>, %arg6: memref<1x64xf32, #tpu.memory_space<vmem>>, %arg7: memref<128x64xbf16, #tpu.memory_space<vmem>>, %arg8: memref<128x1xf32, #tpu.memory_space<vmem>>, %arg9: memref<64x64xbf16, #tpu.memory_space<vmem>>, %arg10: memref<64x1xf32, #tpu.memory_space<vmem>>, %arg11: memref<64x1xf32, #tpu.memory_space<vmem>>, %arg12: memref<64x1xf32, #tpu.memory_space<vmem>>, %arg13: memref<128x64xbf16, #tpu.memory_space<vmem>>, %arg14: memref<128x1xf32, #tpu.memory_space<vmem>>, %arg15: memref<128x5xf32, #tpu.memory_space<vmem>>, %arg16: memref<128x1xf32, #tpu.memory_space<vmem>>, %arg17: memref<64x128xbf16, #tpu.memory_space<vmem>>, %arg18: memref<64x1xf32, #tpu.memory_space<vmem>>, %arg19: memref<1x64x128xf32, #tpu.memory_space<vmem>>) attributes {dimension_semantics = [#tpu.dimension_semantics<parallel>], iteration_bounds = array<i64: 2>, scalar_prefetch = 0 : i64, scratch_operands = 0 : i64, tpu.core_type = #tpu.core_type<tc>, window_params = [{transform_indices = @transform_0, window_bounds = array<i64: 1, 64, 128>}, {pipeline_mode = #tpu.pipeline_mode<synchronous>, transform_indices = @transform_1, window_bounds = array<i64: 64, 128>}, {pipeline_mode = #tpu.pipeline_mode<synchronous>, transform_indices = @transform_2, window_bounds = array<i64: 64, 1>}, {pipeline_mode = #tpu.pipeline_mode<synchronous>, transform_indices = @transform_3, window_bounds = array<i64: 64, 1>}, {pipeline_mode = #tpu.pipeline_mode<synchronous>, transform_indices = @transform_4, window_bounds = array<i64: 64, 64>}, {pipeline_mode = #tpu.pipeline_mode<synchronous>, transform_indices = @transform_5, window_bounds = array<i64: 1, 64>}, {pipeline_mode = #tpu.pipeline_mode<synchronous>, transform_indices = @transform_6, window_bounds = array<i64: 128, 64>}, {pipeline_mode = #tpu.pipeline_mode<synchronous>, transform_indices = @transform_7, window_bounds = array<i64: 128, 1>}, {pipeline_mode = #tpu.pipeline_mode<synchronous>, transform_indices = @transform_8, window_bounds = array<i64: 64, 64>}, {pipeline_mode = #tpu.pipeline_mode<synchronous>, transform_indices = @transform_9, window_bounds = array<i64: 64, 1>}, {pipeline_mode = #tpu.pipeline_mode<synchronous>, transform_indices = @transform_10, window_bounds = array<i64: 64, 1>}, {pipeline_mode = #tpu.pipeline_mode<synchronous>, transform_indices = @transform_11, window_bounds = array<i64: 64, 1>}, {pipeline_mode = #tpu.pipeline_mode<synchronous>, transform_indices = @transform_12, window_bounds = array<i64: 128, 64>}, {pipeline_mode = #tpu.pipeline_mode<synchronous>, transform_indices = @transform_13, window_bounds = array<i64: 128, 1>}, {pipeline_mode = #tpu.pipeline_mode<synchronous>, transform_indices = @transform_14, window_bounds = array<i64: 128, 5>}, {pipeline_mode = #tpu.pipeline_mode<synchronous>, transform_indices = @transform_15, window_bounds = array<i64: 128, 1>}, {pipeline_mode = #tpu.pipeline_mode<synchronous>, transform_indices = @transform_16, window_bounds = array<i64: 64, 128>}, {pipeline_mode = #tpu.pipeline_mode<synchronous>, transform_indices = @transform_17, window_bounds = array<i64: 64, 1>}, {transform_indices = @transform_18, window_bounds = array<i64: 1, 64, 128>}]} {
    %c0 = arith.constant 0 : index
    %c0_0 = arith.constant 0 : index
    %c0_1 = arith.constant 0 : index
    %0 = vector.load %arg1[%c0, %c0_0, %c0_1] : memref<1x64x128xf32, #tpu.memory_space<vmem>>, vector<1x64x128xf32>
    %1 = vector.shape_cast %0 : vector<1x64x128xf32> to vector<64x128xf32>
    %cst = arith.constant dense<0.000000e+00> : vector<128xf32>
    %2 = vector.multi_reduction <add>, %1, %cst [0] : vector<64x128xf32> to vector<128xf32>
    %3 = vector.shape_cast %2 : vector<128xf32> to vector<1x128xf32>
    %cst_2 = arith.constant 6.400000e+01 : f32
    %4 = vector.broadcast %cst_2 : f32 to vector<1x128xf32>
    %5 = arith.divf %3, %4 : vector<1x128xf32>
    %6 = vector.broadcast %5 : vector<1x128xf32> to vector<64x128xf32>
    %7 = arith.subf %1, %6 : vector<64x128xf32>
    %8 = arith.mulf %7, %7 : vector<64x128xf32>
    %cst_3 = arith.constant dense<0.000000e+00> : vector<128xf32>
    %9 = vector.multi_reduction <add>, %8, %cst_3 [0] : vector<64x128xf32> to vector<128xf32>
    %10 = vector.shape_cast %9 : vector<128xf32> to vector<1x128xf32>
    %cst_4 = arith.constant 6.400000e+01 : f32
    %11 = vector.broadcast %cst_4 : f32 to vector<1x128xf32>
    %12 = arith.divf %10, %11 : vector<1x128xf32>
    %13 = vector.broadcast %5 : vector<1x128xf32> to vector<64x128xf32>
    %14 = arith.subf %1, %13 : vector<64x128xf32>
    %cst_5 = arith.constant 9.99999974E-6 : f32
    %15 = vector.broadcast %cst_5 : f32 to vector<1x128xf32>
    %16 = arith.addf %12, %15 : vector<1x128xf32>
    %17 = math.rsqrt %16 : vector<1x128xf32>
    %18 = vector.broadcast %17 : vector<1x128xf32> to vector<64x128xf32>
    %19 = arith.mulf %14, %18 : vector<64x128xf32>
    %c0_6 = arith.constant 0 : index
    %c0_7 = arith.constant 0 : index
    %20 = vector.load %arg3[%c0_6, %c0_7] : memref<64x1xf32, #tpu.memory_space<vmem>>, vector<64x1xf32>
    %21 = vector.broadcast %20 : vector<64x1xf32> to vector<64x128xf32>
    %22 = arith.mulf %19, %21 : vector<64x128xf32>
    %c0_8 = arith.constant 0 : index
    %c0_9 = arith.constant 0 : index
    %23 = vector.load %arg4[%c0_8, %c0_9] : memref<64x1xf32, #tpu.memory_space<vmem>>, vector<64x1xf32>
    %24 = vector.broadcast %23 : vector<64x1xf32> to vector<64x128xf32>
    %25 = arith.addf %22, %24 : vector<64x128xf32>
    %c0_10 = arith.constant 0 : index
    %c0_11 = arith.constant 0 : index
    %26 = vector.load %arg2[%c0_10, %c0_11] : memref<64x128xf32, #tpu.memory_space<vmem>>, vector<64x128xf32>
    %27 = arith.addf %25, %26 : vector<64x128xf32>
    %28 = arith.truncf %27 : vector<64x128xf32> to vector<64x128xbf16>
    %c0_12 = arith.constant 0 : index
    %c0_13 = arith.constant 0 : index
    %29 = vector.load %arg7[%c0_12, %c0_13] : memref<128x64xbf16, #tpu.memory_space<vmem>>, vector<128x64xbf16>
    %cst_14 = arith.constant dense<0.000000e+00> : vector<128x128xf32>
    %30 = tpu.matmul %29, %28, %cst_14 {dimension_numbers = #tpu.dot_dimension_numbers<[1], [0], [0], [1], [0, 0, 1, 1], [], []>} : vector<128x64xbf16>, vector<64x128xbf16>, vector<128x128xf32> -> vector<128x128xf32>
    %c0_15 = arith.constant 0 : index
    %c0_16 = arith.constant 0 : index
    %31 = vector.load %arg8[%c0_15, %c0_16] : memref<128x1xf32, #tpu.memory_space<vmem>>, vector<128x1xf32>
    %32 = vector.broadcast %31 : vector<128x1xf32> to vector<128x128xf32>
    %33 = arith.addf %30, %32 : vector<128x128xf32>
    %34 = tpu.transpose %27, [1, 0] : vector<64x128xf32> -> vector<128x64xf32>
    %35 = arith.truncf %34 : vector<128x64xf32> to vector<128x64xbf16>
    %c0_17 = arith.constant 0 : index
    %c0_18 = arith.constant 0 : index
    %36 = vector.load %arg5[%c0_17, %c0_18] : memref<64x64xbf16, #tpu.memory_space<vmem>>, vector<64x64xbf16>
    %cst_19 = arith.constant dense<0.000000e+00> : vector<128x64xf32>
    %37 = tpu.matmul %35, %36, %cst_19 {dimension_numbers = #tpu.dot_dimension_numbers<[1], [0], [0], [1], [0, 0, 1, 1], [], []>} : vector<128x64xbf16>, vector<64x64xbf16>, vector<128x64xf32> -> vector<128x64xf32>
    %c0_20 = arith.constant 0 : index
    %c0_21 = arith.constant 0 : index
    %38 = vector.load %arg6[%c0_20, %c0_21] : memref<1x64xf32, #tpu.memory_space<vmem>>, vector<1x64xf32>
    %39 = vector.broadcast %38 : vector<1x64xf32> to vector<128x64xf32>
    %40 = arith.addf %37, %39 : vector<128x64xf32>
    %41 = arith.truncf %40 : vector<128x64xf32> to vector<128x64xbf16>
    %42 = vector.extract_strided_slice %33 {offsets = [0, 0], sizes = [8, 128], strides = [1, 1]} : vector<128x128xf32> to vector<8x128xf32>
    %43 = arith.truncf %42 : vector<8x128xf32> to vector<8x128xbf16>
    %44 = vector.extract_strided_slice %33 {offsets = [64, 0], sizes = [8, 128], strides = [1, 1]} : vector<128x128xf32> to vector<8x128xf32>
    %45 = arith.truncf %44 : vector<8x128xf32> to vector<8x128xbf16>
    %46 = vector.extract_strided_slice %41 {offsets = [0, 0], sizes = [128, 8], strides = [1, 1]} : vector<128x64xbf16> to vector<128x8xbf16>
    %cst_22 = arith.constant dense<0.000000e+00> : vector<128x128xf32>
    %47 = tpu.matmul %46, %43, %cst_22 {dimension_numbers = #tpu.dot_dimension_numbers<[1], [0], [0], [1], [0, 0, 1, 1], [], []>} : vector<128x8xbf16>, vector<8x128xbf16>, vector<128x128xf32> -> vector<128x128xf32>
    %cst_23 = arith.constant dense<0xFF800000> : vector<128xf32>
    %48 = vector.multi_reduction <maximumf>, %47, %cst_23 [1] : vector<128x128xf32> to vector<128xf32>
    %49 = vector.shape_cast %48 : vector<128xf32> to vector<128x1xf32>
    %50 = vector.broadcast %49 : vector<128x1xf32> to vector<128x128xf32>
    %51 = arith.subf %47, %50 : vector<128x128xf32>
    %52 = math.exp %51 : vector<128x128xf32>
    %cst_24 = arith.constant dense<0.000000e+00> : vector<128xf32>
    %53 = vector.multi_reduction <add>, %52, %cst_24 [1] : vector<128x128xf32> to vector<128xf32>
    %54 = vector.shape_cast %53 : vector<128xf32> to vector<128x1xf32>
    %55 = tpu.reciprocal %54 {approx = true} : vector<128x1xf32> -> vector<128x1xf32>
    %56 = vector.broadcast %55 : vector<128x1xf32> to vector<128x128xf32>
    %57 = arith.mulf %52, %56 : vector<128x128xf32>
    %58 = arith.truncf %57 : vector<128x128xf32> to vector<128x128xbf16>
    %cst_25 = arith.constant dense<0.000000e+00> : vector<8x128xf32>
    %59 = tpu.matmul %45, %58, %cst_25 {dimension_numbers = #tpu.dot_dimension_numbers<[1], [1], [0], [0], [0, 0, 1, 0], [], []>} : vector<8x128xbf16>, vector<128x128xbf16>, vector<8x128xf32> -> vector<8x128xf32>
    %60 = vector.extract_strided_slice %33 {offsets = [8, 0], sizes = [8, 128], strides = [1, 1]} : vector<128x128xf32> to vector<8x128xf32>
    %61 = arith.truncf %60 : vector<8x128xf32> to vector<8x128xbf16>
    %62 = vector.extract_strided_slice %33 {offsets = [72, 0], sizes = [8, 128], strides = [1, 1]} : vector<128x128xf32> to vector<8x128xf32>
    %63 = arith.truncf %62 : vector<8x128xf32> to vector<8x128xbf16>
    %64 = vector.extract_strided_slice %41 {offsets = [0, 8], sizes = [128, 8], strides = [1, 1]} : vector<128x64xbf16> to vector<128x8xbf16>
    %cst_26 = arith.constant dense<0.000000e+00> : vector<128x128xf32>
    %65 = tpu.matmul %64, %61, %cst_26 {dimension_numbers = #tpu.dot_dimension_numbers<[1], [0], [0], [1], [0, 0, 1, 1], [], []>} : vector<128x8xbf16>, vector<8x128xbf16>, vector<128x128xf32> -> vector<128x128xf32>
    %cst_27 = arith.constant dense<0xFF800000> : vector<128xf32>
    %66 = vector.multi_reduction <maximumf>, %65, %cst_27 [1] : vector<128x128xf32> to vector<128xf32>
    %67 = vector.shape_cast %66 : vector<128xf32> to vector<128x1xf32>
    %68 = vector.broadcast %67 : vector<128x1xf32> to vector<128x128xf32>
    %69 = arith.subf %65, %68 : vector<128x128xf32>
    %70 = math.exp %69 : vector<128x128xf32>
    %cst_28 = arith.constant dense<0.000000e+00> : vector<128xf32>
    %71 = vector.multi_reduction <add>, %70, %cst_28 [1] : vector<128x128xf32> to vector<128xf32>
    %72 = vector.shape_cast %71 : vector<128xf32> to vector<128x1xf32>
    %73 = tpu.reciprocal %72 {approx = true} : vector<128x1xf32> -> vector<128x1xf32>
    %74 = vector.broadcast %73 : vector<128x1xf32> to vector<128x128xf32>
    %75 = arith.mulf %70, %74 : vector<128x128xf32>
    %76 = arith.truncf %75 : vector<128x128xf32> to vector<128x128xbf16>
    %cst_29 = arith.constant dense<0.000000e+00> : vector<8x128xf32>
    %77 = tpu.matmul %63, %76, %cst_29 {dimension_numbers = #tpu.dot_dimension_numbers<[1], [1], [0], [0], [0, 0, 1, 0], [], []>} : vector<8x128xbf16>, vector<128x128xbf16>, vector<8x128xf32> -> vector<8x128xf32>
    %78 = vector.extract_strided_slice %33 {offsets = [16, 0], sizes = [8, 128], strides = [1, 1]} : vector<128x128xf32> to vector<8x128xf32>
    %79 = arith.truncf %78 : vector<8x128xf32> to vector<8x128xbf16>
    %80 = vector.extract_strided_slice %33 {offsets = [80, 0], sizes = [8, 128], strides = [1, 1]} : vector<128x128xf32> to vector<8x128xf32>
    %81 = arith.truncf %80 : vector<8x128xf32> to vector<8x128xbf16>
    %82 = vector.extract_strided_slice %41 {offsets = [0, 16], sizes = [128, 8], strides = [1, 1]} : vector<128x64xbf16> to vector<128x8xbf16>
    %cst_30 = arith.constant dense<0.000000e+00> : vector<128x128xf32>
    %83 = tpu.matmul %82, %79, %cst_30 {dimension_numbers = #tpu.dot_dimension_numbers<[1], [0], [0], [1], [0, 0, 1, 1], [], []>} : vector<128x8xbf16>, vector<8x128xbf16>, vector<128x128xf32> -> vector<128x128xf32>
    %cst_31 = arith.constant dense<0xFF800000> : vector<128xf32>
    %84 = vector.multi_reduction <maximumf>, %83, %cst_31 [1] : vector<128x128xf32> to vector<128xf32>
    %85 = vector.shape_cast %84 : vector<128xf32> to vector<128x1xf32>
    %86 = vector.broadcast %85 : vector<128x1xf32> to vector<128x128xf32>
    %87 = arith.subf %83, %86 : vector<128x128xf32>
    %88 = math.exp %87 : vector<128x128xf32>
    %cst_32 = arith.constant dense<0.000000e+00> : vector<128xf32>
    %89 = vector.multi_reduction <add>, %88, %cst_32 [1] : vector<128x128xf32> to vector<128xf32>
    %90 = vector.shape_cast %89 : vector<128xf32> to vector<128x1xf32>
    %91 = tpu.reciprocal %90 {approx = true} : vector<128x1xf32> -> vector<128x1xf32>
    %92 = vector.broadcast %91 : vector<128x1xf32> to vector<128x128xf32>
    %93 = arith.mulf %88, %92 : vector<128x128xf32>
    %94 = arith.truncf %93 : vector<128x128xf32> to vector<128x128xbf16>
    %cst_33 = arith.constant dense<0.000000e+00> : vector<8x128xf32>
    %95 = tpu.matmul %81, %94, %cst_33 {dimension_numbers = #tpu.dot_dimension_numbers<[1], [1], [0], [0], [0, 0, 1, 0], [], []>} : vector<8x128xbf16>, vector<128x128xbf16>, vector<8x128xf32> -> vector<8x128xf32>
    %96 = vector.extract_strided_slice %33 {offsets = [24, 0], sizes = [8, 128], strides = [1, 1]} : vector<128x128xf32> to vector<8x128xf32>
    %97 = arith.truncf %96 : vector<8x128xf32> to vector<8x128xbf16>
    %98 = vector.extract_strided_slice %33 {offsets = [88, 0], sizes = [8, 128], strides = [1, 1]} : vector<128x128xf32> to vector<8x128xf32>
    %99 = arith.truncf %98 : vector<8x128xf32> to vector<8x128xbf16>
    %100 = vector.extract_strided_slice %41 {offsets = [0, 24], sizes = [128, 8], strides = [1, 1]} : vector<128x64xbf16> to vector<128x8xbf16>
    %cst_34 = arith.constant dense<0.000000e+00> : vector<128x128xf32>
    %101 = tpu.matmul %100, %97, %cst_34 {dimension_numbers = #tpu.dot_dimension_numbers<[1], [0], [0], [1], [0, 0, 1, 1], [], []>} : vector<128x8xbf16>, vector<8x128xbf16>, vector<128x128xf32> -> vector<128x128xf32>
    %cst_35 = arith.constant dense<0xFF800000> : vector<128xf32>
    %102 = vector.multi_reduction <maximumf>, %101, %cst_35 [1] : vector<128x128xf32> to vector<128xf32>
    %103 = vector.shape_cast %102 : vector<128xf32> to vector<128x1xf32>
    %104 = vector.broadcast %103 : vector<128x1xf32> to vector<128x128xf32>
    %105 = arith.subf %101, %104 : vector<128x128xf32>
    %106 = math.exp %105 : vector<128x128xf32>
    %cst_36 = arith.constant dense<0.000000e+00> : vector<128xf32>
    %107 = vector.multi_reduction <add>, %106, %cst_36 [1] : vector<128x128xf32> to vector<128xf32>
    %108 = vector.shape_cast %107 : vector<128xf32> to vector<128x1xf32>
    %109 = tpu.reciprocal %108 {approx = true} : vector<128x1xf32> -> vector<128x1xf32>
    %110 = vector.broadcast %109 : vector<128x1xf32> to vector<128x128xf32>
    %111 = arith.mulf %106, %110 : vector<128x128xf32>
    %112 = arith.truncf %111 : vector<128x128xf32> to vector<128x128xbf16>
    %cst_37 = arith.constant dense<0.000000e+00> : vector<8x128xf32>
    %113 = tpu.matmul %99, %112, %cst_37 {dimension_numbers = #tpu.dot_dimension_numbers<[1], [1], [0], [0], [0, 0, 1, 0], [], []>} : vector<8x128xbf16>, vector<128x128xbf16>, vector<8x128xf32> -> vector<8x128xf32>
    %114 = vector.extract_strided_slice %33 {offsets = [32, 0], sizes = [8, 128], strides = [1, 1]} : vector<128x128xf32> to vector<8x128xf32>
    %115 = arith.truncf %114 : vector<8x128xf32> to vector<8x128xbf16>
    %116 = vector.extract_strided_slice %33 {offsets = [96, 0], sizes = [8, 128], strides = [1, 1]} : vector<128x128xf32> to vector<8x128xf32>
    %117 = arith.truncf %116 : vector<8x128xf32> to vector<8x128xbf16>
    %118 = vector.extract_strided_slice %41 {offsets = [0, 32], sizes = [128, 8], strides = [1, 1]} : vector<128x64xbf16> to vector<128x8xbf16>
    %cst_38 = arith.constant dense<0.000000e+00> : vector<128x128xf32>
    %119 = tpu.matmul %118, %115, %cst_38 {dimension_numbers = #tpu.dot_dimension_numbers<[1], [0], [0], [1], [0, 0, 1, 1], [], []>} : vector<128x8xbf16>, vector<8x128xbf16>, vector<128x128xf32> -> vector<128x128xf32>
    %cst_39 = arith.constant dense<0xFF800000> : vector<128xf32>
    %120 = vector.multi_reduction <maximumf>, %119, %cst_39 [1] : vector<128x128xf32> to vector<128xf32>
    %121 = vector.shape_cast %120 : vector<128xf32> to vector<128x1xf32>
    %122 = vector.broadcast %121 : vector<128x1xf32> to vector<128x128xf32>
    %123 = arith.subf %119, %122 : vector<128x128xf32>
    %124 = math.exp %123 : vector<128x128xf32>
    %cst_40 = arith.constant dense<0.000000e+00> : vector<128xf32>
    %125 = vector.multi_reduction <add>, %124, %cst_40 [1] : vector<128x128xf32> to vector<128xf32>
    %126 = vector.shape_cast %125 : vector<128xf32> to vector<128x1xf32>
    %127 = tpu.reciprocal %126 {approx = true} : vector<128x1xf32> -> vector<128x1xf32>
    %128 = vector.broadcast %127 : vector<128x1xf32> to vector<128x128xf32>
    %129 = arith.mulf %124, %128 : vector<128x128xf32>
    %130 = arith.truncf %129 : vector<128x128xf32> to vector<128x128xbf16>
    %cst_41 = arith.constant dense<0.000000e+00> : vector<8x128xf32>
    %131 = tpu.matmul %117, %130, %cst_41 {dimension_numbers = #tpu.dot_dimension_numbers<[1], [1], [0], [0], [0, 0, 1, 0], [], []>} : vector<8x128xbf16>, vector<128x128xbf16>, vector<8x128xf32> -> vector<8x128xf32>
    %132 = vector.extract_strided_slice %33 {offsets = [40, 0], sizes = [8, 128], strides = [1, 1]} : vector<128x128xf32> to vector<8x128xf32>
    %133 = arith.truncf %132 : vector<8x128xf32> to vector<8x128xbf16>
    %134 = vector.extract_strided_slice %33 {offsets = [104, 0], sizes = [8, 128], strides = [1, 1]} : vector<128x128xf32> to vector<8x128xf32>
    %135 = arith.truncf %134 : vector<8x128xf32> to vector<8x128xbf16>
    %136 = vector.extract_strided_slice %41 {offsets = [0, 40], sizes = [128, 8], strides = [1, 1]} : vector<128x64xbf16> to vector<128x8xbf16>
    %cst_42 = arith.constant dense<0.000000e+00> : vector<128x128xf32>
    %137 = tpu.matmul %136, %133, %cst_42 {dimension_numbers = #tpu.dot_dimension_numbers<[1], [0], [0], [1], [0, 0, 1, 1], [], []>} : vector<128x8xbf16>, vector<8x128xbf16>, vector<128x128xf32> -> vector<128x128xf32>
    %cst_43 = arith.constant dense<0xFF800000> : vector<128xf32>
    %138 = vector.multi_reduction <maximumf>, %137, %cst_43 [1] : vector<128x128xf32> to vector<128xf32>
    %139 = vector.shape_cast %138 : vector<128xf32> to vector<128x1xf32>
    %140 = vector.broadcast %139 : vector<128x1xf32> to vector<128x128xf32>
    %141 = arith.subf %137, %140 : vector<128x128xf32>
    %142 = math.exp %141 : vector<128x128xf32>
    %cst_44 = arith.constant dense<0.000000e+00> : vector<128xf32>
    %143 = vector.multi_reduction <add>, %142, %cst_44 [1] : vector<128x128xf32> to vector<128xf32>
    %144 = vector.shape_cast %143 : vector<128xf32> to vector<128x1xf32>
    %145 = tpu.reciprocal %144 {approx = true} : vector<128x1xf32> -> vector<128x1xf32>
    %146 = vector.broadcast %145 : vector<128x1xf32> to vector<128x128xf32>
    %147 = arith.mulf %142, %146 : vector<128x128xf32>
    %148 = arith.truncf %147 : vector<128x128xf32> to vector<128x128xbf16>
    %cst_45 = arith.constant dense<0.000000e+00> : vector<8x128xf32>
    %149 = tpu.matmul %135, %148, %cst_45 {dimension_numbers = #tpu.dot_dimension_numbers<[1], [1], [0], [0], [0, 0, 1, 0], [], []>} : vector<8x128xbf16>, vector<128x128xbf16>, vector<8x128xf32> -> vector<8x128xf32>
    %150 = vector.extract_strided_slice %33 {offsets = [48, 0], sizes = [8, 128], strides = [1, 1]} : vector<128x128xf32> to vector<8x128xf32>
    %151 = arith.truncf %150 : vector<8x128xf32> to vector<8x128xbf16>
    %152 = vector.extract_strided_slice %33 {offsets = [112, 0], sizes = [8, 128], strides = [1, 1]} : vector<128x128xf32> to vector<8x128xf32>
    %153 = arith.truncf %152 : vector<8x128xf32> to vector<8x128xbf16>
    %154 = vector.extract_strided_slice %41 {offsets = [0, 48], sizes = [128, 8], strides = [1, 1]} : vector<128x64xbf16> to vector<128x8xbf16>
    %cst_46 = arith.constant dense<0.000000e+00> : vector<128x128xf32>
    %155 = tpu.matmul %154, %151, %cst_46 {dimension_numbers = #tpu.dot_dimension_numbers<[1], [0], [0], [1], [0, 0, 1, 1], [], []>} : vector<128x8xbf16>, vector<8x128xbf16>, vector<128x128xf32> -> vector<128x128xf32>
    %cst_47 = arith.constant dense<0xFF800000> : vector<128xf32>
    %156 = vector.multi_reduction <maximumf>, %155, %cst_47 [1] : vector<128x128xf32> to vector<128xf32>
    %157 = vector.shape_cast %156 : vector<128xf32> to vector<128x1xf32>
    %158 = vector.broadcast %157 : vector<128x1xf32> to vector<128x128xf32>
    %159 = arith.subf %155, %158 : vector<128x128xf32>
    %160 = math.exp %159 : vector<128x128xf32>
    %cst_48 = arith.constant dense<0.000000e+00> : vector<128xf32>
    %161 = vector.multi_reduction <add>, %160, %cst_48 [1] : vector<128x128xf32> to vector<128xf32>
    %162 = vector.shape_cast %161 : vector<128xf32> to vector<128x1xf32>
    %163 = tpu.reciprocal %162 {approx = true} : vector<128x1xf32> -> vector<128x1xf32>
    %164 = vector.broadcast %163 : vector<128x1xf32> to vector<128x128xf32>
    %165 = arith.mulf %160, %164 : vector<128x128xf32>
    %166 = arith.truncf %165 : vector<128x128xf32> to vector<128x128xbf16>
    %cst_49 = arith.constant dense<0.000000e+00> : vector<8x128xf32>
    %167 = tpu.matmul %153, %166, %cst_49 {dimension_numbers = #tpu.dot_dimension_numbers<[1], [1], [0], [0], [0, 0, 1, 0], [], []>} : vector<8x128xbf16>, vector<128x128xbf16>, vector<8x128xf32> -> vector<8x128xf32>
    %168 = vector.extract_strided_slice %33 {offsets = [56, 0], sizes = [8, 128], strides = [1, 1]} : vector<128x128xf32> to vector<8x128xf32>
    %169 = arith.truncf %168 : vector<8x128xf32> to vector<8x128xbf16>
    %170 = vector.extract_strided_slice %33 {offsets = [120, 0], sizes = [8, 128], strides = [1, 1]} : vector<128x128xf32> to vector<8x128xf32>
    %171 = arith.truncf %170 : vector<8x128xf32> to vector<8x128xbf16>
    %172 = vector.extract_strided_slice %41 {offsets = [0, 56], sizes = [128, 8], strides = [1, 1]} : vector<128x64xbf16> to vector<128x8xbf16>
    %cst_50 = arith.constant dense<0.000000e+00> : vector<128x128xf32>
    %173 = tpu.matmul %172, %169, %cst_50 {dimension_numbers = #tpu.dot_dimension_numbers<[1], [0], [0], [1], [0, 0, 1, 1], [], []>} : vector<128x8xbf16>, vector<8x128xbf16>, vector<128x128xf32> -> vector<128x128xf32>
    %cst_51 = arith.constant dense<0xFF800000> : vector<128xf32>
    %174 = vector.multi_reduction <maximumf>, %173, %cst_51 [1] : vector<128x128xf32> to vector<128xf32>
    %175 = vector.shape_cast %174 : vector<128xf32> to vector<128x1xf32>
    %176 = vector.broadcast %175 : vector<128x1xf32> to vector<128x128xf32>
    %177 = arith.subf %173, %176 : vector<128x128xf32>
    %178 = math.exp %177 : vector<128x128xf32>
    %cst_52 = arith.constant dense<0.000000e+00> : vector<128xf32>
    %179 = vector.multi_reduction <add>, %178, %cst_52 [1] : vector<128x128xf32> to vector<128xf32>
    %180 = vector.shape_cast %179 : vector<128xf32> to vector<128x1xf32>
    %181 = tpu.reciprocal %180 {approx = true} : vector<128x1xf32> -> vector<128x1xf32>
    %182 = vector.broadcast %181 : vector<128x1xf32> to vector<128x128xf32>
    %183 = arith.mulf %178, %182 : vector<128x128xf32>
    %184 = arith.truncf %183 : vector<128x128xf32> to vector<128x128xbf16>
    %cst_53 = arith.constant dense<0.000000e+00> : vector<8x128xf32>
    %185 = tpu.matmul %171, %184, %cst_53 {dimension_numbers = #tpu.dot_dimension_numbers<[1], [1], [0], [0], [0, 0, 1, 0], [], []>} : vector<8x128xbf16>, vector<128x128xbf16>, vector<8x128xf32> -> vector<8x128xf32>
    %186 = tpu.concatenate %59, %77, %95, %113, %131, %149, %167, %185 in 0 : vector<8x128xf32>, vector<8x128xf32>, vector<8x128xf32>, vector<8x128xf32>, vector<8x128xf32>, vector<8x128xf32>, vector<8x128xf32>, vector<8x128xf32> -> vector<64x128xf32>
    %187 = arith.truncf %186 : vector<64x128xf32> to vector<64x128xbf16>
    %c0_54 = arith.constant 0 : index
    %c0_55 = arith.constant 0 : index
    %188 = vector.load %arg9[%c0_54, %c0_55] : memref<64x64xbf16, #tpu.memory_space<vmem>>, vector<64x64xbf16>
    %cst_56 = arith.constant dense<0.000000e+00> : vector<64x128xf32>
    %189 = tpu.matmul %188, %187, %cst_56 {dimension_numbers = #tpu.dot_dimension_numbers<[1], [0], [0], [1], [0, 0, 1, 1], [], []>} : vector<64x64xbf16>, vector<64x128xbf16>, vector<64x128xf32> -> vector<64x128xf32>
    %c0_57 = arith.constant 0 : index
    %c0_58 = arith.constant 0 : index
    %190 = vector.load %arg10[%c0_57, %c0_58] : memref<64x1xf32, #tpu.memory_space<vmem>>, vector<64x1xf32>
    %191 = vector.broadcast %190 : vector<64x1xf32> to vector<64x128xf32>
    %192 = arith.addf %189, %191 : vector<64x128xf32>
    %193 = arith.addf %192, %27 : vector<64x128xf32>
    %cst_59 = arith.constant dense<0.000000e+00> : vector<128xf32>
    %194 = vector.multi_reduction <add>, %193, %cst_59 [0] : vector<64x128xf32> to vector<128xf32>
    %195 = vector.shape_cast %194 : vector<128xf32> to vector<1x128xf32>
    %cst_60 = arith.constant 6.400000e+01 : f32
    %196 = vector.broadcast %cst_60 : f32 to vector<1x128xf32>
    %197 = arith.divf %195, %196 : vector<1x128xf32>
    %198 = vector.broadcast %197 : vector<1x128xf32> to vector<64x128xf32>
    %199 = arith.subf %193, %198 : vector<64x128xf32>
    %200 = arith.mulf %199, %199 : vector<64x128xf32>
    %cst_61 = arith.constant dense<0.000000e+00> : vector<128xf32>
    %201 = vector.multi_reduction <add>, %200, %cst_61 [0] : vector<64x128xf32> to vector<128xf32>
    %202 = vector.shape_cast %201 : vector<128xf32> to vector<1x128xf32>
    %cst_62 = arith.constant 6.400000e+01 : f32
    %203 = vector.broadcast %cst_62 : f32 to vector<1x128xf32>
    %204 = arith.divf %202, %203 : vector<1x128xf32>
    %205 = vector.broadcast %197 : vector<1x128xf32> to vector<64x128xf32>
    %206 = arith.subf %193, %205 : vector<64x128xf32>
    %cst_63 = arith.constant 9.99999974E-6 : f32
    %207 = vector.broadcast %cst_63 : f32 to vector<1x128xf32>
    %208 = arith.addf %204, %207 : vector<1x128xf32>
    %209 = math.rsqrt %208 : vector<1x128xf32>
    %210 = vector.broadcast %209 : vector<1x128xf32> to vector<64x128xf32>
    %211 = arith.mulf %206, %210 : vector<64x128xf32>
    %c0_64 = arith.constant 0 : index
    %c0_65 = arith.constant 0 : index
    %212 = vector.load %arg11[%c0_64, %c0_65] : memref<64x1xf32, #tpu.memory_space<vmem>>, vector<64x1xf32>
    %213 = vector.broadcast %212 : vector<64x1xf32> to vector<64x128xf32>
    %214 = arith.mulf %211, %213 : vector<64x128xf32>
    %c0_66 = arith.constant 0 : index
    %c0_67 = arith.constant 0 : index
    %215 = vector.load %arg12[%c0_66, %c0_67] : memref<64x1xf32, #tpu.memory_space<vmem>>, vector<64x1xf32>
    %216 = vector.broadcast %215 : vector<64x1xf32> to vector<64x128xf32>
    %217 = arith.addf %214, %216 : vector<64x128xf32>
    %218 = arith.addf %217, %1 : vector<64x128xf32>
    %c0_68 = arith.constant 0 : index
    %c0_69 = arith.constant 0 : index
    %219 = vector.load %arg13[%c0_68, %c0_69] : memref<128x64xbf16, #tpu.memory_space<vmem>>, vector<128x64xbf16>
    %220 = arith.truncf %218 : vector<64x128xf32> to vector<64x128xbf16>
    %cst_70 = arith.constant dense<0.000000e+00> : vector<128x128xf32>
    %221 = tpu.matmul %219, %220, %cst_70 {dimension_numbers = #tpu.dot_dimension_numbers<[1], [0], [0], [1], [0, 0, 1, 1], [], []>} : vector<128x64xbf16>, vector<64x128xbf16>, vector<128x128xf32> -> vector<128x128xf32>
    %c0_71 = arith.constant 0 : index
    %c0_72 = arith.constant 0 : index
    %222 = vector.load %arg14[%c0_71, %c0_72] : memref<128x1xf32, #tpu.memory_space<vmem>>, vector<128x1xf32>
    %223 = vector.broadcast %222 : vector<128x1xf32> to vector<128x128xf32>
    %224 = arith.addf %221, %223 : vector<128x128xf32>
    %cst_73 = arith.constant 0.000000e+00 : f32
    %225 = vector.broadcast %cst_73 : f32 to vector<128x128xf32>
    %226 = arith.maximumf %224, %225 : vector<128x128xf32>
    %227 = tpu.iota {dimensions = array<i32: 1>} : vector<128x128xi32>
    %c0_74 = arith.constant 0 : index
    %c0_75 = arith.constant 0 : index
    %228 = vector.load %arg15[%c0_74, %c0_75] : memref<128x5xf32, #tpu.memory_space<vmem>>, vector<128x5xf32>
    %229 = vector.extract_strided_slice %228 {offsets = [0, 2], sizes = [128, 1], strides = [1, 1]} : vector<128x5xf32> to vector<128x1xf32>
    %230 = vector.broadcast %229 : vector<128x1xf32> to vector<128x128xf32>
    %231 = arith.mulf %226, %230 : vector<128x128xf32>
    %c0_76 = arith.constant 0 : index
    %c0_77 = arith.constant 0 : index
    %232 = vector.load %arg16[%c0_76, %c0_77] : memref<128x1xf32, #tpu.memory_space<vmem>>, vector<128x1xf32>
    %233 = vector.broadcast %232 : vector<128x1xf32> to vector<128x128xf32>
    %234 = arith.addf %231, %233 : vector<128x128xf32>
    %c2_i32 = arith.constant 2 : i32
    %235 = tpu.dynamic_rotate %226 by %c2_i32 dim 1 : vector<128x128xf32>, i32 -> vector<128x128xf32>
    %c2_i32_78 = arith.constant 2 : i32
    %236 = vector.broadcast %c2_i32_78 : i32 to vector<128x128xi32>
    %237 = arith.cmpi sge, %227, %236 : vector<128x128xi32>
    %cst_79 = arith.constant 0.000000e+00 : f32
    %238 = vector.broadcast %cst_79 : f32 to vector<128x128xf32>
    %239 = arith.select %237, %235, %238 : vector<128x128xi1>, vector<128x128xf32>
    %240 = vector.extract_strided_slice %228 {offsets = [0, 0], sizes = [128, 1], strides = [1, 1]} : vector<128x5xf32> to vector<128x1xf32>
    %241 = vector.broadcast %240 : vector<128x1xf32> to vector<128x128xf32>
    %242 = arith.mulf %239, %241 : vector<128x128xf32>
    %243 = arith.addf %234, %242 : vector<128x128xf32>
    %c1_i32 = arith.constant 1 : i32
    %244 = tpu.dynamic_rotate %226 by %c1_i32 dim 1 : vector<128x128xf32>, i32 -> vector<128x128xf32>
    %c1_i32_80 = arith.constant 1 : i32
    %245 = vector.broadcast %c1_i32_80 : i32 to vector<128x128xi32>
    %246 = arith.cmpi sge, %227, %245 : vector<128x128xi32>
    %cst_81 = arith.constant 0.000000e+00 : f32
    %247 = vector.broadcast %cst_81 : f32 to vector<128x128xf32>
    %248 = arith.select %246, %244, %247 : vector<128x128xi1>, vector<128x128xf32>
    %249 = vector.extract_strided_slice %228 {offsets = [0, 1], sizes = [128, 1], strides = [1, 1]} : vector<128x5xf32> to vector<128x1xf32>
    %250 = vector.broadcast %249 : vector<128x1xf32> to vector<128x128xf32>
    %251 = arith.mulf %248, %250 : vector<128x128xf32>
    %252 = arith.addf %243, %251 : vector<128x128xf32>
    %c127_i32 = arith.constant 127 : i32
    %253 = tpu.dynamic_rotate %226 by %c127_i32 dim 1 : vector<128x128xf32>, i32 -> vector<128x128xf32>
    %c127_i32_82 = arith.constant 127 : i32
    %254 = vector.broadcast %c127_i32_82 : i32 to vector<128x128xi32>
    %255 = arith.cmpi slt, %227, %254 : vector<128x128xi32>
    %cst_83 = arith.constant 0.000000e+00 : f32
    %256 = vector.broadcast %cst_83 : f32 to vector<128x128xf32>
    %257 = arith.select %255, %253, %256 : vector<128x128xi1>, vector<128x128xf32>
    %258 = vector.extract_strided_slice %228 {offsets = [0, 3], sizes = [128, 1], strides = [1, 1]} : vector<128x5xf32> to vector<128x1xf32>
    %259 = vector.broadcast %258 : vector<128x1xf32> to vector<128x128xf32>
    %260 = arith.mulf %257, %259 : vector<128x128xf32>
    %261 = arith.addf %252, %260 : vector<128x128xf32>
    %c126_i32 = arith.constant 126 : i32
    %262 = tpu.dynamic_rotate %226 by %c126_i32 dim 1 : vector<128x128xf32>, i32 -> vector<128x128xf32>
    %c126_i32_84 = arith.constant 126 : i32
    %263 = vector.broadcast %c126_i32_84 : i32 to vector<128x128xi32>
    %264 = arith.cmpi slt, %227, %263 : vector<128x128xi32>
    %cst_85 = arith.constant 0.000000e+00 : f32
    %265 = vector.broadcast %cst_85 : f32 to vector<128x128xf32>
    %266 = arith.select %264, %262, %265 : vector<128x128xi1>, vector<128x128xf32>
    %267 = vector.extract_strided_slice %228 {offsets = [0, 4], sizes = [128, 1], strides = [1, 1]} : vector<128x5xf32> to vector<128x1xf32>
    %268 = vector.broadcast %267 : vector<128x1xf32> to vector<128x128xf32>
    %269 = arith.mulf %266, %268 : vector<128x128xf32>
    %270 = arith.addf %261, %269 : vector<128x128xf32>
    %cst_86 = arith.constant 0.000000e+00 : f32
    %271 = vector.broadcast %cst_86 : f32 to vector<128x128xf32>
    %272 = arith.maximumf %270, %271 : vector<128x128xf32>
    %c0_87 = arith.constant 0 : index
    %c0_88 = arith.constant 0 : index
    %273 = vector.load %arg17[%c0_87, %c0_88] : memref<64x128xbf16, #tpu.memory_space<vmem>>, vector<64x128xbf16>
    %274 = arith.truncf %272 : vector<128x128xf32> to vector<128x128xbf16>
    %cst_89 = arith.constant dense<0.000000e+00> : vector<64x128xf32>
    %275 = tpu.matmul %273, %274, %cst_89 {dimension_numbers = #tpu.dot_dimension_numbers<[1], [0], [0], [1], [0, 0, 1, 1], [], []>} : vector<64x128xbf16>, vector<128x128xbf16>, vector<64x128xf32> -> vector<64x128xf32>
    %c0_90 = arith.constant 0 : index
    %c0_91 = arith.constant 0 : index
    %276 = vector.load %arg18[%c0_90, %c0_91] : memref<64x1xf32, #tpu.memory_space<vmem>>, vector<64x1xf32>
    %277 = vector.broadcast %276 : vector<64x1xf32> to vector<64x128xf32>
    %278 = arith.addf %275, %277 : vector<64x128xf32>
    %279 = arith.addf %278, %218 : vector<64x128xf32>
    %c0_92 = arith.constant 0 : index
    %c0_93 = arith.constant 0 : index
    %c0_94 = arith.constant 0 : index
    %280 = vector.load %arg19[%c0_92, %c0_93, %c0_94] : memref<1x64x128xf32, #tpu.memory_space<vmem>>, vector<1x64x128xf32>
    %281 = vector.shape_cast %280 : vector<1x64x128xf32> to vector<64x128xf32>
    %282 = vector.shape_cast %279 : vector<64x128xf32> to vector<1x64x128xf32>
    tpu.vector_store %arg19[%c0_92, %c0_93, %c0_94], %282 {strides = array<i32>} : memref<1x64x128xf32, #tpu.memory_space<vmem>>, vector<1x64x128xf32>,
    return
  }
  func.func @transform_0(%arg0: i32) -> (i32, i32, i32) {
    %c0_i32 = arith.constant 0 : i32
    %c0_i32_0 = arith.constant 0 : i32
    %c0_i32_1 = arith.constant 0 : i32
    return %arg0, %c0_i32, %c0_i32_0 : i32, i32, i32
  }
  func.func @transform_1(%arg0: i32) -> (i32, i32) {
    %c0_i32 = arith.constant 0 : i32
    %c0_i32_0 = arith.constant 0 : i32
    %c0_i32_1 = arith.constant 0 : i32
    return %c0_i32, %c0_i32_0 : i32, i32
  }
  func.func @transform_2(%arg0: i32) -> (i32, i32) {
    %c0_i32 = arith.constant 0 : i32
    %c0_i32_0 = arith.constant 0 : i32
    %c0_i32_1 = arith.constant 0 : i32
    return %c0_i32, %c0_i32_0 : i32, i32
  }
  func.func @transform_3(%arg0: i32) -> (i32, i32) {
    %c0_i32 = arith.constant 0 : i32
    %c0_i32_0 = arith.constant 0 : i32
    %c0_i32_1 = arith.constant 0 : i32
    return %c0_i32, %c0_i32_0 : i32, i32
  }
  func.func @transform_4(%arg0: i32) -> (i32, i32) {
    %c0_i32 = arith.constant 0 : i32
    %c0_i32_0 = arith.constant 0 : i32
    %c0_i32_1 = arith.constant 0 : i32
    return %c0_i32, %c0_i32_0 : i32, i32
  }
  func.func @transform_5(%arg0: i32) -> (i32, i32) {
    %c0_i32 = arith.constant 0 : i32
    %c0_i32_0 = arith.constant 0 : i32
    %c0_i32_1 = arith.constant 0 : i32
    return %c0_i32, %c0_i32_0 : i32, i32
  }
  func.func @transform_6(%arg0: i32) -> (i32, i32) {
    %c0_i32 = arith.constant 0 : i32
    %c0_i32_0 = arith.constant 0 : i32
    %c0_i32_1 = arith.constant 0 : i32
    return %c0_i32, %c0_i32_0 : i32, i32
  }
  func.func @transform_7(%arg0: i32) -> (i32, i32) {
    %c0_i32 = arith.constant 0 : i32
    %c0_i32_0 = arith.constant 0 : i32
    %c0_i32_1 = arith.constant 0 : i32
    return %c0_i32, %c0_i32_0 : i32, i32
  }
  func.func @transform_8(%arg0: i32) -> (i32, i32) {
    %c0_i32 = arith.constant 0 : i32
    %c0_i32_0 = arith.constant 0 : i32
    %c0_i32_1 = arith.constant 0 : i32
    return %c0_i32, %c0_i32_0 : i32, i32
  }
  func.func @transform_9(%arg0: i32) -> (i32, i32) {
    %c0_i32 = arith.constant 0 : i32
    %c0_i32_0 = arith.constant 0 : i32
    %c0_i32_1 = arith.constant 0 : i32
    return %c0_i32, %c0_i32_0 : i32, i32
  }
  func.func @transform_10(%arg0: i32) -> (i32, i32) {
    %c0_i32 = arith.constant 0 : i32
    %c0_i32_0 = arith.constant 0 : i32
    %c0_i32_1 = arith.constant 0 : i32
    return %c0_i32, %c0_i32_0 : i32, i32
  }
  func.func @transform_11(%arg0: i32) -> (i32, i32) {
    %c0_i32 = arith.constant 0 : i32
    %c0_i32_0 = arith.constant 0 : i32
    %c0_i32_1 = arith.constant 0 : i32
    return %c0_i32, %c0_i32_0 : i32, i32
  }
  func.func @transform_12(%arg0: i32) -> (i32, i32) {
    %c0_i32 = arith.constant 0 : i32
    %c0_i32_0 = arith.constant 0 : i32
    %c0_i32_1 = arith.constant 0 : i32
    return %c0_i32, %c0_i32_0 : i32, i32
  }
  func.func @transform_13(%arg0: i32) -> (i32, i32) {
    %c0_i32 = arith.constant 0 : i32
    %c0_i32_0 = arith.constant 0 : i32
    %c0_i32_1 = arith.constant 0 : i32
    return %c0_i32, %c0_i32_0 : i32, i32
  }
  func.func @transform_14(%arg0: i32) -> (i32, i32) {
    %c0_i32 = arith.constant 0 : i32
    %c0_i32_0 = arith.constant 0 : i32
    %c0_i32_1 = arith.constant 0 : i32
    return %c0_i32, %c0_i32_0 : i32, i32
  }
  func.func @transform_15(%arg0: i32) -> (i32, i32) {
    %c0_i32 = arith.constant 0 : i32
    %c0_i32_0 = arith.constant 0 : i32
    %c0_i32_1 = arith.constant 0 : i32
    return %c0_i32, %c0_i32_0 : i32, i32
  }
  func.func @transform_16(%arg0: i32) -> (i32, i32) {
    %c0_i32 = arith.constant 0 : i32
    %c0_i32_0 = arith.constant 0 : i32
    %c0_i32_1 = arith.constant 0 : i32
    return %c0_i32, %c0_i32_0 : i32, i32
  }
  func.func @transform_17(%arg0: i32) -> (i32, i32) {
    %c0_i32 = arith.constant 0 : i32
    %c0_i32_0 = arith.constant 0 : i32
    %c0_i32_1 = arith.constant 0 : i32
    return %c0_i32, %c0_i32_0 : i32, i32
  }
  func.func @transform_18(%arg0: i32) -> (i32, i32, i32) {
    %c0_i32 = arith.constant 0 : i32
    %c0_i32_0 = arith.constant 0 : i32
    %c0_i32_1 = arith.constant 0 : i32
    return %arg0, %c0_i32, %c0_i32_0 : i32, i32, i32
  }
}

</mosaic_0001>

<llo_original>
// kernel: tpu_custom_call.1
$region0: #{tpu_custom_call.1}
  #allocation0 [shape = 'u32[]', space=smem, size = 0x4, offset = 0x4, fixed_abs, tag = 'smem constant byte address 0x4 - core index']
  #allocation1 [shape = 'u32[144,128]{1,0:T(1,128)}', space=vmem, size = 0x12000, scoped, tag = 'internal scratch']
  %s0 = inlined_call_operand.vmem [shape: f32[2,64,128], index: 0, kind: input, shape index: {}]
  %s1 = inlined_call_operand.vmem [shape: f32[64,128], index: 1, kind: input, shape index: {}]
  %s2 = inlined_call_operand.vmem [shape: f32[64,1], index: 2, kind: input, shape index: {}]
  %s3 = inlined_call_operand.vmem [shape: f32[64,1], index: 3, kind: input, shape index: {}]
  %s4 = inlined_call_operand.vmem [shape: bf16[64,64], index: 4, kind: input, shape index: {}]
  %s5 = inlined_call_operand.vmem [shape: f32[1,64], index: 5, kind: input, shape index: {}]
  %s6 = inlined_call_operand.vmem [shape: bf16[128,64], index: 6, kind: input, shape index: {}]
  %s7 = inlined_call_operand.vmem [shape: f32[128,1], index: 7, kind: input, shape index: {}]
  %s8 = inlined_call_operand.vmem [shape: bf16[64,64], index: 8, kind: input, shape index: {}]
  %s9 = inlined_call_operand.vmem [shape: f32[64,1], index: 9, kind: input, shape index: {}]
  %s10 = inlined_call_operand.vmem [shape: f32[64,1], index: 10, kind: input, shape index: {}]
  %s11 = inlined_call_operand.vmem [shape: f32[64,1], index: 11, kind: input, shape index: {}]
  %s12 = inlined_call_operand.vmem [shape: bf16[128,64], index: 12, kind: input, shape index: {}]
  %s13 = inlined_call_operand.vmem [shape: f32[128,1], index: 13, kind: input, shape index: {}]
  %s14 = inlined_call_operand.vmem [shape: f32[128,5], index: 14, kind: input, shape index: {}]
  %s15 = inlined_call_operand.vmem [shape: f32[128,1], index: 15, kind: input, shape index: {}]
  %s16 = inlined_call_operand.vmem [shape: bf16[64,128], index: 16, kind: input, shape index: {}]
  %s17 = inlined_call_operand.vmem [shape: f32[64,1], index: 17, kind: input, shape index: {}]
  %s18 = inlined_call_operand.hbm [shape: f32[2,64,128], index: 18, kind: output, shape index: {}]
  %s19 = sld [smem:[#allocation0]]
  $region105: #{tpu_custom_call.1} parent=0
    _
  %s21 = ssub.s32 1, %s19
  %s22 = scalar_select 0, %s21, %s19
  $region1: #{tpu_custom_call.1} parent=0
    #allocation2 [shape = 'u8[65536]{0}', space=vmem, size = 0x10000, scoped, tag = 'output window, operand 0']
    #allocation3 [shape = 's32[2]{0}', space=sflag, size = 0x8, scoped, tag = 'scoped memory for tpu_custom_call.1']
    %23 = vsyncpa [#allocation3], 0
    %s24 = scalar_lea.sflag [#allocation3], 1
    %25 = vsyncpa %s24, 0
    loop: start=0, step=1, limit=4
    $region2: #{tpu_custom_call.1} parent=1 // loop_pre_header
      _
    $region3: #{tpu_custom_call.1} parent=1 // loop_header
      %s27 = sphi 0, %s31
      %p28 = scmp.ge.s32.totalorder %s27, 4
      %s37 = sphi 0, %s39
      %s40 = sphi 0, %s37
      %s41 = sphi 0, %s40
      %s57 = sphi 0, %s41
      %s61 = sphi 0, %s61
      %s63 = sphi 0, %s61
      %s64 = sphi 0, %s63
      %s78 = sphi 0, %s64
      %s82 = sphi 0, %s82
      %s84 = sphi 0, %s82
      %s85 = sphi 0, %s84
      %s99 = sphi 0, %s85
      %s103 = sphi 0, %s103
      %s105 = sphi 0, %s103
      %s106 = sphi 0, %s105
      %s120 = sphi 0, %s106
      %s124 = sphi 0, %s124
      %s126 = sphi 0, %s124
      %s127 = sphi 0, %s126
      %s141 = sphi 0, %s127
      %s145 = sphi 0, %s145
      %s147 = sphi 0, %s145
      %s148 = sphi 0, %s147
      %s162 = sphi 0, %s148
      %s166 = sphi 0, %s166
      %s168 = sphi 0, %s166
      %s169 = sphi 0, %s168
      %s183 = sphi 0, %s169
      %s187 = sphi 0, %s187
      %s189 = sphi 0, %s187
      %s190 = sphi 0, %s189
      %s204 = sphi 0, %s190
      %s208 = sphi 0, %s208
      %s210 = sphi 0, %s208
      %s211 = sphi 0, %s210
      %s225 = sphi 0, %s211
      %s229 = sphi 0, %s229
      %s231 = sphi 0, %s229
      %s232 = sphi 0, %s231
      %s246 = sphi 0, %s232
      %s250 = sphi 0, %s250
      %s252 = sphi 0, %s250
      %s253 = sphi 0, %s252
      %s267 = sphi 0, %s253
      %s271 = sphi 0, %s271
      %s273 = sphi 0, %s271
      %s274 = sphi 0, %s273
      %s288 = sphi 0, %s274
      %s292 = sphi 0, %s292
      %s294 = sphi 0, %s292
      %s295 = sphi 0, %s294
      %s309 = sphi 0, %s295
      %s313 = sphi 0, %s313
      %s315 = sphi 0, %s313
      %s316 = sphi 0, %s315
      %s330 = sphi 0, %s316
      %s334 = sphi 0, %s334
      %s336 = sphi 0, %s334
      %s337 = sphi 0, %s336
      %s351 = sphi 0, %s337
      %s355 = sphi 0, %s355
      %s357 = sphi 0, %s355
      %s358 = sphi 0, %s357
      %s372 = sphi 0, %s358
      %s376 = sphi 0, %s376
      %s378 = sphi 0, %s376
      %s379 = sphi 0, %s378
      %s393 = sphi 0, %s379
      %s397 = sphi 0, %s397
      %s399 = sphi 0, %s397
      %s400 = sphi 0, %s399
      %s414 = sphi 0, %s400
      %s420 = sphi 0, %s422
      %s423 = sphi 0, %s420
      %s424 = sphi 0, %s423
      %s440 = sphi 0, %s424
    $region4: #{tpu_custom_call.1} parent=1 // loop_header_branch
      %30 = sbr.rel (%p28) target = $region8
    $region5: #{tpu_custom_call.1} parent=1 // loop_body
      %s32 = ssub.s32 %s27, 1
      %s33 = ssub.s32 %s27, 2
      %s34 = sadd.s32 %s27, 1
      %s35 = ssub.s32 %s27, %s34
      %p36 = scmp.eq.s32.totalorder %s35, 0
      %s38 = sadd.s32 %s37, 1
      %s39 = scalar_select %p36, %s37, %s38
      %p42 = pneg %p36
      %p43 = scmp.eq.s32.totalorder %s27, 1
      %p44 = por %p42, %p43
      %p45 = scmp.ne.s32.totalorder %s37, %s40
      %p46 = scmp.eq.s32.totalorder %s27, 0
      %p47 = por %p45, %p46
      %p48 = scmp.ne.s32.totalorder %s37, %s40
      %p49 = scmp.eq.s32.totalorder %s32, 1
      %p50 = por %p48, %p49
      %p51 = scmp.ne.s32.totalorder %s40, %s41
      %p52 = scmp.eq.s32.totalorder %s32, 0
      %p53 = por %p51, %p52
      %p54 = scmp.ne.s32.totalorder %s40, %s41
      %p55 = scmp.eq.s32.totalorder %s33, 1
      %p56 = por %p54, %p55
      %p58 = scmp.ne.s32.totalorder %s41, %s57
      %p59 = scmp.eq.s32.totalorder %s33, 0
      %p60 = por %p58, %p59
      %s62 = sadd.s32 %s61, 1
      %p65 = scmp.eq.s32.totalorder %s27, 1
      %p66 = scmp.ne.s32.totalorder %s61, %s63
      %p67 = scmp.eq.s32.totalorder %s27, 0
      %p68 = por %p66, %p67
      %p69 = scmp.ne.s32.totalorder %s61, %s63
      %p70 = scmp.eq.s32.totalorder %s32, 1
      %p71 = por %p69, %p70
      %p72 = scmp.ne.s32.totalorder %s63, %s64
      %p73 = scmp.eq.s32.totalorder %s32, 0
      %p74 = por %p72, %p73
      %p75 = scmp.ne.s32.totalorder %s63, %s64
      %p76 = scmp.eq.s32.totalorder %s33, 1
      %p77 = por %p75, %p76
      %p79 = scmp.ne.s32.totalorder %s64, %s78
      %p80 = scmp.eq.s32.totalorder %s33, 0
      %p81 = por %p79, %p80
      %s83 = sadd.s32 %s82, 1
      %p86 = scmp.eq.s32.totalorder %s27, 1
      %p87 = scmp.ne.s32.totalorder %s82, %s84
      %p88 = scmp.eq.s32.totalorder %s27, 0
      %p89 = por %p87, %p88
      %p90 = scmp.ne.s32.totalorder %s82, %s84
      %p91 = scmp.eq.s32.totalorder %s32, 1
      %p92 = por %p90, %p91
      %p93 = scmp.ne.s32.totalorder %s84, %s85
      %p94 = scmp.eq.s32.totalorder %s32, 0
      %p95 = por %p93, %p94
      %p96 = scmp.ne.s32.totalorder %s84, %s85
      %p97 = scmp.eq.s32.totalorder %s33, 1
      %p98 = por %p96, %p97
      %p100 = scmp.ne.s32.totalorder %s85, %s99
      %p101 = scmp.eq.s32.totalorder %s33, 0
      %p102 = por %p100, %p101
      %s104 = sadd.s32 %s103, 1
      %p107 = scmp.eq.s32.totalorder %s27, 1
      %p108 = scmp.ne.s32.totalorder %s103, %s105
      %p109 = scmp.eq.s32.totalorder %s27, 0
      %p110 = por %p108, %p109
      %p111 = scmp.ne.s32.totalorder %s103, %s105
      %p112 = scmp.eq.s32.totalorder %s32, 1
      %p113 = por %p111, %p112
      %p114 = scmp.ne.s32.totalorder %s105, %s106
      %p115 = scmp.eq.s32.totalorder %s32, 0
      %p116 = por %p114, %p115
      %p117 = scmp.ne.s32.totalorder %s105, %s106
      %p118 = scmp.eq.s32.totalorder %s33, 1
      %p119 = por %p117, %p118
      %p121 = scmp.ne.s32.totalorder %s106, %s120
      %p122 = scmp.eq.s32.totalorder %s33, 0
      %p123 = por %p121, %p122
      %s125 = sadd.s32 %s124, 1
      %p128 = scmp.eq.s32.totalorder %s27, 1
      %p129 = scmp.ne.s32.totalorder %s124, %s126
      %p130 = scmp.eq.s32.totalorder %s27, 0
      %p131 = por %p129, %p130
      %p132 = scmp.ne.s32.totalorder %s124, %s126
      %p133 = scmp.eq.s32.totalorder %s32, 1
      %p134 = por %p132, %p133
      %p135 = scmp.ne.s32.totalorder %s126, %s127
      %p136 = scmp.eq.s32.totalorder %s32, 0
      %p137 = por %p135, %p136
      %p138 = scmp.ne.s32.totalorder %s126, %s127
      %p139 = scmp.eq.s32.totalorder %s33, 1
      %p140 = por %p138, %p139
      %p142 = scmp.ne.s32.totalorder %s127, %s141
      %p143 = scmp.eq.s32.totalorder %s33, 0
      %p144 = por %p142, %p143
      %s146 = sadd.s32 %s145, 1
      %p149 = scmp.eq.s32.totalorder %s27, 1
      %p150 = scmp.ne.s32.totalorder %s145, %s147
      %p151 = scmp.eq.s32.totalorder %s27, 0
      %p152 = por %p150, %p151
      %p153 = scmp.ne.s32.totalorder %s145, %s147
      %p154 = scmp.eq.s32.totalorder %s32, 1
      %p155 = por %p153, %p154
      %p156 = scmp.ne.s32.totalorder %s147, %s148
      %p157 = scmp.eq.s32.totalorder %s32, 0
      %p158 = por %p156, %p157
      %p159 = scmp.ne.s32.totalorder %s147, %s148
      %p160 = scmp.eq.s32.totalorder %s33, 1
      %p161 = por %p159, %p160
      %p163 = scmp.ne.s32.totalorder %s148, %s162
      %p164 = scmp.eq.s32.totalorder %s33, 0
      %p165 = por %p163, %p164
      %s167 = sadd.s32 %s166, 1
      %p170 = scmp.eq.s32.totalorder %s27, 1
      %p171 = scmp.ne.s32.totalorder %s166, %s168
      %p172 = scmp.eq.s32.totalorder %s27, 0
      %p173 = por %p171, %p172
      %p174 = scmp.ne.s32.totalorder %s166, %s168
      %p175 = scmp.eq.s32.totalorder %s32, 1
      %p176 = por %p174, %p175
      %p177 = scmp.ne.s32.totalorder %s168, %s169
      %p178 = scmp.eq.s32.totalorder %s32, 0
      %p179 = por %p177, %p178
      %p180 = scmp.ne.s32.totalorder %s168, %s169
      %p181 = scmp.eq.s32.totalorder %s33, 1
      %p182 = por %p180, %p181
      %p184 = scmp.ne.s32.totalorder %s169, %s183
      %p185 = scmp.eq.s32.totalorder %s33, 0
      %p186 = por %p184, %p185
      %s188 = sadd.s32 %s187, 1
      %p191 = scmp.eq.s32.totalorder %s27, 1
      %p192 = scmp.ne.s32.totalorder %s187, %s189
      %p193 = scmp.eq.s32.totalorder %s27, 0
      %p194 = por %p192, %p193
      %p195 = scmp.ne.s32.totalorder %s187, %s189
      %p196 = scmp.eq.s32.totalorder %s32, 1
      %p197 = por %p195, %p196
      %p198 = scmp.ne.s32.totalorder %s189, %s190
      %p199 = scmp.eq.s32.totalorder %s32, 0
      %p200 = por %p198, %p199
      %p201 = scmp.ne.s32.totalorder %s189, %s190
      %p202 = scmp.eq.s32.totalorder %s33, 1
      %p203 = por %p201, %p202
      %p205 = scmp.ne.s32.totalorder %s190, %s204
      %p206 = scmp.eq.s32.totalorder %s33, 0
      %p207 = por %p205, %p206
      %s209 = sadd.s32 %s208, 1
      %p212 = scmp.eq.s32.totalorder %s27, 1
      %p213 = scmp.ne.s32.totalorder %s208, %s210
      %p214 = scmp.eq.s32.totalorder %s27, 0
      %p215 = por %p213, %p214
      %p216 = scmp.ne.s32.totalorder %s208, %s210
      %p217 = scmp.eq.s32.totalorder %s32, 1
      %p218 = por %p216, %p217
      %p219 = scmp.ne.s32.totalorder %s210, %s211
      %p220 = scmp.eq.s32.totalorder %s32, 0
      %p221 = por %p219, %p220
      %p222 = scmp.ne.s32.totalorder %s210, %s211
      %p223 = scmp.eq.s32.totalorder %s33, 1
      %p224 = por %p222, %p223
      %p226 = scmp.ne.s32.totalorder %s211, %s225
      %p227 = scmp.eq.s32.totalorder %s33, 0
      %p228 = por %p226, %p227
      %s230 = sadd.s32 %s229, 1
      %p233 = scmp.eq.s32.totalorder %s27, 1
      %p234 = scmp.ne.s32.totalorder %s229, %s231
      %p235 = scmp.eq.s32.totalorder %s27, 0
      %p236 = por %p234, %p235
      %p237 = scmp.ne.s32.totalorder %s229, %s231
      %p238 = scmp.eq.s32.totalorder %s32, 1
      %p239 = por %p237, %p238
      %p240 = scmp.ne.s32.totalorder %s231, %s232
      %p241 = scmp.eq.s32.totalorder %s32, 0
      %p242 = por %p240, %p241
      %p243 = scmp.ne.s32.totalorder %s231, %s232
      %p244 = scmp.eq.s32.totalorder %s33, 1
      %p245 = por %p243, %p244
      %p247 = scmp.ne.s32.totalorder %s232, %s246
      %p248 = scmp.eq.s32.totalorder %s33, 0
      %p249 = por %p247, %p248
      %s251 = sadd.s32 %s250, 1
      %p254 = scmp.eq.s32.totalorder %s27, 1
      %p255 = scmp.ne.s32.totalorder %s250, %s252
      %p256 = scmp.eq.s32.totalorder %s27, 0
      %p257 = por %p255, %p256
      %p258 = scmp.ne.s32.totalorder %s250, %s252
      %p259 = scmp.eq.s32.totalorder %s32, 1
      %p260 = por %p258, %p259
      %p261 = scmp.ne.s32.totalorder %s252, %s253
      %p262 = scmp.eq.s32.totalorder %s32, 0
      %p263 = por %p261, %p262
      %p264 = scmp.ne.s32.totalorder %s252, %s253
      %p265 = scmp.eq.s32.totalorder %s33, 1
      %p266 = por %p264, %p265
      %p268 = scmp.ne.s32.totalorder %s253, %s267
      %p269 = scmp.eq.s32.totalorder %s33, 0
      %p270 = por %p268, %p269
      %s272 = sadd.s32 %s271, 1
      %p275 = scmp.eq.s32.totalorder %s27, 1
      %p276 = scmp.ne.s32.totalorder %s271, %s273
      %p277 = scmp.eq.s32.totalorder %s27, 0
      %p278 = por %p276, %p277
      %p279 = scmp.ne.s32.totalorder %s271, %s273
      %p280 = scmp.eq.s32.totalorder %s32, 1
      %p281 = por %p279, %p280
      %p282 = scmp.ne.s32.totalorder %s273, %s274
      %p283 = scmp.eq.s32.totalorder %s32, 0
      %p284 = por %p282, %p283
      %p285 = scmp.ne.s32.totalorder %s273, %s274
      %p286 = scmp.eq.s32.totalorder %s33, 1
      %p287 = por %p285, %p286
      %p289 = scmp.ne.s32.totalorder %s274, %s288
      %p290 = scmp.eq.s32.totalorder %s33, 0
      %p291 = por %p289, %p290
      %s293 = sadd.s32 %s292, 1
      %p296 = scmp.eq.s32.totalorder %s27, 1
      %p297 = scmp.ne.s32.totalorder %s292, %s294
      %p298 = scmp.eq.s32.totalorder %s27, 0
      %p299 = por %p297, %p298
      %p300 = scmp.ne.s32.totalorder %s292, %s294
      %p301 = scmp.eq.s32.totalorder %s32, 1
      %p302 = por %p300, %p301
      %p303 = scmp.ne.s32.totalorder %s294, %s295
      %p304 = scmp.eq.s32.totalorder %s32, 0
      %p305 = por %p303, %p304
      %p306 = scmp.ne.s32.totalorder %s294, %s295
      %p307 = scmp.eq.s32.totalorder %s33, 1
      %p308 = por %p306, %p307
      %p310 = scmp.ne.s32.totalorder %s295, %s309
      %p311 = scmp.eq.s32.totalorder %s33, 0
      %p312 = por %p310, %p311
      %s314 = sadd.s32 %s313, 1
      %p317 = scmp.eq.s32.totalorder %s27, 1
      %p318 = scmp.ne.s32.totalorder %s313, %s315
      %p319 = scmp.eq.s32.totalorder %s27, 0
      %p320 = por %p318, %p319
      %p321 = scmp.ne.s32.totalorder %s313, %s315
      %p322 = scmp.eq.s32.totalorder %s32, 1
      %p323 = por %p321, %p322
      %p324 = scmp.ne.s32.totalorder %s315, %s316
      %p325 = scmp.eq.s32.totalorder %s32, 0
      %p326 = por %p324, %p325
      %p327 = scmp.ne.s32.totalorder %s315, %s316
      %p328 = scmp.eq.s32.totalorder %s33, 1
      %p329 = por %p327, %p328
      %p331 = scmp.ne.s32.totalorder %s316, %s330
      %p332 = scmp.eq.s32.totalorder %s33, 0
      %p333 = por %p331, %p332
      %s335 = sadd.s32 %s334, 1
      %p338 = scmp.eq.s32.totalorder %s27, 1
      %p339 = scmp.ne.s32.totalorder %s334, %s336
      %p340 = scmp.eq.s32.totalorder %s27, 0
      %p341 = por %p339, %p340
      %p342 = scmp.ne.s32.totalorder %s334, %s336
      %p343 = scmp.eq.s32.totalorder %s32, 1
      %p344 = por %p342, %p343
      %p345 = scmp.ne.s32.totalorder %s336, %s337
      %p346 = scmp.eq.s32.totalorder %s32, 0
      %p347 = por %p345, %p346
      %p348 = scmp.ne.s32.totalorder %s336, %s337
      %p349 = scmp.eq.s32.totalorder %s33, 1
      %p350 = por %p348, %p349
      %p352 = scmp.ne.s32.totalorder %s337, %s351
      %p353 = scmp.eq.s32.totalorder %s33, 0
      %p354 = por %p352, %p353
      %s356 = sadd.s32 %s355, 1
      %p359 = scmp.eq.s32.totalorder %s27, 1
      %p360 = scmp.ne.s32.totalorder %s355, %s357
      %p361 = scmp.eq.s32.totalorder %s27, 0
      %p362 = por %p360, %p361
      %p363 = scmp.ne.s32.totalorder %s355, %s357
      %p364 = scmp.eq.s32.totalorder %s32, 1
      %p365 = por %p363, %p364
      %p366 = scmp.ne.s32.totalorder %s357, %s358
      %p367 = scmp.eq.s32.totalorder %s32, 0
      %p368 = por %p366, %p367
      %p369 = scmp.ne.s32.totalorder %s357, %s358
      %p370 = scmp.eq.s32.totalorder %s33, 1
      %p371 = por %p369, %p370
      %p373 = scmp.ne.s32.totalorder %s358, %s372
      %p374 = scmp.eq.s32.totalorder %s33, 0
      %p375 = por %p373, %p374
      %s377 = sadd.s32 %s376, 1
      %p380 = scmp.eq.s32.totalorder %s27, 1
      %p381 = scmp.ne.s32.totalorder %s376, %s378
      %p382 = scmp.eq.s32.totalorder %s27, 0
      %p383 = por %p381, %p382
      %p384 = scmp.ne.s32.totalorder %s376, %s378
      %p385 = scmp.eq.s32.totalorder %s32, 1
      %p386 = por %p384, %p385
      %p387 = scmp.ne.s32.totalorder %s378, %s379
      %p388 = scmp.eq.s32.totalorder %s32, 0
      %p389 = por %p387, %p388
      %p390 = scmp.ne.s32.totalorder %s378, %s379
      %p391 = scmp.eq.s32.totalorder %s33, 1
      %p392 = por %p390, %p391
      %p394 = scmp.ne.s32.totalorder %s379, %s393
      %p395 = scmp.eq.s32.totalorder %s33, 0
      %p396 = por %p394, %p395
      %s398 = sadd.s32 %s397, 1
      %p401 = scmp.eq.s32.totalorder %s27, 1
      %p402 = scmp.ne.s32.totalorder %s397, %s399
      %p403 = scmp.eq.s32.totalorder %s27, 0
      %p404 = por %p402, %p403
      %p405 = scmp.ne.s32.totalorder %s397, %s399
      %p406 = scmp.eq.s32.totalorder %s32, 1
      %p407 = por %p405, %p406
      %p408 = scmp.ne.s32.totalorder %s399, %s400
      %p409 = scmp.eq.s32.totalorder %s32, 0
      %p410 = por %p408, %p409
      %p411 = scmp.ne.s32.totalorder %s399, %s400
      %p412 = scmp.eq.s32.totalorder %s33, 1
      %p413 = por %p411, %p412
      %p415 = scmp.ne.s32.totalorder %s400, %s414
      %p416 = scmp.eq.s32.totalorder %s33, 0
      %p417 = por %p415, %p416
      %s418 = ssub.s32 %s27, %s34
      %p419 = scmp.eq.s32.totalorder %s418, 0
      %s421 = sadd.s32 %s420, 1
      %s422 = scalar_select %p419, %s420, %s421
      %p425 = pneg %p419
      %p426 = scmp.eq.s32.totalorder %s27, 1
      %p427 = por %p425, %p426
      %p428 = scmp.ne.s32.totalorder %s420, %s423
      %p429 = scmp.eq.s32.totalorder %s27, 0
      %p430 = por %p428, %p429
      %p431 = scmp.ne.s32.totalorder %s420, %s423
      %p432 = scmp.eq.s32.totalorder %s32, 1
      %p433 = por %p431, %p432
      %p434 = scmp.ne.s32.totalorder %s423, %s424
      %p435 = scmp.eq.s32.totalorder %s32, 0
      %p436 = por %p434, %p435
      %p437 = scmp.ne.s32.totalorder %s423, %s424
      %p438 = scmp.eq.s32.totalorder %s33, 1
      %p439 = por %p437, %p438
      %p441 = scmp.ne.s32.totalorder %s424, %s440
      %p442 = scmp.eq.s32.totalorder %s33, 0
      %p443 = por %p441, %p442
      %p444 = scmp.le.s32.totalorder 1, %s27
      %p445 = scmp.lt.s32.totalorder %s27, 3
      %p446 = pnand %p444, %p445
      %p447 = pneg %p446
      // Predicated region
      $region9: #{tpu_custom_call.1} parent=5 // pred_check
        _
      $region10: #{tpu_custom_call.1} parent=5 // pred_check_branch
        %449 = sbr.rel (%p446) target = $region12
      $region11: #{tpu_custom_call.1} parent=5 // pred_region
        %s450 = ssub.s32 %s27, 1
        // Predicated region
        $region13: #{tpu_custom_call.1} parent=11 // pred_check
          %p451 = pneg %p74
        $region14: #{tpu_custom_call.1} parent=11 // pred_check_branch
          %453 = sbr.rel (%p451) target = $region16
        $region15: #{tpu_custom_call.1} parent=11 // pred_region
          _
        $region16: #{tpu_custom_call.1} parent=11 // pred_fallthru
          _
        // Predicated region
        $region17: #{tpu_custom_call.1} parent=11 // pred_check
          %p454 = pneg %p95
        $region18: #{tpu_custom_call.1} parent=11 // pred_check_branch
          %456 = sbr.rel (%p454) target = $region20
        $region19: #{tpu_custom_call.1} parent=11 // pred_region
          _
        $region20: #{tpu_custom_call.1} parent=11 // pred_fallthru
          _
        // Predicated region
        $region21: #{tpu_custom_call.1} parent=11 // pred_check
          %p457 = pneg %p116
        $region22: #{tpu_custom_call.1} parent=11 // pred_check_branch
          %459 = sbr.rel (%p457) target = $region24
        $region23: #{tpu_custom_call.1} parent=11 // pred_region
          _
        $region24: #{tpu_custom_call.1} parent=11 // pred_fallthru
          _
        // Predicated region
        $region25: #{tpu_custom_call.1} parent=11 // pred_check
          %p460 = pneg %p137
        $region26: #{tpu_custom_call.1} parent=11 // pred_check_branch
          %462 = sbr.rel (%p460) target = $region28
        $region27: #{tpu_custom_call.1} parent=11 // pred_region
          _
        $region28: #{tpu_custom_call.1} parent=11 // pred_fallthru
          _
        // Predicated region
        $region29: #{tpu_custom_call.1} parent=11 // pred_check
          %p463 = pneg %p158
        $region30: #{tpu_custom_call.1} parent=11 // pred_check_branch
          %465 = sbr.rel (%p463) target = $region32
        $region31: #{tpu_custom_call.1} parent=11 // pred_region
          _
        $region32: #{tpu_custom_call.1} parent=11 // pred_fallthru
          _
        // Predicated region
        $region33: #{tpu_custom_call.1} parent=11 // pred_check
          %p466 = pneg %p179
        $region34: #{tpu_custom_call.1} parent=11 // pred_check_branch
          %468 = sbr.rel (%p466) target = $region36
        $region35: #{tpu_custom_call.1} parent=11 // pred_region
          _
        $region36: #{tpu_custom_call.1} parent=11 // pred_fallthru
          _
        // Predicated region
        $region37: #{tpu_custom_call.1} parent=11 // pred_check
          %p469 = pneg %p200
        $region38: #{tpu_custom_call.1} parent=11 // pred_check_branch
          %471 = sbr.rel (%p469) target = $region40
        $region39: #{tpu_custom_call.1} parent=11 // pred_region
          _
        $region40: #{tpu_custom_call.1} parent=11 // pred_fallthru
          _
        // Predicated region
        $region41: #{tpu_custom_call.1} parent=11 // pred_check
          %p472 = pneg %p221
        $region42: #{tpu_custom_call.1} parent=11 // pred_check_branch
          %474 = sbr.rel (%p472) target = $region44
        $region43: #{tpu_custom_call.1} parent=11 // pred_region
          _
        $region44: #{tpu_custom_call.1} parent=11 // pred_fallthru
          _
        // Predicated region
        $region45: #{tpu_custom_call.1} parent=11 // pred_check
          %p475 = pneg %p242
        $region46: #{tpu_custom_call.1} parent=11 // pred_check_branch
          %477 = sbr.rel (%p475) target = $region48
        $region47: #{tpu_custom_call.1} parent=11 // pred_region
          _
        $region48: #{tpu_custom_call.1} parent=11 // pred_fallthru
          _
        // Predicated region
        $region49: #{tpu_custom_call.1} parent=11 // pred_check
          %p478 = pneg %p263
        $region50: #{tpu_custom_call.1} parent=11 // pred_check_branch
          %480 = sbr.rel (%p478) target = $region52
        $region51: #{tpu_custom_call.1} parent=11 // pred_region
          _
        $region52: #{tpu_custom_call.1} parent=11 // pred_fallthru
          _
        // Predicated region
        $region53: #{tpu_custom_call.1} parent=11 // pred_check
          %p481 = pneg %p284
        $region54: #{tpu_custom_call.1} parent=11 // pred_check_branch
          %483 = sbr.rel (%p481) target = $region56
        $region55: #{tpu_custom_call.1} parent=11 // pred_region
          _
        $region56: #{tpu_custom_call.1} parent=11 // pred_fallthru
          _
        // Predicated region
        $region57: #{tpu_custom_call.1} parent=11 // pred_check
          %p484 = pneg %p305
        $region58: #{tpu_custom_call.1} parent=11 // pred_check_branch
          %486 = sbr.rel (%p484) target = $region60
        $region59: #{tpu_custom_call.1} parent=11 // pred_region
          _
        $region60: #{tpu_custom_call.1} parent=11 // pred_fallthru
          _
        // Predicated region
        $region61: #{tpu_custom_call.1} parent=11 // pred_check
          %p487 = pneg %p326
        $region62: #{tpu_custom_call.1} parent=11 // pred_check_branch
          %489 = sbr.rel (%p487) target = $region64
        $region63: #{tpu_custom_call.1} parent=11 // pred_region
          _
        $region64: #{tpu_custom_call.1} parent=11 // pred_fallthru
          _
        // Predicated region
        $region65: #{tpu_custom_call.1} parent=11 // pred_check
          %p490 = pneg %p347
        $region66: #{tpu_custom_call.1} parent=11 // pred_check_branch
          %492 = sbr.rel (%p490) target = $region68
        $region67: #{tpu_custom_call.1} parent=11 // pred_region
          _
        $region68: #{tpu_custom_call.1} parent=11 // pred_fallthru
          _
        // Predicated region
        $region69: #{tpu_custom_call.1} parent=11 // pred_check
          %p493 = pneg %p368
        $region70: #{tpu_custom_call.1} parent=11 // pred_check_branch
          %495 = sbr.rel (%p493) target = $region72
        $region71: #{tpu_custom_call.1} parent=11 // pred_region
          _
        $region72: #{tpu_custom_call.1} parent=11 // pred_fallthru
          _
        // Predicated region
        $region73: #{tpu_custom_call.1} parent=11 // pred_check
          %p496 = pneg %p389
        $region74: #{tpu_custom_call.1} parent=11 // pred_check_branch
          %498 = sbr.rel (%p496) target = $region76
        $region75: #{tpu_custom_call.1} parent=11 // pred_region
          _
        $region76: #{tpu_custom_call.1} parent=11 // pred_fallthru
          _
        // Predicated region
        $region77: #{tpu_custom_call.1} parent=11 // pred_check
          %p499 = pneg %p410
        $region78: #{tpu_custom_call.1} parent=11 // pred_check_branch
          %501 = sbr.rel (%p499) target = $region80
        $region79: #{tpu_custom_call.1} parent=11 // pred_region
          _
        $region80: #{tpu_custom_call.1} parent=11 // pred_fallthru
          _
      $region12: #{tpu_custom_call.1} parent=5 // pred_fallthru
        _
      %p502 = scmp.lt.s32.totalorder %s27, 2
      // Predicated region
      $region81: #{tpu_custom_call.1} parent=5 // pred_check
        %p503 = pneg %p502
      $region82: #{tpu_custom_call.1} parent=5 // pred_check_branch
        %505 = sbr.rel (%p503) target = $region84
      $region83: #{tpu_custom_call.1} parent=5 // pred_region
        // Predicated region
        $region85: #{tpu_custom_call.1} parent=83 // pred_check
          %p506 = pneg %p47
        $region86: #{tpu_custom_call.1} parent=83 // pred_check_branch
          %508 = sbr.rel (%p506) target = $region88
        $region87: #{tpu_custom_call.1} parent=83 // pred_region
          %p509 = scmp.lt.s32.totalorder %s27, 1
          %s510 = scalar_select %p509, %s27, 1
          %s511 = smul.addr %s510, 8
          %s512 = smul.addr %s511, 8
          %s513 = scalar_lea.vmem %s0, %s512
        $region88: #{tpu_custom_call.1} parent=83 // pred_fallthru
          _
      $region84: #{tpu_custom_call.1} parent=5 // pred_fallthru
        _
      %p514 = scmp.le.s32.totalorder 1, %s27
      %p515 = scmp.lt.s32.totalorder %s27, 3
      %p516 = pnand %p514, %p515
      %p517 = pneg %p516
      // Predicated region
      $region89: #{tpu_custom_call.1} parent=5 // pred_check
        _
      $region90: #{tpu_custom_call.1} parent=5 // pred_check_branch
        %519 = sbr.rel (%p516) target = $region92
      $region91: #{tpu_custom_call.1} parent=5 // pred_region
        %s520 = ssub.s32 %s27, 1
        %p521 = scmp.lt.s32.totalorder %s32, 1
        %s522 = scalar_select %p521, %s32, 1
        %s523 = smul.addr %s522, 8
        %s524 = smul.addr %s523, 8
        %s525 = scalar_lea.vmem %s0, %s524
        %p526 = pneg %p53
        %p527 = pneg %p50
        %p528 = pneg %p74
        %p529 = pneg %p71
        %p530 = pneg %p95
        %p531 = pneg %p92
        %p532 = pneg %p116
        %p533 = pneg %p113
        %p534 = pneg %p137
        %p535 = pneg %p134
        %p536 = pneg %p158
        %p537 = pneg %p155
        %p538 = pneg %p179
        %p539 = pneg %p176
        %p540 = pneg %p200
        %p541 = pneg %p197
        %p542 = pneg %p221
        %p543 = pneg %p218
        %p544 = pneg %p242
        %p545 = pneg %p239
        %p546 = pneg %p263
        %p547 = pneg %p260
        %p548 = pneg %p284
        %p549 = pneg %p281
        %p550 = pneg %p305
        %p551 = pneg %p302
        %p552 = pneg %p326
        %p553 = pneg %p323
        %p554 = pneg %p347
        %p555 = pneg %p344
        %p556 = pneg %p368
        %p557 = pneg %p365
        %p558 = pneg %p389
        %p559 = pneg %p386
        %p560 = pneg %p410
        %p561 = pneg %p407
        %p562 = pneg %p436
        %p563 = pneg %p433
        %s564 = sand.u32 %s423, 1
        %s565 = scalar_lea.sflag [#allocation3], %s564
        %s566 = sand.u32 %s423, 1
        %s567 = smul.addr %s566, 64
        %s568 = scalar_lea.vmem [#allocation2], %s567
        %p569 = scmp.lt.s32.totalorder %s32, 1
        %s570 = scalar_select %p569, %s32, 1
        %s571 = smul.addr %s570, 8
        %s572 = smul.addr %s571, 8
        %s573 = scalar_lea.vmem %s0, %s572
        %v575 = vld [vmem:[%s573] sm:$0xff]
        %v576 = vld [vmem:[%s573 + $0x8] sm:$0xff]
        %v577 = vld [vmem:[%s573 + $0x10] sm:$0xff]
        %v578 = vld [vmem:[%s573 + $0x18] sm:$0xff]
        %v579 = vld [vmem:[%s573 + $0x20] sm:$0xff]
        %v580 = vld [vmem:[%s573 + $0x28] sm:$0xff]
        %v581 = vld [vmem:[%s573 + $0x30] sm:$0xff]
        %v582 = vld [vmem:[%s573 + $0x38] sm:$0xff]
        %v583 = vadd.f32 %v575, %v576
        %v584 = vadd.f32 %v583, %v577
        %v585 = vadd.f32 %v584, %v578
        %v586 = vadd.f32 %v585, %v579
        %v587 = vadd.f32 %v586, %v580
        %v588 = vadd.f32 %v587, %v581
        %v589 = vadd.f32 %v588, %v582
        %v590 = vrot.slane %v589, 4
        %v591 = vadd.f32 %v589, %v590
        %v592 = vrot.slane %v591, 2
        %v593 = vadd.f32 %v591, %v592
        %v594 = vrot.slane %v593, 1
        %v595 = vadd.f32 %v593, %v594
        %v596 = vrcp.pop 64.0
        %v597 = vmul.f32 %v595, %v596
        %v598 = vsub.f32 %v575, %v597
        %v599 = vsub.f32 %v576, %v597
        %v600 = vsub.f32 %v577, %v597
        %v601 = vsub.f32 %v578, %v597
        %v602 = vsub.f32 %v579, %v597
        %v603 = vsub.f32 %v580, %v597
        %v604 = vsub.f32 %v581, %v597
        %v605 = vsub.f32 %v582, %v597
        %v606 = vmul.f32 %v598, %v598
        %v607 = vmul.f32 %v599, %v599
        %v608 = vmul.f32 %v600, %v600
        %v609 = vmul.f32 %v601, %v601
        %v610 = vmul.f32 %v602, %v602
        %v611 = vmul.f32 %v603, %v603
        %v612 = vmul.f32 %v604, %v604
        %v613 = vmul.f32 %v605, %v605
        %v614 = vadd.f32 %v606, %v607
        %v615 = vadd.f32 %v614, %v608
        %v616 = vadd.f32 %v615, %v609
        %v617 = vadd.f32 %v616, %v610
        %v618 = vadd.f32 %v617, %v611
        %v619 = vadd.f32 %v618, %v612
        %v620 = vadd.f32 %v619, %v613
        %v621 = vrot.slane %v620, 4
        %v622 = vadd.f32 %v620, %v621
        %v623 = vrot.slane %v622, 2
        %v624 = vadd.f32 %v622, %v623
        %v625 = vrot.slane %v624, 1
        %v626 = vadd.f32 %v624, %v625
        %v627 = vmul.f32 %v626, %v596
        %v628 = vadd.f32 %v627, 1e-05
        %v629 = vrsqrt.pop %v628
        %v630 = vmul.f32 %v598, %v629
        %v631 = vmul.f32 %v599, %v629
        %v632 = vmul.f32 %v600, %v629
        %v633 = vmul.f32 %v601, %v629
        %v634 = vmul.f32 %v602, %v629
        %v635 = vmul.f32 %v603, %v629
        %v636 = vmul.f32 %v604, %v629
        %v637 = vmul.f32 %v605, %v629
        %v638 = vld [vmem:[%s2] sm:$0xff]
        %v639 = vld [vmem:[%s2 + $0x8] sm:$0xff]
        %v640 = vld [vmem:[%s2 + $0x10] sm:$0xff]
        %v641 = vld [vmem:[%s2 + $0x18] sm:$0xff]
        %v642 = vld [vmem:[%s2 + $0x20] sm:$0xff]
        %v643 = vld [vmem:[%s2 + $0x28] sm:$0xff]
        %v644 = vld [vmem:[%s2 + $0x30] sm:$0xff]
        %v645 = vld [vmem:[%s2 + $0x38] sm:$0xff]
        %647 = vset.pattern.permute.xlu0 0
        %648 = vperm.xlu0 %647, %v638
        %v649 = vpop.permute.xlu0 %648
        %652 = vset.pattern.permute.xlu0 0
        %653 = vperm.xlu0 %652, %v639
        %v654 = vpop.permute.xlu0 %653
        %657 = vset.pattern.permute.xlu0 0
        %658 = vperm.xlu0 %657, %v640
        %v659 = vpop.permute.xlu0 %658
        %662 = vset.pattern.permute.xlu0 0
        %663 = vperm.xlu0 %662, %v641
        %v664 = vpop.permute.xlu0 %663
        %667 = vset.pattern.permute.xlu0 0
        %668 = vperm.xlu0 %667, %v642
        %v669 = vpop.permute.xlu0 %668
        %672 = vset.pattern.permute.xlu0 0
        %673 = vperm.xlu0 %672, %v643
        %v674 = vpop.permute.xlu0 %673
        %677 = vset.pattern.permute.xlu0 0
        %678 = vperm.xlu0 %677, %v644
        %v679 = vpop.permute.xlu0 %678
        %682 = vset.pattern.permute.xlu0 0
        %683 = vperm.xlu0 %682, %v645
        %v684 = vpop.permute.xlu0 %683
        %v686 = vmul.f32 %v630, %v649
        %v687 = vmul.f32 %v631, %v654
        %v688 = vmul.f32 %v632, %v659
        %v689 = vmul.f32 %v633, %v664
        %v690 = vmul.f32 %v634, %v669
        %v691 = vmul.f32 %v635, %v674
        %v692 = vmul.f32 %v636, %v679
        %v693 = vmul.f32 %v637, %v684
        %v694 = vld [vmem:[%s3] sm:$0xff]
        %v695 = vld [vmem:[%s3 + $0x8] sm:$0xff]
        %v696 = vld [vmem:[%s3 + $0x10] sm:$0xff]
        %v697 = vld [vmem:[%s3 + $0x18] sm:$0xff]
        %v698 = vld [vmem:[%s3 + $0x20] sm:$0xff]
        %v699 = vld [vmem:[%s3 + $0x28] sm:$0xff]
        %v700 = vld [vmem:[%s3 + $0x30] sm:$0xff]
        %v701 = vld [vmem:[%s3 + $0x38] sm:$0xff]
        %703 = vset.pattern.permute.xlu0 0
        %704 = vperm.xlu0 %703, %v694
        %v705 = vpop.permute.xlu0 %704
        %708 = vset.pattern.permute.xlu0 0
        %709 = vperm.xlu0 %708, %v695
        %v710 = vpop.permute.xlu0 %709
        %713 = vset.pattern.permute.xlu0 0
        %714 = vperm.xlu0 %713, %v696
        %v715 = vpop.permute.xlu0 %714
        %718 = vset.pattern.permute.xlu0 0
        %719 = vperm.xlu0 %718, %v697
        %v720 = vpop.permute.xlu0 %719
        %723 = vset.pattern.permute.xlu0 0
        %724 = vperm.xlu0 %723, %v698
        %v725 = vpop.permute.xlu0 %724
        %728 = vset.pattern.permute.xlu0 0
        %729 = vperm.xlu0 %728, %v699
        %v730 = vpop.permute.xlu0 %729
        %733 = vset.pattern.permute.xlu0 0
        %734 = vperm.xlu0 %733, %v700
        %v735 = vpop.permute.xlu0 %734
        %738 = vset.pattern.permute.xlu0 0
        %739 = vperm.xlu0 %738, %v701
        %v740 = vpop.permute.xlu0 %739
        %v742 = vadd.f32 %v686, %v705
        %v743 = vadd.f32 %v687, %v710
        %v744 = vadd.f32 %v688, %v715
        %v745 = vadd.f32 %v689, %v720
        %v746 = vadd.f32 %v690, %v725
        %v747 = vadd.f32 %v691, %v730
        %v748 = vadd.f32 %v692, %v735
        %v749 = vadd.f32 %v693, %v740
        %v750 = vld [vmem:[%s1] sm:$0xff]
        %v751 = vld [vmem:[%s1 + $0x8] sm:$0xff]
        %v752 = vld [vmem:[%s1 + $0x10] sm:$0xff]
        %v753 = vld [vmem:[%s1 + $0x18] sm:$0xff]
        %v754 = vld [vmem:[%s1 + $0x20] sm:$0xff]
        %v755 = vld [vmem:[%s1 + $0x28] sm:$0xff]
        %v756 = vld [vmem:[%s1 + $0x30] sm:$0xff]
        %v757 = vld [vmem:[%s1 + $0x38] sm:$0xff]
        %v758 = vadd.f32 %v742, %v750
        %v759 = vadd.f32 %v743, %v751
        %v760 = vadd.f32 %v744, %v752
        %v761 = vadd.f32 %v745, %v753
        %v762 = vadd.f32 %v746, %v754
        %v763 = vadd.f32 %v747, %v755
        %v764 = vadd.f32 %v748, %v756
        %v765 = vadd.f32 %v749, %v757
        %v766 = vpack.c.bf16 %v759, %v758
        %v767 = vpack.c.bf16 %v761, %v760
        %v768 = vpack.c.bf16 %v763, %v762
        %v769 = vpack.c.bf16 %v765, %v764
        %v770 = vld [vmem:[%s6] sm:$0xf]
        %v771 = vld [vmem:[%s6 + $0x4] sm:$0xf]
        %v772 = vld [vmem:[%s6 + $0x8] sm:$0xf]
        %v773 = vld [vmem:[%s6 + $0xc] sm:$0xf]
        %v774 = vld [vmem:[%s6 + $0x10] sm:$0xf]
        %v775 = vld [vmem:[%s6 + $0x14] sm:$0xf]
        %v776 = vld [vmem:[%s6 + $0x18] sm:$0xf]
        %v777 = vld [vmem:[%s6 + $0x1c] sm:$0xf]
        %v778 = vld [vmem:[%s6 + $0x20] sm:$0xf]
        %v779 = vld [vmem:[%s6 + $0x24] sm:$0xf]
        %v780 = vld [vmem:[%s6 + $0x28] sm:$0xf]
        %v781 = vld [vmem:[%s6 + $0x2c] sm:$0xf]
        %v782 = vld [vmem:[%s6 + $0x30] sm:$0xf]
        %v783 = vld [vmem:[%s6 + $0x34] sm:$0xf]
        %v784 = vld [vmem:[%s6 + $0x38] sm:$0xf]
        %v785 = vld [vmem:[%s6 + $0x3c] sm:$0xf]
        %v786 = vld [vmem:[%s7] sm:$0xff]
        %v787 = vld [vmem:[%s7 + $0x8] sm:$0xff]
        %v788 = vld [vmem:[%s7 + $0x10] sm:$0xff]
        %v789 = vld [vmem:[%s7 + $0x18] sm:$0xff]
        %v790 = vld [vmem:[%s7 + $0x20] sm:$0xff]
        %v791 = vld [vmem:[%s7 + $0x28] sm:$0xff]
        %v792 = vld [vmem:[%s7 + $0x30] sm:$0xff]
        %v793 = vld [vmem:[%s7 + $0x38] sm:$0xff]
        %v794 = vld [vmem:[%s7 + $0x40] sm:$0xff]
        %v795 = vld [vmem:[%s7 + $0x48] sm:$0xff]
        %v796 = vld [vmem:[%s7 + $0x50] sm:$0xff]
        %v797 = vld [vmem:[%s7 + $0x58] sm:$0xff]
        %v798 = vld [vmem:[%s7 + $0x60] sm:$0xff]
        %v799 = vld [vmem:[%s7 + $0x68] sm:$0xff]
        %v800 = vld [vmem:[%s7 + $0x70] sm:$0xff]
        %v801 = vld [vmem:[%s7 + $0x78] sm:$0xff]
        %803 = vset.pattern.permute.xlu0 0
        %804 = vperm.xlu0 %803, %v786
        %v805 = vpop.permute.xlu0 %804
        %808 = vset.pattern.permute.xlu0 0
        %809 = vperm.xlu0 %808, %v787
        %v810 = vpop.permute.xlu0 %809
        %813 = vset.pattern.permute.xlu0 0
        %814 = vperm.xlu0 %813, %v788
        %v815 = vpop.permute.xlu0 %814
        %818 = vset.pattern.permute.xlu0 0
        %819 = vperm.xlu0 %818, %v789
        %v820 = vpop.permute.xlu0 %819
        %823 = vset.pattern.permute.xlu0 0
        %824 = vperm.xlu0 %823, %v790
        %v825 = vpop.permute.xlu0 %824
        %828 = vset.pattern.permute.xlu0 0
        %829 = vperm.xlu0 %828, %v791
        %v830 = vpop.permute.xlu0 %829
        %833 = vset.pattern.permute.xlu0 0
        %834 = vperm.xlu0 %833, %v792
        %v835 = vpop.permute.xlu0 %834
        %838 = vset.pattern.permute.xlu0 0
        %839 = vperm.xlu0 %838, %v793
        %v840 = vpop.permute.xlu0 %839
        %843 = vset.pattern.permute.xlu0 0
        %844 = vperm.xlu0 %843, %v794
        %v845 = vpop.permute.xlu0 %844
        %848 = vset.pattern.permute.xlu0 0
        %849 = vperm.xlu0 %848, %v795
        %v850 = vpop.permute.xlu0 %849
        %853 = vset.pattern.permute.xlu0 0
        %854 = vperm.xlu0 %853, %v796
        %v855 = vpop.permute.xlu0 %854
        %858 = vset.pattern.permute.xlu0 0
        %859 = vperm.xlu0 %858, %v797
        %v860 = vpop.permute.xlu0 %859
        %863 = vset.pattern.permute.xlu0 0
        %864 = vperm.xlu0 %863, %v798
        %v865 = vpop.permute.xlu0 %864
        %868 = vset.pattern.permute.xlu0 0
        %869 = vperm.xlu0 %868, %v799
        %v870 = vpop.permute.xlu0 %869
        %873 = vset.pattern.permute.xlu0 0
        %874 = vperm.xlu0 %873, %v800
        %v875 = vpop.permute.xlu0 %874
        %878 = vset.pattern.permute.xlu0 0
        %879 = vperm.xlu0 %878, %v801
        %v880 = vpop.permute.xlu0 %879
        %v898 = vunpack.c.l.b16 %v770
        %v899 = vunpack.c.l.b16 %v771
        %v900 = vunpack.c.l.b16 %v772
        %v901 = vunpack.c.l.b16 %v773
        %v902 = vunpack.c.l.b16 %v774
        %v903 = vunpack.c.l.b16 %v775
        %v904 = vunpack.c.l.b16 %v776
        %v905 = vunpack.c.l.b16 %v777
        %v906 = vunpack.c.l.b16 %v778
        %v907 = vunpack.c.l.b16 %v779
        %v908 = vunpack.c.l.b16 %v780
        %v909 = vunpack.c.l.b16 %v781
        %v910 = vunpack.c.l.b16 %v782
        %v911 = vunpack.c.l.b16 %v783
        %v912 = vunpack.c.l.b16 %v784
        %v913 = vunpack.c.l.b16 %v785
        %v914 = vpack.c.b16 %v899, %v898
        %v915 = vpack.c.b16 %v901, %v900
        %v916 = vpack.c.b16 %v903, %v902
        %v917 = vpack.c.b16 %v905, %v904
        %v918 = vpack.c.b16 %v907, %v906
        %v919 = vpack.c.b16 %v909, %v908
        %v920 = vpack.c.b16 %v911, %v910
        %v921 = vpack.c.b16 %v913, %v912
        %vm922 = vcmask 523264
        %v924 = vsel %vm922, %v914, 0
        %v927 = vsel %vm922, %v915, 0
        %v930 = vsel %vm922, %v916, 0
        %v933 = vsel %vm922, %v917, 0
        %v936 = vsel %vm922, %v918, 0
        %v939 = vsel %vm922, %v919, 0
        %v942 = vsel %vm922, %v920, 0
        %v945 = vsel %vm922, %v921, 0
        %947 = vmatprep.subr.bf16.mxu0 0
        %948 = vmatpush1.bf16.msra.mxu0 %v766
        %949 = vmatprep.subr.bf16.mxu0 0
        %950 = vmatpush1.bf16.msra.mxu0 %v767
        %951 = vmatprep.subr.bf16.mxu0 0
        %952 = vmatpush1.bf16.msra.mxu0 %v768
        %953 = vmatprep.subr.bf16.mxu0 0
        %954 = vmatpush1.bf16.msra.mxu0 %v769
        %955 = vmatprep.subr.bf16.mxu0 0
        %956 = vmatpush1.bf16.msra.mxu0 0
        %957 = vmatprep.subr.bf16.mxu0 0
        %958 = vmatpush1.bf16.msra.mxu0 0
        %959 = vmatprep.subr.bf16.mxu0 0
        %960 = vmatpush1.bf16.msra.mxu0 0
        %961 = vmatprep.subr.bf16.mxu0 0
        %962 = vmatpush1.bf16.msra.mxu0 0
        %963 = vmatprep.subr.bf16.mxu0 0
        %964 = vmatpush1.bf16.msra.mxu0 0
        %965 = vmatprep.subr.bf16.mxu0 0
        %966 = vmatpush1.bf16.msra.mxu0 0
        %967 = vmatprep.subr.bf16.mxu0 0
        %968 = vmatpush1.bf16.msra.mxu0 0
        %969 = vmatprep.subr.bf16.mxu0 0
        %970 = vmatpush1.bf16.msra.mxu0 0
        %971 = vmatprep.subr.bf16.mxu0 0
        %972 = vmatpush1.bf16.msra.mxu0 0
        %973 = vmatprep.subr.bf16.mxu0 0
        %974 = vmatpush1.bf16.msra.mxu0 0
        %975 = vmatprep.subr.bf16.mxu0 0
        %976 = vmatpush1.bf16.msra.mxu0 0
        %977 = vmatprep.subr.bf16.mxu0 0
        %978 = vmatpush1.bf16.msra.mxu0 0
        %979 = vmatprep.mubr.bf16.mxu0 0
        %980 = vmatmul.mubr.bf16.gmra.mrb[0].mxu0 %v924
        %v981 = vpop.f32.mrb[0].mxu0
        %v982 = vadd.f32 %v805, %v981
        %v983 = vpop.f32.mrb[0].mxu0
        %v984 = vpop.f32.mrb[0].mxu0
        %v985 = vadd.f32 %v810, %v984
        %v986 = vpop.f32.mrb[0].mxu0
        %987 = vmatprep.mubr.bf16.mxu0 0
        %988 = vmatmul.mubr.bf16.gmra.mrb[0].mxu0 %v927
        %v989 = vpop.f32.mrb[0].mxu0
        %v990 = vadd.f32 %v815, %v989
        %v991 = vpop.f32.mrb[0].mxu0
        %v992 = vpop.f32.mrb[0].mxu0
        %v993 = vadd.f32 %v820, %v992
        %v994 = vpop.f32.mrb[0].mxu0
        %995 = vmatprep.mubr.bf16.mxu0 0
        %996 = vmatmul.mubr.bf16.gmra.mrb[0].mxu0 %v930
        %v997 = vpop.f32.mrb[0].mxu0
        %v998 = vadd.f32 %v825, %v997
        %v999 = vpop.f32.mrb[0].mxu0
        %v1000 = vpop.f32.mrb[0].mxu0
        %v1001 = vadd.f32 %v830, %v1000
        %v1002 = vpop.f32.mrb[0].mxu0
        %1003 = vmatprep.mubr.bf16.mxu0 0
        %1004 = vmatmul.mubr.bf16.gmra.mrb[0].mxu0 %v933
        %v1005 = vpop.f32.mrb[0].mxu0
        %v1006 = vadd.f32 %v835, %v1005
        %v1007 = vpop.f32.mrb[0].mxu0
        %v1008 = vpop.f32.mrb[0].mxu0
        %v1009 = vadd.f32 %v840, %v1008
        %v1010 = vpop.f32.mrb[0].mxu0
        %1011 = vmatprep.mubr.bf16.mxu0 0
        %1012 = vmatmul.mubr.bf16.gmra.mrb[0].mxu0 %v936
        %v1013 = vpop.f32.mrb[0].mxu0
        %v1014 = vadd.f32 %v845, %v1013
        %v1015 = vpop.f32.mrb[0].mxu0
        %v1016 = vpop.f32.mrb[0].mxu0
        %v1017 = vadd.f32 %v850, %v1016
        %v1018 = vpop.f32.mrb[0].mxu0
        %1019 = vmatprep.mubr.bf16.mxu0 0
        %1020 = vmatmul.mubr.bf16.gmra.mrb[0].mxu0 %v939
        %v1021 = vpop.f32.mrb[0].mxu0
        %v1022 = vadd.f32 %v855, %v1021
        %v1023 = vpop.f32.mrb[0].mxu0
        %v1024 = vpop.f32.mrb[0].mxu0
        %v1025 = vadd.f32 %v860, %v1024
        %v1026 = vpop.f32.mrb[0].mxu0
        %1027 = vmatprep.mubr.bf16.mxu0 0
        %1028 = vmatmul.mubr.bf16.gmra.mrb[0].mxu0 %v942
        %v1029 = vpop.f32.mrb[0].mxu0
        %v1030 = vadd.f32 %v865, %v1029
        %v1031 = vpop.f32.mrb[0].mxu0
        %v1032 = vpop.f32.mrb[0].mxu0
        %v1033 = vadd.f32 %v870, %v1032
        %v1034 = vpop.f32.mrb[0].mxu0
        %1035 = vmatprep.mubr.bf16.mxu0 0
        %1036 = vmatmul.mubr.bf16.gmra.mrb[0].mxu0 %v945
        %v1037 = vpop.f32.mrb[0].mxu0
        %v1038 = vadd.f32 %v875, %v1037
        %v1039 = vpop.f32.mrb[0].mxu0
        %v1040 = vpop.f32.mrb[0].mxu0
        %v1041 = vadd.f32 %v880, %v1040
        %v1042 = vpop.f32.mrb[0].mxu0
        %1043 = vdwg.mxu0
        %1044 = vxpose.xlu0.b32.start [1/16] %v758, 128
        %1045 = vxpose.xlu0.b32.cont [2/16] %v759, 128
        %1046 = vxpose.xlu0.b32.cont [3/16] %v760, 128
        %1047 = vxpose.xlu0.b32.cont [4/16] %v761, 128
        %1048 = vxpose.xlu0.b32.cont [5/16] %v762, 128
        %1049 = vxpose.xlu0.b32.cont [6/16] %v763, 128
        %1050 = vxpose.xlu0.b32.cont [7/16] %v764, 128
        %1051 = vxpose.xlu0.b32.cont [8/16] %v765, 128
        %1052 = vxpose.xlu0.b32.cont [9/16] 0.0, 128
        %1053 = vxpose.xlu0.b32.cont [10/16] 0.0, 128
        %1054 = vxpose.xlu0.b32.cont [11/16] 0.0, 128
        %1055 = vxpose.xlu0.b32.cont [12/16] 0.0, 128
        %1056 = vxpose.xlu0.b32.cont [13/16] 0.0, 128
        %1057 = vxpose.xlu0.b32.cont [14/16] 0.0, 128
        %1058 = vxpose.xlu0.b32.cont [15/16] 0.0, 128
        %1059 = vxpose.xlu0.b32.end [16/16] 0.0, 128
        %v1060 = vpop.trf.xlu0
        %v1061 = vpop.trf.xlu0
        %v1062 = vpop.trf.xlu0
        %v1063 = vpop.trf.xlu0
        %v1064 = vpop.trf.xlu0
        %v1065 = vpop.trf.xlu0
        %v1066 = vpop.trf.xlu0
        %v1067 = vpop.trf.xlu0
        %v1068 = vpop.trf.xlu0
        %v1069 = vpop.trf.xlu0
        %v1070 = vpop.trf.xlu0
        %v1071 = vpop.trf.xlu0
        %v1072 = vpop.trf.xlu0
        %v1073 = vpop.trf.xlu0
        %v1074 = vpop.trf.xlu0
        %v1075 = vpop.trf.xlu0
        %v1076 = vpack.c.bf16 %v1061, %v1060
        %v1077 = vpack.c.bf16 %v1063, %v1062
        %v1078 = vpack.c.bf16 %v1065, %v1064
        %v1079 = vpack.c.bf16 %v1067, %v1066
        %v1080 = vpack.c.bf16 %v1069, %v1068
        %v1081 = vpack.c.bf16 %v1071, %v1070
        %v1082 = vpack.c.bf16 %v1073, %v1072
        %v1083 = vpack.c.bf16 %v1075, %v1074
        %v1084 = vld [vmem:[%s4] sm:$0xf]
        %v1085 = vld [vmem:[%s4 + $0x4] sm:$0xf]
        %v1086 = vld [vmem:[%s4 + $0x8] sm:$0xf]
        %v1087 = vld [vmem:[%s4 + $0xc] sm:$0xf]
        %v1088 = vld [vmem:[%s4 + $0x10] sm:$0xf]
        %v1089 = vld [vmem:[%s4 + $0x14] sm:$0xf]
        %v1090 = vld [vmem:[%s4 + $0x18] sm:$0xf]
        %v1091 = vld [vmem:[%s4 + $0x1c] sm:$0xf]
        %v1092 = vld [vmem:[%s5] sm:$0x1]
        %v1094 = vlaneseq
        %v1095 = vshrl.u32 %v1094, 7
        %v1096 = vsub.s32 0, %v1095
        %v1097 = vrot.slane %v1092, %v1096
        %v1107 = vunpack.c.l.b16 %v1084
        %v1108 = vunpack.c.l.b16 %v1085
        %v1109 = vunpack.c.l.b16 %v1086
        %v1110 = vunpack.c.l.b16 %v1087
        %v1111 = vunpack.c.l.b16 %v1088
        %v1112 = vunpack.c.l.b16 %v1089
        %v1113 = vunpack.c.l.b16 %v1090
        %v1114 = vunpack.c.l.b16 %v1091
        %v1115 = vpack.c.b16 %v1108, %v1107
        %v1116 = vpack.c.b16 %v1110, %v1109
        %v1117 = vpack.c.b16 %v1112, %v1111
        %v1118 = vpack.c.b16 %v1114, %v1113
        %v1124 = vsel %vm922, %v1076, 0
        %v1127 = vsel %vm922, %v1077, 0
        %v1130 = vsel %vm922, %v1078, 0
        %v1133 = vsel %vm922, %v1079, 0
        %v1136 = vsel %vm922, %v1080, 0
        %v1139 = vsel %vm922, %v1081, 0
        %v1142 = vsel %vm922, %v1082, 0
        %v1145 = vsel %vm922, %v1083, 0
        %1147 = vmatprep.subr.bf16.mxu0 0
        %1148 = vmatpush1.bf16.msra.mxu0 %v1115
        %1149 = vmatprep.subr.bf16.mxu0 0
        %1150 = vmatpush1.bf16.msra.mxu0 %v1116
        %1151 = vmatprep.subr.bf16.mxu0 0
        %1152 = vmatpush1.bf16.msra.mxu0 %v1117
        %1153 = vmatprep.subr.bf16.mxu0 0
        %1154 = vmatpush1.bf16.msra.mxu0 %v1118
        %1155 = vmatprep.subr.bf16.mxu0 0
        %1156 = vmatpush1.bf16.msra.mxu0 0
        %1157 = vmatprep.subr.bf16.mxu0 0
        %1158 = vmatpush1.bf16.msra.mxu0 0
        %1159 = vmatprep.subr.bf16.mxu0 0
        %1160 = vmatpush1.bf16.msra.mxu0 0
        %1161 = vmatprep.subr.bf16.mxu0 0
        %1162 = vmatpush1.bf16.msra.mxu0 0
        %1163 = vmatprep.subr.bf16.mxu0 0
        %1164 = vmatpush1.bf16.msra.mxu0 0
        %1165 = vmatprep.subr.bf16.mxu0 0
        %1166 = vmatpush1.bf16.msra.mxu0 0
        %1167 = vmatprep.subr.bf16.mxu0 0
        %1168 = vmatpush1.bf16.msra.mxu0 0
        %1169 = vmatprep.subr.bf16.mxu0 0
        %1170 = vmatpush1.bf16.msra.mxu0 0
        %1171 = vmatprep.subr.bf16.mxu0 0
        %1172 = vmatpush1.bf16.msra.mxu0 0
        %1173 = vmatprep.subr.bf16.mxu0 0
        %1174 = vmatpush1.bf16.msra.mxu0 0
        %1175 = vmatprep.subr.bf16.mxu0 0
        %1176 = vmatpush1.bf16.msra.mxu0 0
        %1177 = vmatprep.subr.bf16.mxu0 0
        %1178 = vmatpush1.bf16.msra.mxu0 0
        %1179 = vmatprep.mubr.bf16.mxu0 0
        %1180 = vmatmul.mubr.bf16.gmra.mrb[0].mxu0 %v1124
        %v1181 = vpop.f32.mrb[0].mxu0
        %v1182 = vadd.f32 %v1097, %v1181
        %v1183 = vpop.f32.mrb[0].mxu0
        %v1184 = vpop.f32.mrb[0].mxu0
        %v1185 = vadd.f32 %v1097, %v1184
        %v1186 = vpop.f32.mrb[0].mxu0
        %1187 = vmatprep.mubr.bf16.mxu0 0
        %1188 = vmatmul.mubr.bf16.gmra.mrb[0].mxu0 %v1127
        %v1189 = vpop.f32.mrb[0].mxu0
        %v1190 = vadd.f32 %v1097, %v1189
        %v1191 = vpop.f32.mrb[0].mxu0
        %v1192 = vpop.f32.mrb[0].mxu0
        %v1193 = vadd.f32 %v1097, %v1192
        %v1194 = vpop.f32.mrb[0].mxu0
        %1195 = vmatprep.mubr.bf16.mxu0 0
        %1196 = vmatmul.mubr.bf16.gmra.mrb[0].mxu0 %v1130
        %v1197 = vpop.f32.mrb[0].mxu0
        %v1198 = vadd.f32 %v1097, %v1197
        %v1199 = vpop.f32.mrb[0].mxu0
        %v1200 = vpop.f32.mrb[0].mxu0
        %v1201 = vadd.f32 %v1097, %v1200
        %v1202 = vpop.f32.mrb[0].mxu0
        %1203 = vmatprep.mubr.bf16.mxu0 0
        %1204 = vmatmul.mubr.bf16.gmra.mrb[0].mxu0 %v1133
        %v1205 = vpop.f32.mrb[0].mxu0
        %v1206 = vadd.f32 %v1097, %v1205
        %v1207 = vpop.f32.mrb[0].mxu0
        %v1208 = vpop.f32.mrb[0].mxu0
        %v1209 = vadd.f32 %v1097, %v1208
        %v1210 = vpop.f32.mrb[0].mxu0
        %1211 = vmatprep.mubr.bf16.mxu0 0
        %1212 = vmatmul.mubr.bf16.gmra.mrb[0].mxu0 %v1136
        %v1213 = vpop.f32.mrb[0].mxu0
        %v1214 = vadd.f32 %v1097, %v1213
        %v1215 = vpop.f32.mrb[0].mxu0
        %v1216 = vpop.f32.mrb[0].mxu0
        %v1217 = vadd.f32 %v1097, %v1216
        %v1218 = vpop.f32.mrb[0].mxu0
        %1219 = vmatprep.mubr.bf16.mxu0 0
        %1220 = vmatmul.mubr.bf16.gmra.mrb[0].mxu0 %v1139
        %v1221 = vpop.f32.mrb[0].mxu0
        %v1222 = vadd.f32 %v1097, %v1221
        %v1223 = vpop.f32.mrb[0].mxu0
        %v1224 = vpop.f32.mrb[0].mxu0
        %v1225 = vadd.f32 %v1097, %v1224
        %v1226 = vpop.f32.mrb[0].mxu0
        %1227 = vmatprep.mubr.bf16.mxu0 0
        %1228 = vmatmul.mubr.bf16.gmra.mrb[0].mxu0 %v1142
        %v1229 = vpop.f32.mrb[0].mxu0
        %v1230 = vadd.f32 %v1097, %v1229
        %v1231 = vpop.f32.mrb[0].mxu0
        %v1232 = vpop.f32.mrb[0].mxu0
        %v1233 = vadd.f32 %v1097, %v1232
        %v1234 = vpop.f32.mrb[0].mxu0
        %1235 = vmatprep.mubr.bf16.mxu0 0
        %1236 = vmatmul.mubr.bf16.gmra.mrb[0].mxu0 %v1145
        %v1237 = vpop.f32.mrb[0].mxu0
        %v1238 = vadd.f32 %v1097, %v1237
        %v1239 = vpop.f32.mrb[0].mxu0
        %v1240 = vpop.f32.mrb[0].mxu0
        %v1241 = vadd.f32 %v1097, %v1240
        %v1242 = vpop.f32.mrb[0].mxu0
        %1243 = vdwg.mxu0
        %v1244 = vpack.c.bf16 %v1185, %v1182
        %v1245 = vpack.c.bf16 %v1193, %v1190
        %v1246 = vpack.c.bf16 %v1201, %v1198
        %v1247 = vpack.c.bf16 %v1209, %v1206
        %v1248 = vpack.c.bf16 %v1217, %v1214
        %v1249 = vpack.c.bf16 %v1225, %v1222
        %v1250 = vpack.c.bf16 %v1233, %v1230
        %v1251 = vpack.c.bf16 %v1241, %v1238
        %v1252 = vpack.c.bf16 %v982, %v982
        %v1253 = vpack.c.bf16 %v1014, %v1014
        %vm1254 = vcmask 64512
        %v1256 = vsel %vm1254, %v1244, 0
        %v1259 = vsel %vm1254, %v1245, 0
        %v1262 = vsel %vm1254, %v1246, 0
        %v1265 = vsel %vm1254, %v1247, 0
        %v1268 = vsel %vm1254, %v1248, 0
        %v1271 = vsel %vm1254, %v1249, 0
        %v1274 = vsel %vm1254, %v1250, 0
        %v1277 = vsel %vm1254, %v1251, 0
        %vm1279 = vcmask 1043456
        %v1281 = vsel %vm1279, %v1252, 0
        %1283 = vmatprep.subr.bf16.mxu0 0
        %1284 = vmatpush1.bf16.msra.mxu0 %v1281
        %1285 = vmatprep.subr.bf16.mxu0 0
        %1286 = vmatpush1.bf16.msra.mxu0 0
        %1287 = vmatprep.subr.bf16.mxu0 0
        %1288 = vmatpush1.bf16.msra.mxu0 0
        %1289 = vmatprep.subr.bf16.mxu0 0
        %1290 = vmatpush1.bf16.msra.mxu0 0
        %1291 = vmatprep.subr.bf16.mxu0 0
        %1292 = vmatpush1.bf16.msra.mxu0 0
        %1293 = vmatprep.subr.bf16.mxu0 0
        %1294 = vmatpush1.bf16.msra.mxu0 0
        %1295 = vmatprep.subr.bf16.mxu0 0
        %1296 = vmatpush1.bf16.msra.mxu0 0
        %1297 = vmatprep.subr.bf16.mxu0 0
        %1298 = vmatpush1.bf16.msra.mxu0 0
        %1299 = vmatprep.subr.bf16.mxu0 0
        %1300 = vmatpush1.bf16.msra.mxu0 0
        %1301 = vmatprep.subr.bf16.mxu0 0
        %1302 = vmatpush1.bf16.msra.mxu0 0
        %1303 = vmatprep.subr.bf16.mxu0 0
        %1304 = vmatpush1.bf16.msra.mxu0 0
        %1305 = vmatprep.subr.bf16.mxu0 0
        %1306 = vmatpush1.bf16.msra.mxu0 0
        %1307 = vmatprep.subr.bf16.mxu0 0
        %1308 = vmatpush1.bf16.msra.mxu0 0
        %1309 = vmatprep.subr.bf16.mxu0 0
        %1310 = vmatpush1.bf16.msra.mxu0 0
        %1311 = vmatprep.subr.bf16.mxu0 0
        %1312 = vmatpush1.bf16.msra.mxu0 0
        %1313 = vmatprep.subr.bf16.mxu0 0
        %1314 = vmatpush1.bf16.msra.mxu0 0
        %1315 = vmatprep.mubr.bf16.mxu0 0
        %1316 = vmatmul.mubr.bf16.gmra.mrb[0].mxu0 %v1256
        %v1317 = vpop.f32.mrb[0].mxu0
        %v1318 = vadd.f32 0.0, %v1317
        %v1319 = vpop.f32.mrb[0].mxu0
        %v1320 = vpop.f32.mrb[0].mxu0
        %v1321 = vadd.f32 0.0, %v1320
        %v1322 = vpop.f32.mrb[0].mxu0
        %1323 = vmatprep.mubr.bf16.mxu0 0
        %1324 = vmatmul.mubr.bf16.gmra.mrb[0].mxu0 %v1259
        %v1325 = vpop.f32.mrb[0].mxu0
        %v1326 = vadd.f32 0.0, %v1325
        %v1327 = vpop.f32.mrb[0].mxu0
        %v1328 = vpop.f32.mrb[0].mxu0
        %v1329 = vadd.f32 0.0, %v1328
        %v1330 = vpop.f32.mrb[0].mxu0
        %1331 = vmatprep.mubr.bf16.mxu0 0
        %1332 = vmatmul.mubr.bf16.gmra.mrb[0].mxu0 %v1262
        %v1333 = vpop.f32.mrb[0].mxu0
        %v1334 = vadd.f32 0.0, %v1333
        %v1335 = vpop.f32.mrb[0].mxu0
        %v1336 = vpop.f32.mrb[0].mxu0
        %v1337 = vadd.f32 0.0, %v1336
        %v1338 = vpop.f32.mrb[0].mxu0
        %1339 = vmatprep.mubr.bf16.mxu0 0
        %1340 = vmatmul.mubr.bf16.gmra.mrb[0].mxu0 %v1265
        %v1341 = vpop.f32.mrb[0].mxu0
        %v1342 = vadd.f32 0.0, %v1341
        %v1343 = vpop.f32.mrb[0].mxu0
        %v1344 = vpop.f32.mrb[0].mxu0
        %v1345 = vadd.f32 0.0, %v1344
        %v1346 = vpop.f32.mrb[0].mxu0
        %1347 = vmatprep.mubr.bf16.mxu0 0
        %1348 = vmatmul.mubr.bf16.gmra.mrb[0].mxu0 %v1268
        %v1349 = vpop.f32.mrb[0].mxu0
        %v1350 = vadd.f32 0.0, %v1349
        %v1351 = vpop.f32.mrb[0].mxu0
        %v1352 = vpop.f32.mrb[0].mxu0
        %v1353 = vadd.f32 0.0, %v1352
        %v1354 = vpop.f32.mrb[0].mxu0
        %1355 = vmatprep.mubr.bf16.mxu0 0
        %1356 = vmatmul.mubr.bf16.gmra.mrb[0].mxu0 %v1271
        %v1357 = vpop.f32.mrb[0].mxu0
        %v1358 = vadd.f32 0.0, %v1357
        %v1359 = vpop.f32.mrb[0].mxu0
        %v1360 = vpop.f32.mrb[0].mxu0
        %v1361 = vadd.f32 0.0, %v1360
        %v1362 = vpop.f32.mrb[0].mxu0
        %1363 = vmatprep.mubr.bf16.mxu0 0
        %1364 = vmatmul.mubr.bf16.gmra.mrb[0].mxu0 %v1274
        %v1365 = vpop.f32.mrb[0].mxu0
        %v1366 = vadd.f32 0.0, %v1365
        %v1367 = vpop.f32.mrb[0].mxu0
        %v1368 = vpop.f32.mrb[0].mxu0
        %v1369 = vadd.f32 0.0, %v1368
        %v1370 = vpop.f32.mrb[0].mxu0
        %1371 = vmatprep.mubr.bf16.mxu0 0
        %1372 = vmatmul.mubr.bf16.gmra.mrb[0].mxu0 %v1277
        %v1373 = vpop.f32.mrb[0].mxu0
        %v1374 = vadd.f32 0.0, %v1373
        %v1375 = vpop.f32.mrb[0].mxu0
        %v1376 = vpop.f32.mrb[0].mxu0
        %v1377 = vadd.f32 0.0, %v1376
        %v1378 = vpop.f32.mrb[0].mxu0
        %1379 = vdwg.mxu0
        %1380 = vmax.xlane.f32.xlu0 %v1318
        %v1381 = vpop.xlane.xlu0 %1380
        %1382 = vmax.xlane.f32.xlu0 %v1321
        %v1383 = vpop.xlane.xlu0 %1382
        %1384 = vmax.xlane.f32.xlu0 %v1326
        %v1385 = vpop.xlane.xlu0 %1384
        %1386 = vmax.xlane.f32.xlu0 %v1329
        %v1387 = vpop.xlane.xlu0 %1386
        %1388 = vmax.xlane.f32.xlu0 %v1334
        %v1389 = vpop.xlane.xlu0 %1388
        %1390 = vmax.xlane.f32.xlu0 %v1337
        %v1391 = vpop.xlane.xlu0 %1390
        %1392 = vmax.xlane.f32.xlu0 %v1342
        %v1393 = vpop.xlane.xlu0 %1392
        %1394 = vmax.xlane.f32.xlu0 %v1345
        %v1395 = vpop.xlane.xlu0 %1394
        %1396 = vmax.xlane.f32.xlu0 %v1350
        %v1397 = vpop.xlane.xlu0 %1396
        %1398 = vmax.xlane.f32.xlu0 %v1353
        %v1399 = vpop.xlane.xlu0 %1398
        %1400 = vmax.xlane.f32.xlu0 %v1358
        %v1401 = vpop.xlane.xlu0 %1400
        %1402 = vmax.xlane.f32.xlu0 %v1361
        %v1403 = vpop.xlane.xlu0 %1402
        %1404 = vmax.xlane.f32.xlu0 %v1366
        %v1405 = vpop.xlane.xlu0 %1404
        %1406 = vmax.xlane.f32.xlu0 %v1369
        %v1407 = vpop.xlane.xlu0 %1406
        %1408 = vmax.xlane.f32.xlu0 %v1374
        %v1409 = vpop.xlane.xlu0 %1408
        %1410 = vmax.xlane.f32.xlu0 %v1377
        %v1411 = vpop.xlane.xlu0 %1410
        %v1412 = vsub.f32 %v1318, %v1381
        %v1413 = vsub.f32 %v1321, %v1383
        %v1414 = vsub.f32 %v1326, %v1385
        %v1415 = vsub.f32 %v1329, %v1387
        %v1416 = vsub.f32 %v1334, %v1389
        %v1417 = vsub.f32 %v1337, %v1391
        %v1418 = vsub.f32 %v1342, %v1393
        %v1419 = vsub.f32 %v1345, %v1395
        %v1420 = vsub.f32 %v1350, %v1397
        %v1421 = vsub.f32 %v1353, %v1399
        %v1422 = vsub.f32 %v1358, %v1401
        %v1423 = vsub.f32 %v1361, %v1403
        %v1424 = vsub.f32 %v1366, %v1405
        %v1425 = vsub.f32 %v1369, %v1407
        %v1426 = vsub.f32 %v1374, %v1409
        %v1427 = vsub.f32 %v1377, %v1411
        %v1428 = vmul.f32 %v1412, 1.442695
        %v1429 = vpow.pop %v1428
        %v1430 = vmul.f32 %v1413, 1.442695
        %v1431 = vpow.pop %v1430
        %v1432 = vmul.f32 %v1414, 1.442695
        %v1433 = vpow.pop %v1432
        %v1434 = vmul.f32 %v1415, 1.442695
        %v1435 = vpow.pop %v1434
        %v1436 = vmul.f32 %v1416, 1.442695
        %v1437 = vpow.pop %v1436
        %v1438 = vmul.f32 %v1417, 1.442695
        %v1439 = vpow.pop %v1438
        %v1440 = vmul.f32 %v1418, 1.442695
        %v1441 = vpow.pop %v1440
        %v1442 = vmul.f32 %v1419, 1.442695
        %v1443 = vpow.pop %v1442
        %v1444 = vmul.f32 %v1420, 1.442695
        %v1445 = vpow.pop %v1444
        %v1446 = vmul.f32 %v1421, 1.442695
        %v1447 = vpow.pop %v1446
        %v1448 = vmul.f32 %v1422, 1.442695
        %v1449 = vpow.pop %v1448
        %v1450 = vmul.f32 %v1423, 1.442695
        %v1451 = vpow.pop %v1450
        %v1452 = vmul.f32 %v1424, 1.442695
        %v1453 = vpow.pop %v1452
        %v1454 = vmul.f32 %v1425, 1.442695
        %v1455 = vpow.pop %v1454
        %v1456 = vmul.f32 %v1426, 1.442695
        %v1457 = vpow.pop %v1456
        %v1458 = vmul.f32 %v1427, 1.442695
        %v1459 = vpow.pop %v1458
        %1460 = vadd.xlane.f32.xlu0 %v1429
        %v1461 = vpop.xlane.xlu0 %1460
        %1462 = vadd.xlane.f32.xlu0 %v1431
        %v1463 = vpop.xlane.xlu0 %1462
        %1464 = vadd.xlane.f32.xlu0 %v1433
        %v1465 = vpop.xlane.xlu0 %1464
        %1466 = vadd.xlane.f32.xlu0 %v1435
        %v1467 = vpop.xlane.xlu0 %1466
        %1468 = vadd.xlane.f32.xlu0 %v1437
        %v1469 = vpop.xlane.xlu0 %1468
        %1470 = vadd.xlane.f32.xlu0 %v1439
        %v1471 = vpop.xlane.xlu0 %1470
        %1472 = vadd.xlane.f32.xlu0 %v1441
        %v1473 = vpop.xlane.xlu0 %1472
        %1474 = vadd.xlane.f32.xlu0 %v1443
        %v1475 = vpop.xlane.xlu0 %1474
        %1476 = vadd.xlane.f32.xlu0 %v1445
        %v1477 = vpop.xlane.xlu0 %1476
        %1478 = vadd.xlane.f32.xlu0 %v1447
        %v1479 = vpop.xlane.xlu0 %1478
        %1480 = vadd.xlane.f32.xlu0 %v1449
        %v1481 = vpop.xlane.xlu0 %1480
        %1482 = vadd.xlane.f32.xlu0 %v1451
        %v1483 = vpop.xlane.xlu0 %1482
        %1484 = vadd.xlane.f32.xlu0 %v1453
        %v1485 = vpop.xlane.xlu0 %1484
        %1486 = vadd.xlane.f32.xlu0 %v1455
        %v1487 = vpop.xlane.xlu0 %1486
        %1488 = vadd.xlane.f32.xlu0 %v1457
        %v1489 = vpop.xlane.xlu0 %1488
        %1490 = vadd.xlane.f32.xlu0 %v1459
        %v1491 = vpop.xlane.xlu0 %1490
        %v1492 = vrcp.pop %v1461
        %v1493 = vrcp.pop %v1463
        %v1494 = vrcp.pop %v1465
        %v1495 = vrcp.pop %v1467
        %v1496 = vrcp.pop %v1469
        %v1497 = vrcp.pop %v1471
        %v1498 = vrcp.pop %v1473
        %v1499 = vrcp.pop %v1475
        %v1500 = vrcp.pop %v1477
        %v1501 = vrcp.pop %v1479
        %v1502 = vrcp.pop %v1481
        %v1503 = vrcp.pop %v1483
        %v1504 = vrcp.pop %v1485
        %v1505 = vrcp.pop %v1487
        %v1506 = vrcp.pop %v1489
        %v1507 = vrcp.pop %v1491
        %v1508 = vmul.f32 %v1429, %v1492
        %v1509 = vmul.f32 %v1431, %v1493
        %v1510 = vmul.f32 %v1433, %v1494
        %v1511 = vmul.f32 %v1435, %v1495
        %v1512 = vmul.f32 %v1437, %v1496
        %v1513 = vmul.f32 %v1439, %v1497
        %v1514 = vmul.f32 %v1441, %v1498
        %v1515 = vmul.f32 %v1443, %v1499
        %v1516 = vmul.f32 %v1445, %v1500
        %v1517 = vmul.f32 %v1447, %v1501
        %v1518 = vmul.f32 %v1449, %v1502
        %v1519 = vmul.f32 %v1451, %v1503
        %v1520 = vmul.f32 %v1453, %v1504
        %v1521 = vmul.f32 %v1455, %v1505
        %v1522 = vmul.f32 %v1457, %v1506
        %v1523 = vmul.f32 %v1459, %v1507
        %v1524 = vpack.c.bf16 %v1509, %v1508
        %v1525 = vpack.c.bf16 %v1511, %v1510
        %v1526 = vpack.c.bf16 %v1513, %v1512
        %v1527 = vpack.c.bf16 %v1515, %v1514
        %v1528 = vpack.c.bf16 %v1517, %v1516
        %v1529 = vpack.c.bf16 %v1519, %v1518
        %v1530 = vpack.c.bf16 %v1521, %v1520
        %v1531 = vpack.c.bf16 %v1523, %v1522
        %1532 = vmatprep.subr.bf16.mxu0 0
        %1533 = vmatpush1.bf16.xpose.msra.mxu0 %v1524
        %1534 = vmatprep.subr.bf16.mxu0 0
        %1535 = vmatpush1.bf16.xpose.msra.mxu0 %v1525
        %1536 = vmatprep.subr.bf16.mxu0 0
        %1537 = vmatpush1.bf16.xpose.msra.mxu0 %v1526
        %1538 = vmatprep.subr.bf16.mxu0 0
        %1539 = vmatpush1.bf16.xpose.msra.mxu0 %v1527
        %1540 = vmatprep.subr.bf16.mxu0 0
        %1541 = vmatpush1.bf16.xpose.msra.mxu0 %v1528
        %1542 = vmatprep.subr.bf16.mxu0 0
        %1543 = vmatpush1.bf16.xpose.msra.mxu0 %v1529
        %1544 = vmatprep.subr.bf16.mxu0 0
        %1545 = vmatpush1.bf16.xpose.msra.mxu0 %v1530
        %1546 = vmatprep.subr.bf16.mxu0 0
        %1547 = vmatpush1.bf16.xpose.msra.mxu0 %v1531
        %1548 = vmatprep.subr.bf16.mxu0 0
        %1549 = vmatpush1.bf16.xpose.msra.mxu0 0
        %1550 = vmatprep.subr.bf16.mxu0 0
        %1551 = vmatpush1.bf16.xpose.msra.mxu0 0
        %1552 = vmatprep.subr.bf16.mxu0 0
        %1553 = vmatpush1.bf16.xpose.msra.mxu0 0
        %1554 = vmatprep.subr.bf16.mxu0 0
        %1555 = vmatpush1.bf16.xpose.msra.mxu0 0
        %1556 = vmatprep.subr.bf16.mxu0 0
        %1557 = vmatpush1.bf16.xpose.msra.mxu0 0
        %1558 = vmatprep.subr.bf16.mxu0 0
        %1559 = vmatpush1.bf16.xpose.msra.mxu0 0
        %1560 = vmatprep.subr.bf16.mxu0 0
        %1561 = vmatpush1.bf16.xpose.msra.mxu0 0
        %1562 = vmatprep.subr.bf16.mxu0 0
        %1563 = vmatpush1.bf16.xpose.msra.mxu0 0
        %1564 = vmatprep.mubr.bf16.mxu0 0
        %1565 = vmatmul.mubr.bf16.gmra.mrb[0].mxu0 %v1253
        %v1566 = vpop.f32.mrb[0].mxu0
        %v1567 = vadd.f32 0.0, %v1566
        %v1568 = vpop.f32.mrb[0].mxu0
        %v1569 = vpop.f32.mrb[0].mxu0
        %v1570 = vpop.f32.mrb[0].mxu0
        %1571 = vdwg.mxu0
        %v1572 = vpack.c.bf16 %v985, %v985
        %v1573 = vpack.c.bf16 %v1017, %v1017
        %1582 = vrot.lane.b32.xlu0 %v1244, 120
        %v1583 = vpop.permute.xlu0 %1582
        %1584 = vrot.lane.b32.xlu0 %v1245, 120
        %v1585 = vpop.permute.xlu0 %1584
        %1586 = vrot.lane.b32.xlu0 %v1246, 120
        %v1587 = vpop.permute.xlu0 %1586
        %1588 = vrot.lane.b32.xlu0 %v1247, 120
        %v1589 = vpop.permute.xlu0 %1588
        %1590 = vrot.lane.b32.xlu0 %v1248, 120
        %v1591 = vpop.permute.xlu0 %1590
        %1592 = vrot.lane.b32.xlu0 %v1249, 120
        %v1593 = vpop.permute.xlu0 %1592
        %1594 = vrot.lane.b32.xlu0 %v1250, 120
        %v1595 = vpop.permute.xlu0 %1594
        %1596 = vrot.lane.b32.xlu0 %v1251, 120
        %v1597 = vpop.permute.xlu0 %1596
        %v1599 = vsel %vm1254, %v1583, 0
        %v1602 = vsel %vm1254, %v1585, 0
        %v1605 = vsel %vm1254, %v1587, 0
        %v1608 = vsel %vm1254, %v1589, 0
        %v1611 = vsel %vm1254, %v1591, 0
        %v1614 = vsel %vm1254, %v1593, 0
        %v1617 = vsel %vm1254, %v1595, 0
        %v1620 = vsel %vm1254, %v1597, 0
        %v1623 = vsel %vm1279, %v1572, 0
        %1625 = vmatprep.subr.bf16.mxu0 0
        %1626 = vmatpush1.bf16.msra.mxu0 %v1623
        %1627 = vmatprep.subr.bf16.mxu0 0
        %1628 = vmatpush1.bf16.msra.mxu0 0
        %1629 = vmatprep.subr.bf16.mxu0 0
        %1630 = vmatpush1.bf16.msra.mxu0 0
        %1631 = vmatprep.subr.bf16.mxu0 0
        %1632 = vmatpush1.bf16.msra.mxu0 0
        %1633 = vmatprep.subr.bf16.mxu0 0
        %1634 = vmatpush1.bf16.msra.mxu0 0
        %1635 = vmatprep.subr.bf16.mxu0 0
        %1636 = vmatpush1.bf16.msra.mxu0 0
        %1637 = vmatprep.subr.bf16.mxu0 0
        %1638 = vmatpush1.bf16.msra.mxu0 0
        %1639 = vmatprep.subr.bf16.mxu0 0
        %1640 = vmatpush1.bf16.msra.mxu0 0
        %1641 = vmatprep.subr.bf16.mxu0 0
        %1642 = vmatpush1.bf16.msra.mxu0 0
        %1643 = vmatprep.subr.bf16.mxu0 0
        %1644 = vmatpush1.bf16.msra.mxu0 0
        %1645 = vmatprep.subr.bf16.mxu0 0
        %1646 = vmatpush1.bf16.msra.mxu0 0
        %1647 = vmatprep.subr.bf16.mxu0 0
        %1648 = vmatpush1.bf16.msra.mxu0 0
        %1649 = vmatprep.subr.bf16.mxu0 0
        %1650 = vmatpush1.bf16.msra.mxu0 0
        %1651 = vmatprep.subr.bf16.mxu0 0
        %1652 = vmatpush1.bf16.msra.mxu0 0
        %1653 = vmatprep.subr.bf16.mxu0 0
        %1654 = vmatpush1.bf16.msra.mxu0 0
        %1655 = vmatprep.subr.bf16.mxu0 0
        %1656 = vmatpush1.bf16.msra.mxu0 0
        %1657 = vmatprep.mubr.bf16.mxu0 0
        %1658 = vmatmul.mubr.bf16.gmra.mrb[0].mxu0 %v1599
        %v1659 = vpop.f32.mrb[0].mxu0
        %v1660 = vadd.f32 0.0, %v1659
        %v1661 = vpop.f32.mrb[0].mxu0
        %v1662 = vpop.f32.mrb[0].mxu0
        %v1663 = vadd.f32 0.0, %v1662
        %v1664 = vpop.f32.mrb[0].mxu0
        %1665 = vmatprep.mubr.bf16.mxu0 0
        %1666 = vmatmul.mubr.bf16.gmra.mrb[0].mxu0 %v1602
        %v1667 = vpop.f32.mrb[0].mxu0
        %v1668 = vadd.f32 0.0, %v1667
        %v1669 = vpop.f32.mrb[0].mxu0
        %v1670 = vpop.f32.mrb[0].mxu0
        %v1671 = vadd.f32 0.0, %v1670
        %v1672 = vpop.f32.mrb[0].mxu0
        %1673 = vmatprep.mubr.bf16.mxu0 0
        %1674 = vmatmul.mubr.bf16.gmra.mrb[0].mxu0 %v1605
        %v1675 = vpop.f32.mrb[0].mxu0
        %v1676 = vadd.f32 0.0, %v1675
        %v1677 = vpop.f32.mrb[0].mxu0
        %v1678 = vpop.f32.mrb[0].mxu0
        %v1679 = vadd.f32 0.0, %v1678
        %v1680 = vpop.f32.mrb[0].mxu0
        %1681 = vmatprep.mubr.bf16.mxu0 0
        %1682 = vmatmul.mubr.bf16.gmra.mrb[0].mxu0 %v1608
        %v1683 = vpop.f32.mrb[0].mxu0
        %v1684 = vadd.f32 0.0, %v1683
        %v1685 = vpop.f32.mrb[0].mxu0
        %v1686 = vpop.f32.mrb[0].mxu0
        %v1687 = vadd.f32 0.0, %v1686
        %v1688 = vpop.f32.mrb[0].mxu0
        %1689 = vmatprep.mubr.bf16.mxu0 0
        %1690 = vmatmul.mubr.bf16.gmra.mrb[0].mxu0 %v1611
        %v1691 = vpop.f32.mrb[0].mxu0
        %v1692 = vadd.f32 0.0, %v1691
        %v1693 = vpop.f32.mrb[0].mxu0
        %v1694 = vpop.f32.mrb[0].mxu0
        %v1695 = vadd.f32 0.0, %v1694
        %v1696 = vpop.f32.mrb[0].mxu0
        %1697 = vmatprep.mubr.bf16.mxu0 0
        %1698 = vmatmul.mubr.bf16.gmra.mrb[0].mxu0 %v1614
        %v1699 = vpop.f32.mrb[0].mxu0
        %v1700 = vadd.f32 0.0, %v1699
        %v1701 = vpop.f32.mrb[0].mxu0
        %v1702 = vpop.f32.mrb[0].mxu0
        %v1703 = vadd.f32 0.0, %v1702
        %v1704 = vpop.f32.mrb[0].mxu0
        %1705 = vmatprep.mubr.bf16.mxu0 0
        %1706 = vmatmul.mubr.bf16.gmra.mrb[0].mxu0 %v1617
        %v1707 = vpop.f32.mrb[0].mxu0
        %v1708 = vadd.f32 0.0, %v1707
        %v1709 = vpop.f32.mrb[0].mxu0
        %v1710 = vpop.f32.mrb[0].mxu0
        %v1711 = vadd.f32 0.0, %v1710
        %v1712 = vpop.f32.mrb[0].mxu0
        %1713 = vmatprep.mubr.bf16.mxu0 0
        %1714 = vmatmul.mubr.bf16.gmra.mrb[0].mxu0 %v1620
        %v1715 = vpop.f32.mrb[0].mxu0
        %v1716 = vadd.f32 0.0, %v1715
        %v1717 = vpop.f32.mrb[0].mxu0
        %v1718 = vpop.f32.mrb[0].mxu0
        %v1719 = vadd.f32 0.0, %v1718
        %v1720 = vpop.f32.mrb[0].mxu0
        %1721 = vdwg.mxu0
        %1722 = vmax.xlane.f32.xlu0 %v1660
        %v1723 = vpop.xlane.xlu0 %1722
        %1724 = vmax.xlane.f32.xlu0 %v1663
        %v1725 = vpop.xlane.xlu0 %1724
        %1726 = vmax.xlane.f32.xlu0 %v1668
        %v1727 = vpop.xlane.xlu0 %1726
        %1728 = vmax.xlane.f32.xlu0 %v1671
        %v1729 = vpop.xlane.xlu0 %1728
        %1730 = vmax.xlane.f32.xlu0 %v1676
        %v1731 = vpop.xlane.xlu0 %1730
        %1732 = vmax.xlane.f32.xlu0 %v1679
        %v1733 = vpop.xlane.xlu0 %1732
        %1734 = vmax.xlane.f32.xlu0 %v1684
        %v1735 = vpop.xlane.xlu0 %1734
        %1736 = vmax.xlane.f32.xlu0 %v1687
        %v1737 = vpop.xlane.xlu0 %1736
        %1738 = vmax.xlane.f32.xlu0 %v1692
        %v1739 = vpop.xlane.xlu0 %1738
        %1740 = vmax.xlane.f32.xlu0 %v1695
        %v1741 = vpop.xlane.xlu0 %1740
        %1742 = vmax.xlane.f32.xlu0 %v1700
        %v1743 = vpop.xlane.xlu0 %1742
        %1744 = vmax.xlane.f32.xlu0 %v1703
        %v1745 = vpop.xlane.xlu0 %1744
        %1746 = vmax.xlane.f32.xlu0 %v1708
        %v1747 = vpop.xlane.xlu0 %1746
        %1748 = vmax.xlane.f32.xlu0 %v1711
        %v1749 = vpop.xlane.xlu0 %1748
        %1750 = vmax.xlane.f32.xlu0 %v1716
        %v1751 = vpop.xlane.xlu0 %1750
        %1752 = vmax.xlane.f32.xlu0 %v1719
        %v1753 = vpop.xlane.xlu0 %1752
        %v1754 = vsub.f32 %v1660, %v1723
        %v1755 = vsub.f32 %v1663, %v1725
        %v1756 = vsub.f32 %v1668, %v1727
        %v1757 = vsub.f32 %v1671, %v1729
        %v1758 = vsub.f32 %v1676, %v1731
        %v1759 = vsub.f32 %v1679, %v1733
        %v1760 = vsub.f32 %v1684, %v1735
        %v1761 = vsub.f32 %v1687, %v1737
        %v1762 = vsub.f32 %v1692, %v1739
        %v1763 = vsub.f32 %v1695, %v1741
        %v1764 = vsub.f32 %v1700, %v1743
        %v1765 = vsub.f32 %v1703, %v1745
        %v1766 = vsub.f32 %v1708, %v1747
        %v1767 = vsub.f32 %v1711, %v1749
        %v1768 = vsub.f32 %v1716, %v1751
        %v1769 = vsub.f32 %v1719, %v1753
        %v1770 = vmul.f32 %v1754, 1.442695
        %v1771 = vpow.pop %v1770
        %v1772 = vmul.f32 %v1755, 1.442695
        %v1773 = vpow.pop %v1772
        %v1774 = vmul.f32 %v1756, 1.442695
        %v1775 = vpow.pop %v1774
        %v1776 = vmul.f32 %v1757, 1.442695
        %v1777 = vpow.pop %v1776
        %v1778 = vmul.f32 %v1758, 1.442695
        %v1779 = vpow.pop %v1778
        %v1780 = vmul.f32 %v1759, 1.442695
        %v1781 = vpow.pop %v1780
        %v1782 = vmul.f32 %v1760, 1.442695
        %v1783 = vpow.pop %v1782
        %v1784 = vmul.f32 %v1761, 1.442695
        %v1785 = vpow.pop %v1784
        %v1786 = vmul.f32 %v1762, 1.442695
        %v1787 = vpow.pop %v1786
        %v1788 = vmul.f32 %v1763, 1.442695
        %v1789 = vpow.pop %v1788
        %v1790 = vmul.f32 %v1764, 1.442695
        %v1791 = vpow.pop %v1790
        %v1792 = vmul.f32 %v1765, 1.442695
        %v1793 = vpow.pop %v1792
        %v1794 = vmul.f32 %v1766, 1.442695
        %v1795 = vpow.pop %v1794
        %v1796 = vmul.f32 %v1767, 1.442695
        %v1797 = vpow.pop %v1796
        %v1798 = vmul.f32 %v1768, 1.442695
        %v1799 = vpow.pop %v1798
        %v1800 = vmul.f32 %v1769, 1.442695
        %v1801 = vpow.pop %v1800
        %1802 = vadd.xlane.f32.xlu0 %v1771
        %v1803 = vpop.xlane.xlu0 %1802
        %1804 = vadd.xlane.f32.xlu0 %v1773
        %v1805 = vpop.xlane.xlu0 %1804
        %1806 = vadd.xlane.f32.xlu0 %v1775
        %v1807 = vpop.xlane.xlu0 %1806
        %1808 = vadd.xlane.f32.xlu0 %v1777
        %v1809 = vpop.xlane.xlu0 %1808
        %1810 = vadd.xlane.f32.xlu0 %v1779
        %v1811 = vpop.xlane.xlu0 %1810
        %1812 = vadd.xlane.f32.xlu0 %v1781
        %v1813 = vpop.xlane.xlu0 %1812
        %1814 = vadd.xlane.f32.xlu0 %v1783
        %v1815 = vpop.xlane.xlu0 %1814
        %1816 = vadd.xlane.f32.xlu0 %v1785
        %v1817 = vpop.xlane.xlu0 %1816
        %1818 = vadd.xlane.f32.xlu0 %v1787
        %v1819 = vpop.xlane.xlu0 %1818
        %1820 = vadd.xlane.f32.xlu0 %v1789
        %v1821 = vpop.xlane.xlu0 %1820
        %1822 = vadd.xlane.f32.xlu0 %v1791
        %v1823 = vpop.xlane.xlu0 %1822
        %1824 = vadd.xlane.f32.xlu0 %v1793
        %v1825 = vpop.xlane.xlu0 %1824
        %1826 = vadd.xlane.f32.xlu0 %v1795
        %v1827 = vpop.xlane.xlu0 %1826
        %1828 = vadd.xlane.f32.xlu0 %v1797
        %v1829 = vpop.xlane.xlu0 %1828
        %1830 = vadd.xlane.f32.xlu0 %v1799
        %v1831 = vpop.xlane.xlu0 %1830
        %1832 = vadd.xlane.f32.xlu0 %v1801
        %v1833 = vpop.xlane.xlu0 %1832
        %v1834 = vrcp.pop %v1803
        %v1835 = vrcp.pop %v1805
        %v1836 = vrcp.pop %v1807
        %v1837 = vrcp.pop %v1809
        %v1838 = vrcp.pop %v1811
        %v1839 = vrcp.pop %v1813
        %v1840 = vrcp.pop %v1815
        %v1841 = vrcp.pop %v1817
        %v1842 = vrcp.pop %v1819
        %v1843 = vrcp.pop %v1821
        %v1844 = vrcp.pop %v1823
        %v1845 = vrcp.pop %v1825
        %v1846 = vrcp.pop %v1827
        %v1847 = vrcp.pop %v1829
        %v1848 = vrcp.pop %v1831
        %v1849 = vrcp.pop %v1833
        %v1850 = vmul.f32 %v1771, %v1834
        %v1851 = vmul.f32 %v1773, %v1835
        %v1852 = vmul.f32 %v1775, %v1836
        %v1853 = vmul.f32 %v1777, %v1837
        %v1854 = vmul.f32 %v1779, %v1838
        %v1855 = vmul.f32 %v1781, %v1839
        %v1856 = vmul.f32 %v1783, %v1840
        %v1857 = vmul.f32 %v1785, %v1841
        %v1858 = vmul.f32 %v1787, %v1842
        %v1859 = vmul.f32 %v1789, %v1843
        %v1860 = vmul.f32 %v1791, %v1844
        %v1861 = vmul.f32 %v1793, %v1845
        %v1862 = vmul.f32 %v1795, %v1846
        %v1863 = vmul.f32 %v1797, %v1847
        %v1864 = vmul.f32 %v1799, %v1848
        %v1865 = vmul.f32 %v1801, %v1849
        %v1866 = vpack.c.bf16 %v1851, %v1850
        %v1867 = vpack.c.bf16 %v1853, %v1852
        %v1868 = vpack.c.bf16 %v1855, %v1854
        %v1869 = vpack.c.bf16 %v1857, %v1856
        %v1870 = vpack.c.bf16 %v1859, %v1858
        %v1871 = vpack.c.bf16 %v1861, %v1860
        %v1872 = vpack.c.bf16 %v1863, %v1862
        %v1873 = vpack.c.bf16 %v1865, %v1864
        %1874 = vmatprep.subr.bf16.mxu0 0
        %1875 = vmatpush1.bf16.xpose.msra.mxu0 %v1866
        %1876 = vmatprep.subr.bf16.mxu0 0
        %1877 = vmatpush1.bf16.xpose.msra.mxu0 %v1867
        %1878 = vmatprep.subr.bf16.mxu0 0
        %1879 = vmatpush1.bf16.xpose.msra.mxu0 %v1868
        %1880 = vmatprep.subr.bf16.mxu0 0
        %1881 = vmatpush1.bf16.xpose.msra.mxu0 %v1869
        %1882 = vmatprep.subr.bf16.mxu0 0
        %1883 = vmatpush1.bf16.xpose.msra.mxu0 %v1870
        %1884 = vmatprep.subr.bf16.mxu0 0
        %1885 = vmatpush1.bf16.xpose.msra.mxu0 %v1871
        %1886 = vmatprep.subr.bf16.mxu0 0
        %1887 = vmatpush1.bf16.xpose.msra.mxu0 %v1872
        %1888 = vmatprep.subr.bf16.mxu0 0
        %1889 = vmatpush1.bf16.xpose.msra.mxu0 %v1873
        %1890 = vmatprep.subr.bf16.mxu0 0
        %1891 = vmatpush1.bf16.xpose.msra.mxu0 0
        %1892 = vmatprep.subr.bf16.mxu0 0
        %1893 = vmatpush1.bf16.xpose.msra.mxu0 0
        %1894 = vmatprep.subr.bf16.mxu0 0
        %1895 = vmatpush1.bf16.xpose.msra.mxu0 0
        %1896 = vmatprep.subr.bf16.mxu0 0
        %1897 = vmatpush1.bf16.xpose.msra.mxu0 0
        %1898 = vmatprep.subr.bf16.mxu0 0
        %1899 = vmatpush1.bf16.xpose.msra.mxu0 0
        %1900 = vmatprep.subr.bf16.mxu0 0
        %1901 = vmatpush1.bf16.xpose.msra.mxu0 0
        %1902 = vmatprep.subr.bf16.mxu0 0
        %1903 = vmatpush1.bf16.xpose.msra.mxu0 0
        %1904 = vmatprep.subr.bf16.mxu0 0
        %1905 = vmatpush1.bf16.xpose.msra.mxu0 0
        %1906 = vmatprep.mubr.bf16.mxu0 0
        %1907 = vmatmul.mubr.bf16.gmra.mrb[0].mxu0 %v1573
        %v1908 = vpop.f32.mrb[0].mxu0
        %v1909 = vadd.f32 0.0, %v1908
        %v1910 = vpop.f32.mrb[0].mxu0
        %v1911 = vpop.f32.mrb[0].mxu0
        %v1912 = vpop.f32.mrb[0].mxu0
        %1913 = vdwg.mxu0
        %v1914 = vpack.c.bf16 %v990, %v990
        %v1915 = vpack.c.bf16 %v1022, %v1022
        %1916 = vrot.lane.b32.xlu0 %v1244, 112
        %v1917 = vpop.permute.xlu0 %1916
        %1918 = vrot.lane.b32.xlu0 %v1245, 112
        %v1919 = vpop.permute.xlu0 %1918
        %1920 = vrot.lane.b32.xlu0 %v1246, 112
        %v1921 = vpop.permute.xlu0 %1920
        %1922 = vrot.lane.b32.xlu0 %v1247, 112
        %v1923 = vpop.permute.xlu0 %1922
        %1924 = vrot.lane.b32.xlu0 %v1248, 112
        %v1925 = vpop.permute.xlu0 %1924
        %1926 = vrot.lane.b32.xlu0 %v1249, 112
        %v1927 = vpop.permute.xlu0 %1926
        %1928 = vrot.lane.b32.xlu0 %v1250, 112
        %v1929 = vpop.permute.xlu0 %1928
        %1930 = vrot.lane.b32.xlu0 %v1251, 112
        %v1931 = vpop.permute.xlu0 %1930
        %v1933 = vsel %vm1254, %v1917, 0
        %v1936 = vsel %vm1254, %v1919, 0
        %v1939 = vsel %vm1254, %v1921, 0
        %v1942 = vsel %vm1254, %v1923, 0
        %v1945 = vsel %vm1254, %v1925, 0
        %v1948 = vsel %vm1254, %v1927, 0
        %v1951 = vsel %vm1254, %v1929, 0
        %v1954 = vsel %vm1254, %v1931, 0
        %v1957 = vsel %vm1279, %v1914, 0
        %1959 = vmatprep.subr.bf16.mxu0 0
        %1960 = vmatpush1.bf16.msra.mxu0 %v1957
        %1961 = vmatprep.subr.bf16.mxu0 0
        %1962 = vmatpush1.bf16.msra.mxu0 0
        %1963 = vmatprep.subr.bf16.mxu0 0
        %1964 = vmatpush1.bf16.msra.mxu0 0
        %1965 = vmatprep.subr.bf16.mxu0 0
        %1966 = vmatpush1.bf16.msra.mxu0 0
        %1967 = vmatprep.subr.bf16.mxu0 0
        %1968 = vmatpush1.bf16.msra.mxu0 0
        %1969 = vmatprep.subr.bf16.mxu0 0
        %1970 = vmatpush1.bf16.msra.mxu0 0
        %1971 = vmatprep.subr.bf16.mxu0 0
        %1972 = vmatpush1.bf16.msra.mxu0 0
        %1973 = vmatprep.subr.bf16.mxu0 0
        %1974 = vmatpush1.bf16.msra.mxu0 0
        %1975 = vmatprep.subr.bf16.mxu0 0
        %1976 = vmatpush1.bf16.msra.mxu0 0
        %1977 = vmatprep.subr.bf16.mxu0 0
        %1978 = vmatpush1.bf16.msra.mxu0 0
        %1979 = vmatprep.subr.bf16.mxu0 0
        %1980 = vmatpush1.bf16.msra.mxu0 0
        %1981 = vmatprep.subr.bf16.mxu0 0
        %1982 = vmatpush1.bf16.msra.mxu0 0
        %1983 = vmatprep.subr.bf16.mxu0 0
        %1984 = vmatpush1.bf16.msra.mxu0 0
        %1985 = vmatprep.subr.bf16.mxu0 0
        %1986 = vmatpush1.bf16.msra.mxu0 0
        %1987 = vmatprep.subr.bf16.mxu0 0
        %1988 = vmatpush1.bf16.msra.mxu0 0
        %1989 = vmatprep.subr.bf16.mxu0 0
        %1990 = vmatpush1.bf16.msra.mxu0 0
        %1991 = vmatprep.mubr.bf16.mxu0 0
        %1992 = vmatmul.mubr.bf16.gmra.mrb[0].mxu0 %v1933
        %v1993 = vpop.f32.mrb[0].mxu0
        %v1994 = vadd.f32 0.0, %v1993
        %v1995 = vpop.f32.mrb[0].mxu0
        %v1996 = vpop.f32.mrb[0].mxu0
        %v1997 = vadd.f32 0.0, %v1996
        %v1998 = vpop.f32.mrb[0].mxu0
        %1999 = vmatprep.mubr.bf16.mxu0 0
        %2000 = vmatmul.mubr.bf16.gmra.mrb[0].mxu0 %v1936
        %v2001 = vpop.f32.mrb[0].mxu0
        %v2002 = vadd.f32 0.0, %v2001
        %v2003 = vpop.f32.mrb[0].mxu0
        %v2004 = vpop.f32.mrb[0].mxu0
        %v2005 = vadd.f32 0.0, %v2004
        %v2006 = vpop.f32.mrb[0].mxu0
        %2007 = vmatprep.mubr.bf16.mxu0 0
        %2008 = vmatmul.mubr.bf16.gmra.mrb[0].mxu0 %v1939
        %v2009 = vpop.f32.mrb[0].mxu0
        %v2010 = vadd.f32 0.0, %v2009
        %v2011 = vpop.f32.mrb[0].mxu0
        %v2012 = vpop.f32.mrb[0].mxu0
        %v2013 = vadd.f32 0.0, %v2012
        %v2014 = vpop.f32.mrb[0].mxu0
        %2015 = vmatprep.mubr.bf16.mxu0 0
        %2016 = vmatmul.mubr.bf16.gmra.mrb[0].mxu0 %v1942
        %v2017 = vpop.f32.mrb[0].mxu0
        %v2018 = vadd.f32 0.0, %v2017
        %v2019 = vpop.f32.mrb[0].mxu0
        %v2020 = vpop.f32.mrb[0].mxu0
        %v2021 = vadd.f32 0.0, %v2020
        %v2022 = vpop.f32.mrb[0].mxu0
        %2023 = vmatprep.mubr.bf16.mxu0 0
        %2024 = vmatmul.mubr.bf16.gmra.mrb[0].mxu0 %v1945
        %v2025 = vpop.f32.mrb[0].mxu0
        %v2026 = vadd.f32 0.0, %v2025
        %v2027 = vpop.f32.mrb[0].mxu0
        %v2028 = vpop.f32.mrb[0].mxu0
        %v2029 = vadd.f32 0.0, %v2028
        %v2030 = vpop.f32.mrb[0].mxu0
        %2031 = vmatprep.mubr.bf16.mxu0 0
        %2032 = vmatmul.mubr.bf16.gmra.mrb[0].mxu0 %v1948
        %v2033 = vpop.f32.mrb[0].mxu0
        %v2034 = vadd.f32 0.0, %v2033
        %v2035 = vpop.f32.mrb[0].mxu0
        %v2036 = vpop.f32.mrb[0].mxu0
        %v2037 = vadd.f32 0.0, %v2036
        %v2038 = vpop.f32.mrb[0].mxu0
        %2039 = vmatprep.mubr.bf16.mxu0 0
        %2040 = vmatmul.mubr.bf16.gmra.mrb[0].mxu0 %v1951
        %v2041 = vpop.f32.mrb[0].mxu0
        %v2042 = vadd.f32 0.0, %v2041
        %v2043 = vpop.f32.mrb[0].mxu0
        %v2044 = vpop.f32.mrb[0].mxu0
        %v2045 = vadd.f32 0.0, %v2044
        %v2046 = vpop.f32.mrb[0].mxu0
        %2047 = vmatprep.mubr.bf16.mxu0 0
        %2048 = vmatmul.mubr.bf16.gmra.mrb[0].mxu0 %v1954
        %v2049 = vpop.f32.mrb[0].mxu0
        %v2050 = vadd.f32 0.0, %v2049
        %v2051 = vpop.f32.mrb[0].mxu0
        %v2052 = vpop.f32.mrb[0].mxu0
        %v2053 = vadd.f32 0.0, %v2052
        %v2054 = vpop.f32.mrb[0].mxu0
        %2055 = vdwg.mxu0
        %2056 = vmax.xlane.f32.xlu0 %v1994
        %v2057 = vpop.xlane.xlu0 %2056
        %2058 = vmax.xlane.f32.xlu0 %v1997
        %v2059 = vpop.xlane.xlu0 %2058
        %2060 = vmax.xlane.f32.xlu0 %v2002
        %v2061 = vpop.xlane.xlu0 %2060
        %2062 = vmax.xlane.f32.xlu0 %v2005
        %v2063 = vpop.xlane.xlu0 %2062
        %2064 = vmax.xlane.f32.xlu0 %v2010
        %v2065 = vpop.xlane.xlu0 %2064
        %2066 = vmax.xlane.f32.xlu0 %v2013
        %v2067 = vpop.xlane.xlu0 %2066
        %2068 = vmax.xlane.f32.xlu0 %v2018
        %v2069 = vpop.xlane.xlu0 %2068
        %2070 = vmax.xlane.f32.xlu0 %v2021
        %v2071 = vpop.xlane.xlu0 %2070
        %2072 = vmax.xlane.f32.xlu0 %v2026
        %v2073 = vpop.xlane.xlu0 %2072
        %2074 = vmax.xlane.f32.xlu0 %v2029
        %v2075 = vpop.xlane.xlu0 %2074
        %2076 = vmax.xlane.f32.xlu0 %v2034
        %v2077 = vpop.xlane.xlu0 %2076
        %2078 = vmax.xlane.f32.xlu0 %v2037
        %v2079 = vpop.xlane.xlu0 %2078
        %2080 = vmax.xlane.f32.xlu0 %v2042
        %v2081 = vpop.xlane.xlu0 %2080
        %2082 = vmax.xlane.f32.xlu0 %v2045
        %v2083 = vpop.xlane.xlu0 %2082
        %2084 = vmax.xlane.f32.xlu0 %v2050
        %v2085 = vpop.xlane.xlu0 %2084
        %2086 = vmax.xlane.f32.xlu0 %v2053
        %v2087 = vpop.xlane.xlu0 %2086
        %v2088 = vsub.f32 %v1994, %v2057
        %v2089 = vsub.f32 %v1997, %v2059
        %v2090 = vsub.f32 %v2002, %v2061
        %v2091 = vsub.f32 %v2005, %v2063
        %v2092 = vsub.f32 %v2010, %v2065
        %v2093 = vsub.f32 %v2013, %v2067
        %v2094 = vsub.f32 %v2018, %v2069
        %v2095 = vsub.f32 %v2021, %v2071
        %v2096 = vsub.f32 %v2026, %v2073
        %v2097 = vsub.f32 %v2029, %v2075
        %v2098 = vsub.f32 %v2034, %v2077
        %v2099 = vsub.f32 %v2037, %v2079
        %v2100 = vsub.f32 %v2042, %v2081
        %v2101 = vsub.f32 %v2045, %v2083
        %v2102 = vsub.f32 %v2050, %v2085
        %v2103 = vsub.f32 %v2053, %v2087
        %v2104 = vmul.f32 %v2088, 1.442695
        %v2105 = vpow.pop %v2104
        %v2106 = vmul.f32 %v2089, 1.442695
        %v2107 = vpow.pop %v2106
        %v2108 = vmul.f32 %v2090, 1.442695
        %v2109 = vpow.pop %v2108
        %v2110 = vmul.f32 %v2091, 1.442695
        %v2111 = vpow.pop %v2110
        %v2112 = vmul.f32 %v2092, 1.442695
        %v2113 = vpow.pop %v2112
        %v2114 = vmul.f32 %v2093, 1.442695
        %v2115 = vpow.pop %v2114
        %v2116 = vmul.f32 %v2094, 1.442695
        %v2117 = vpow.pop %v2116
        %v2118 = vmul.f32 %v2095, 1.442695
        %v2119 = vpow.pop %v2118
        %v2120 = vmul.f32 %v2096, 1.442695
        %v2121 = vpow.pop %v2120
        %v2122 = vmul.f32 %v2097, 1.442695
        %v2123 = vpow.pop %v2122
        %v2124 = vmul.f32 %v2098, 1.442695
        %v2125 = vpow.pop %v2124
        %v2126 = vmul.f32 %v2099, 1.442695
        %v2127 = vpow.pop %v2126
        %v2128 = vmul.f32 %v2100, 1.442695
        %v2129 = vpow.pop %v2128
        %v2130 = vmul.f32 %v2101, 1.442695
        %v2131 = vpow.pop %v2130
        %v2132 = vmul.f32 %v2102, 1.442695
        %v2133 = vpow.pop %v2132
        %v2134 = vmul.f32 %v2103, 1.442695
        %v2135 = vpow.pop %v2134
        %2136 = vadd.xlane.f32.xlu0 %v2105
        %v2137 = vpop.xlane.xlu0 %2136
        %2138 = vadd.xlane.f32.xlu0 %v2107
        %v2139 = vpop.xlane.xlu0 %2138
        %2140 = vadd.xlane.f32.xlu0 %v2109
        %v2141 = vpop.xlane.xlu0 %2140
        %2142 = vadd.xlane.f32.xlu0 %v2111
        %v2143 = vpop.xlane.xlu0 %2142
        %2144 = vadd.xlane.f32.xlu0 %v2113
        %v2145 = vpop.xlane.xlu0 %2144
        %2146 = vadd.xlane.f32.xlu0 %v2115
        %v2147 = vpop.xlane.xlu0 %2146
        %2148 = vadd.xlane.f32.xlu0 %v2117
        %v2149 = vpop.xlane.xlu0 %2148
        %2150 = vadd.xlane.f32.xlu0 %v2119
        %v2151 = vpop.xlane.xlu0 %2150
        %2152 = vadd.xlane.f32.xlu0 %v2121
        %v2153 = vpop.xlane.xlu0 %2152
        %2154 = vadd.xlane.f32.xlu0 %v2123
        %v2155 = vpop.xlane.xlu0 %2154
        %2156 = vadd.xlane.f32.xlu0 %v2125
        %v2157 = vpop.xlane.xlu0 %2156
        %2158 = vadd.xlane.f32.xlu0 %v2127
        %v2159 = vpop.xlane.xlu0 %2158
        %2160 = vadd.xlane.f32.xlu0 %v2129
        %v2161 = vpop.xlane.xlu0 %2160
        %2162 = vadd.xlane.f32.xlu0 %v2131
        %v2163 = vpop.xlane.xlu0 %2162
        %2164 = vadd.xlane.f32.xlu0 %v2133
        %v2165 = vpop.xlane.xlu0 %2164
        %2166 = vadd.xlane.f32.xlu0 %v2135
        %v2167 = vpop.xlane.xlu0 %2166
        %v2168 = vrcp.pop %v2137
        %v2169 = vrcp.pop %v2139
        %v2170 = vrcp.pop %v2141
        %v2171 = vrcp.pop %v2143
        %v2172 = vrcp.pop %v2145
        %v2173 = vrcp.pop %v2147
        %v2174 = vrcp.pop %v2149
        %v2175 = vrcp.pop %v2151
        %v2176 = vrcp.pop %v2153
        %v2177 = vrcp.pop %v2155
        %v2178 = vrcp.pop %v2157
        %v2179 = vrcp.pop %v2159
        %v2180 = vrcp.pop %v2161
        %v2181 = vrcp.pop %v2163
        %v2182 = vrcp.pop %v2165
        %v2183 = vrcp.pop %v2167
        %v2184 = vmul.f32 %v2105, %v2168
        %v2185 = vmul.f32 %v2107, %v2169
        %v2186 = vmul.f32 %v2109, %v2170
        %v2187 = vmul.f32 %v2111, %v2171
        %v2188 = vmul.f32 %v2113, %v2172
        %v2189 = vmul.f32 %v2115, %v2173
        %v2190 = vmul.f32 %v2117, %v2174
        %v2191 = vmul.f32 %v2119, %v2175
        %v2192 = vmul.f32 %v2121, %v2176
        %v2193 = vmul.f32 %v2123, %v2177
        %v2194 = vmul.f32 %v2125, %v2178
        %v2195 = vmul.f32 %v2127, %v2179
        %v2196 = vmul.f32 %v2129, %v2180
        %v2197 = vmul.f32 %v2131, %v2181
        %v2198 = vmul.f32 %v2133, %v2182
        %v2199 = vmul.f32 %v2135, %v2183
        %v2200 = vpack.c.bf16 %v2185, %v2184
        %v2201 = vpack.c.bf16 %v2187, %v2186
        %v2202 = vpack.c.bf16 %v2189, %v2188
        %v2203 = vpack.c.bf16 %v2191, %v2190
        %v2204 = vpack.c.bf16 %v2193, %v2192
        %v2205 = vpack.c.bf16 %v2195, %v2194
        %v2206 = vpack.c.bf16 %v2197, %v2196
        %v2207 = vpack.c.bf16 %v2199, %v2198
        %2208 = vmatprep.subr.bf16.mxu0 0
        %2209 = vmatpush1.bf16.xpose.msra.mxu0 %v2200
        %2210 = vmatprep.subr.bf16.mxu0 0
        %2211 = vmatpush1.bf16.xpose.msra.mxu0 %v2201
        %2212 = vmatprep.subr.bf16.mxu0 0
        %2213 = vmatpush1.bf16.xpose.msra.mxu0 %v2202
        %2214 = vmatprep.subr.bf16.mxu0 0
        %2215 = vmatpush1.bf16.xpose.msra.mxu0 %v2203
        %2216 = vmatprep.subr.bf16.mxu0 0
        %2217 = vmatpush1.bf16.xpose.msra.mxu0 %v2204
        %2218 = vmatprep.subr.bf16.mxu0 0
        %2219 = vmatpush1.bf16.xpose.msra.mxu0 %v2205
        %2220 = vmatprep.subr.bf16.mxu0 0
        %2221 = vmatpush1.bf16.xpose.msra.mxu0 %v2206
        %2222 = vmatprep.subr.bf16.mxu0 0
        %2223 = vmatpush1.bf16.xpose.msra.mxu0 %v2207
        %2224 = vmatprep.subr.bf16.mxu0 0
        %2225 = vmatpush1.bf16.xpose.msra.mxu0 0
        %2226 = vmatprep.subr.bf16.mxu0 0
        %2227 = vmatpush1.bf16.xpose.msra.mxu0 0
        %2228 = vmatprep.subr.bf16.mxu0 0
        %2229 = vmatpush1.bf16.xpose.msra.mxu0 0
        %2230 = vmatprep.subr.bf16.mxu0 0
        %2231 = vmatpush1.bf16.xpose.msra.mxu0 0
        %2232 = vmatprep.subr.bf16.mxu0 0
        %2233 = vmatpush1.bf16.xpose.msra.mxu0 0
        %2234 = vmatprep.subr.bf16.mxu0 0
        %2235 = vmatpush1.bf16.xpose.msra.mxu0 0
        %2236 = vmatprep.subr.bf16.mxu0 0
        %2237 = vmatpush1.bf16.xpose.msra.mxu0 0
        %2238 = vmatprep.subr.bf16.mxu0 0
        %2239 = vmatpush1.bf16.xpose.msra.mxu0 0
        %2240 = vmatprep.mubr.bf16.mxu0 0
        %2241 = vmatmul.mubr.bf16.gmra.mrb[0].mxu0 %v1915
        %v2242 = vpop.f32.mrb[0].mxu0
        %v2243 = vadd.f32 0.0, %v2242
        %v2244 = vpop.f32.mrb[0].mxu0
        %v2245 = vpop.f32.mrb[0].mxu0
        %v2246 = vpop.f32.mrb[0].mxu0
        %2247 = vdwg.mxu0
        %v2248 = vpack.c.bf16 %v993, %v993
        %v2249 = vpack.c.bf16 %v1025, %v1025
        %2250 = vrot.lane.b32.xlu0 %v1244, 104
        %v2251 = vpop.permute.xlu0 %2250
        %2252 = vrot.lane.b32.xlu0 %v1245, 104
        %v2253 = vpop.permute.xlu0 %2252
        %2254 = vrot.lane.b32.xlu0 %v1246, 104
        %v2255 = vpop.permute.xlu0 %2254
        %2256 = vrot.lane.b32.xlu0 %v1247, 104
        %v2257 = vpop.permute.xlu0 %2256
        %2258 = vrot.lane.b32.xlu0 %v1248, 104
        %v2259 = vpop.permute.xlu0 %2258
        %2260 = vrot.lane.b32.xlu0 %v1249, 104
        %v2261 = vpop.permute.xlu0 %2260
        %2262 = vrot.lane.b32.xlu0 %v1250, 104
        %v2263 = vpop.permute.xlu0 %2262
        %2264 = vrot.lane.b32.xlu0 %v1251, 104
        %v2265 = vpop.permute.xlu0 %2264
        %v2267 = vsel %vm1254, %v2251, 0
        %v2270 = vsel %vm1254, %v2253, 0
        %v2273 = vsel %vm1254, %v2255, 0
        %v2276 = vsel %vm1254, %v2257, 0
        %v2279 = vsel %vm1254, %v2259, 0
        %v2282 = vsel %vm1254, %v2261, 0
        %v2285 = vsel %vm1254, %v2263, 0
        %v2288 = vsel %vm1254, %v2265, 0
        %v2291 = vsel %vm1279, %v2248, 0
        %2293 = vmatprep.subr.bf16.mxu0 0
        %2294 = vmatpush1.bf16.msra.mxu0 %v2291
        %2295 = vmatprep.subr.bf16.mxu0 0
        %2296 = vmatpush1.bf16.msra.mxu0 0
        %2297 = vmatprep.subr.bf16.mxu0 0
        %2298 = vmatpush1.bf16.msra.mxu0 0
        %2299 = vmatprep.subr.bf16.mxu0 0
        %2300 = vmatpush1.bf16.msra.mxu0 0
        %2301 = vmatprep.subr.bf16.mxu0 0
        %2302 = vmatpush1.bf16.msra.mxu0 0
        %2303 = vmatprep.subr.bf16.mxu0 0
        %2304 = vmatpush1.bf16.msra.mxu0 0
        %2305 = vmatprep.subr.bf16.mxu0 0
        %2306 = vmatpush1.bf16.msra.mxu0 0
        %2307 = vmatprep.subr.bf16.mxu0 0
        %2308 = vmatpush1.bf16.msra.mxu0 0
        %2309 = vmatprep.subr.bf16.mxu0 0
        %2310 = vmatpush1.bf16.msra.mxu0 0
        %2311 = vmatprep.subr.bf16.mxu0 0
        %2312 = vmatpush1.bf16.msra.mxu0 0
        %2313 = vmatprep.subr.bf16.mxu0 0
        %2314 = vmatpush1.bf16.msra.mxu0 0
        %2315 = vmatprep.subr.bf16.mxu0 0
        %2316 = vmatpush1.bf16.msra.mxu0 0
        %2317 = vmatprep.subr.bf16.mxu0 0
        %2318 = vmatpush1.bf16.msra.mxu0 0
        %2319 = vmatprep.subr.bf16.mxu0 0
        %2320 = vmatpush1.bf16.msra.mxu0 0
        %2321 = vmatprep.subr.bf16.mxu0 0
        %2322 = vmatpush1.bf16.msra.mxu0 0
        %2323 = vmatprep.subr.bf16.mxu0 0
        %2324 = vmatpush1.bf16.msra.mxu0 0
        %2325 = vmatprep.mubr.bf16.mxu0 0
        %2326 = vmatmul.mubr.bf16.gmra.mrb[0].mxu0 %v2267
        %v2327 = vpop.f32.mrb[0].mxu0
        %v2328 = vadd.f32 0.0, %v2327
        %v2329 = vpop.f32.mrb[0].mxu0
        %v2330 = vpop.f32.mrb[0].mxu0
        %v2331 = vadd.f32 0.0, %v2330
        %v2332 = vpop.f32.mrb[0].mxu0
        %2333 = vmatprep.mubr.bf16.mxu0 0
        %2334 = vmatmul.mubr.bf16.gmra.mrb[0].mxu0 %v2270
        %v2335 = vpop.f32.mrb[0].mxu0
        %v2336 = vadd.f32 0.0, %v2335
        %v2337 = vpop.f32.mrb[0].mxu0
        %v2338 = vpop.f32.mrb[0].mxu0
        %v2339 = vadd.f32 0.0, %v2338
        %v2340 = vpop.f32.mrb[0].mxu0
        %2341 = vmatprep.mubr.bf16.mxu0 0
        %2342 = vmatmul.mubr.bf16.gmra.mrb[0].mxu0 %v2273
        %v2343 = vpop.f32.mrb[0].mxu0
        %v2344 = vadd.f32 0.0, %v2343
        %v2345 = vpop.f32.mrb[0].mxu0
        %v2346 = vpop.f32.mrb[0].mxu0
        %v2347 = vadd.f32 0.0, %v2346
        %v2348 = vpop.f32.mrb[0].mxu0
        %2349 = vmatprep.mubr.bf16.mxu0 0
        %2350 = vmatmul.mubr.bf16.gmra.mrb[0].mxu0 %v2276
        %v2351 = vpop.f32.mrb[0].mxu0
        %v2352 = vadd.f32 0.0, %v2351
        %v2353 = vpop.f32.mrb[0].mxu0
        %v2354 = vpop.f32.mrb[0].mxu0
        %v2355 = vadd.f32 0.0, %v2354
        %v2356 = vpop.f32.mrb[0].mxu0
        %2357 = vmatprep.mubr.bf16.mxu0 0
        %2358 = vmatmul.mubr.bf16.gmra.mrb[0].mxu0 %v2279
        %v2359 = vpop.f32.mrb[0].mxu0
        %v2360 = vadd.f32 0.0, %v2359
        %v2361 = vpop.f32.mrb[0].mxu0
        %v2362 = vpop.f32.mrb[0].mxu0
        %v2363 = vadd.f32 0.0, %v2362
        %v2364 = vpop.f32.mrb[0].mxu0
        %2365 = vmatprep.mubr.bf16.mxu0 0
        %2366 = vmatmul.mubr.bf16.gmra.mrb[0].mxu0 %v2282
        %v2367 = vpop.f32.mrb[0].mxu0
        %v2368 = vadd.f32 0.0, %v2367
        %v2369 = vpop.f32.mrb[0].mxu0
        %v2370 = vpop.f32.mrb[0].mxu0
        %v2371 = vadd.f32 0.0, %v2370
        %v2372 = vpop.f32.mrb[0].mxu0
        %2373 = vmatprep.mubr.bf16.mxu0 0
        %2374 = vmatmul.mubr.bf16.gmra.mrb[0].mxu0 %v2285
        %v2375 = vpop.f32.mrb[0].mxu0
        %v2376 = vadd.f32 0.0, %v2375
        %v2377 = vpop.f32.mrb[0].mxu0
        %v2378 = vpop.f32.mrb[0].mxu0
        %v2379 = vadd.f32 0.0, %v2378
        %v2380 = vpop.f32.mrb[0].mxu0
        %2381 = vmatprep.mubr.bf16.mxu0 0
        %2382 = vmatmul.mubr.bf16.gmra.mrb[0].mxu0 %v2288
        %v2383 = vpop.f32.mrb[0].mxu0
        %v2384 = vadd.f32 0.0, %v2383
        %v2385 = vpop.f32.mrb[0].mxu0
        %v2386 = vpop.f32.mrb[0].mxu0
        %v2387 = vadd.f32 0.0, %v2386
        %v2388 = vpop.f32.mrb[0].mxu0
        %2389 = vdwg.mxu0
        %2390 = vmax.xlane.f32.xlu0 %v2328
        %v2391 = vpop.xlane.xlu0 %2390
        %2392 = vmax.xlane.f32.xlu0 %v2331
        %v2393 = vpop.xlane.xlu0 %2392
        %2394 = vmax.xlane.f32.xlu0 %v2336
        %v2395 = vpop.xlane.xlu0 %2394
        %2396 = vmax.xlane.f32.xlu0 %v2339
        %v2397 = vpop.xlane.xlu0 %2396
        %2398 = vmax.xlane.f32.xlu0 %v2344
        %v2399 = vpop.xlane.xlu0 %2398
        %2400 = vmax.xlane.f32.xlu0 %v2347
        %v2401 = vpop.xlane.xlu0 %2400
        %2402 = vmax.xlane.f32.xlu0 %v2352
        %v2403 = vpop.xlane.xlu0 %2402
        %2404 = vmax.xlane.f32.xlu0 %v2355
        %v2405 = vpop.xlane.xlu0 %2404
        %2406 = vmax.xlane.f32.xlu0 %v2360
        %v2407 = vpop.xlane.xlu0 %2406
        %2408 = vmax.xlane.f32.xlu0 %v2363
        %v2409 = vpop.xlane.xlu0 %2408
        %2410 = vmax.xlane.f32.xlu0 %v2368
        %v2411 = vpop.xlane.xlu0 %2410
        %2412 = vmax.xlane.f32.xlu0 %v2371
        %v2413 = vpop.xlane.xlu0 %2412
        %2414 = vmax.xlane.f32.xlu0 %v2376
        %v2415 = vpop.xlane.xlu0 %2414
        %2416 = vmax.xlane.f32.xlu0 %v2379
        %v2417 = vpop.xlane.xlu0 %2416
        %2418 = vmax.xlane.f32.xlu0 %v2384
        %v2419 = vpop.xlane.xlu0 %2418
        %2420 = vmax.xlane.f32.xlu0 %v2387
        %v2421 = vpop.xlane.xlu0 %2420
        %v2422 = vsub.f32 %v2328, %v2391
        %v2423 = vsub.f32 %v2331, %v2393
        %v2424 = vsub.f32 %v2336, %v2395
        %v2425 = vsub.f32 %v2339, %v2397
        %v2426 = vsub.f32 %v2344, %v2399
        %v2427 = vsub.f32 %v2347, %v2401
        %v2428 = vsub.f32 %v2352, %v2403
        %v2429 = vsub.f32 %v2355, %v2405
        %v2430 = vsub.f32 %v2360, %v2407
        %v2431 = vsub.f32 %v2363, %v2409
        %v2432 = vsub.f32 %v2368, %v2411
        %v2433 = vsub.f32 %v2371, %v2413
        %v2434 = vsub.f32 %v2376, %v2415
        %v2435 = vsub.f32 %v2379, %v2417
        %v2436 = vsub.f32 %v2384, %v2419
        %v2437 = vsub.f32 %v2387, %v2421
        %v2438 = vmul.f32 %v2422, 1.442695
        %v2439 = vpow.pop %v2438
        %v2440 = vmul.f32 %v2423, 1.442695
        %v2441 = vpow.pop %v2440
        %v2442 = vmul.f32 %v2424, 1.442695
        %v2443 = vpow.pop %v2442
        %v2444 = vmul.f32 %v2425, 1.442695
        %v2445 = vpow.pop %v2444
        %v2446 = vmul.f32 %v2426, 1.442695
        %v2447 = vpow.pop %v2446
        %v2448 = vmul.f32 %v2427, 1.442695
        %v2449 = vpow.pop %v2448
        %v2450 = vmul.f32 %v2428, 1.442695
        %v2451 = vpow.pop %v2450
        %v2452 = vmul.f32 %v2429, 1.442695
        %v2453 = vpow.pop %v2452
        %v2454 = vmul.f32 %v2430, 1.442695
        %v2455 = vpow.pop %v2454
        %v2456 = vmul.f32 %v2431, 1.442695
        %v2457 = vpow.pop %v2456
        %v2458 = vmul.f32 %v2432, 1.442695
        %v2459 = vpow.pop %v2458
        %v2460 = vmul.f32 %v2433, 1.442695
        %v2461 = vpow.pop %v2460
        %v2462 = vmul.f32 %v2434, 1.442695
        %v2463 = vpow.pop %v2462
        %v2464 = vmul.f32 %v2435, 1.442695
        %v2465 = vpow.pop %v2464
        %v2466 = vmul.f32 %v2436, 1.442695
        %v2467 = vpow.pop %v2466
        %v2468 = vmul.f32 %v2437, 1.442695
        %v2469 = vpow.pop %v2468
        %2470 = vadd.xlane.f32.xlu0 %v2439
        %v2471 = vpop.xlane.xlu0 %2470
        %2472 = vadd.xlane.f32.xlu0 %v2441
        %v2473 = vpop.xlane.xlu0 %2472
        %2474 = vadd.xlane.f32.xlu0 %v2443
        %v2475 = vpop.xlane.xlu0 %2474
        %2476 = vadd.xlane.f32.xlu0 %v2445
        %v2477 = vpop.xlane.xlu0 %2476
        %2478 = vadd.xlane.f32.xlu0 %v2447
        %v2479 = vpop.xlane.xlu0 %2478
        %2480 = vadd.xlane.f32.xlu0 %v2449
        %v2481 = vpop.xlane.xlu0 %2480
        %2482 = vadd.xlane.f32.xlu0 %v2451
        %v2483 = vpop.xlane.xlu0 %2482
        %2484 = vadd.xlane.f32.xlu0 %v2453
        %v2485 = vpop.xlane.xlu0 %2484
        %2486 = vadd.xlane.f32.xlu0 %v2455
        %v2487 = vpop.xlane.xlu0 %2486
        %2488 = vadd.xlane.f32.xlu0 %v2457
        %v2489 = vpop.xlane.xlu0 %2488
        %2490 = vadd.xlane.f32.xlu0 %v2459
        %v2491 = vpop.xlane.xlu0 %2490
        %2492 = vadd.xlane.f32.xlu0 %v2461
        %v2493 = vpop.xlane.xlu0 %2492
        %2494 = vadd.xlane.f32.xlu0 %v2463
        %v2495 = vpop.xlane.xlu0 %2494
        %2496 = vadd.xlane.f32.xlu0 %v2465
        %v2497 = vpop.xlane.xlu0 %2496
        %2498 = vadd.xlane.f32.xlu0 %v2467
        %v2499 = vpop.xlane.xlu0 %2498
        %2500 = vadd.xlane.f32.xlu0 %v2469
        %v2501 = vpop.xlane.xlu0 %2500
        %v2502 = vrcp.pop %v2471
        %v2503 = vrcp.pop %v2473
        %v2504 = vrcp.pop %v2475
        %v2505 = vrcp.pop %v2477
        %v2506 = vrcp.pop %v2479
        %v2507 = vrcp.pop %v2481
        %v2508 = vrcp.pop %v2483
        %v2509 = vrcp.pop %v2485
        %v2510 = vrcp.pop %v2487
        %v2511 = vrcp.pop %v2489
        %v2512 = vrcp.pop %v2491
        %v2513 = vrcp.pop %v2493
        %v2514 = vrcp.pop %v2495
        %v2515 = vrcp.pop %v2497
        %v2516 = vrcp.pop %v2499
        %v2517 = vrcp.pop %v2501
        %v2518 = vmul.f32 %v2439, %v2502
        %v2519 = vmul.f32 %v2441, %v2503
        %v2520 = vmul.f32 %v2443, %v2504
        %v2521 = vmul.f32 %v2445, %v2505
        %v2522 = vmul.f32 %v2447, %v2506
        %v2523 = vmul.f32 %v2449, %v2507
        %v2524 = vmul.f32 %v2451, %v2508
        %v2525 = vmul.f32 %v2453, %v2509
        %v2526 = vmul.f32 %v2455, %v2510
        %v2527 = vmul.f32 %v2457, %v2511
        %v2528 = vmul.f32 %v2459, %v2512
        %v2529 = vmul.f32 %v2461, %v2513
        %v2530 = vmul.f32 %v2463, %v2514
        %v2531 = vmul.f32 %v2465, %v2515
        %v2532 = vmul.f32 %v2467, %v2516
        %v2533 = vmul.f32 %v2469, %v2517
        %v2534 = vpack.c.bf16 %v2519, %v2518
        %v2535 = vpack.c.bf16 %v2521, %v2520
        %v2536 = vpack.c.bf16 %v2523, %v2522
        %v2537 = vpack.c.bf16 %v2525, %v2524
        %v2538 = vpack.c.bf16 %v2527, %v2526
        %v2539 = vpack.c.bf16 %v2529, %v2528
        %v2540 = vpack.c.bf16 %v2531, %v2530
        %v2541 = vpack.c.bf16 %v2533, %v2532
        %2542 = vmatprep.subr.bf16.mxu0 0
        %2543 = vmatpush1.bf16.xpose.msra.mxu0 %v2534
        %2544 = vmatprep.subr.bf16.mxu0 0
        %2545 = vmatpush1.bf16.xpose.msra.mxu0 %v2535
        %2546 = vmatprep.subr.bf16.mxu0 0
        %2547 = vmatpush1.bf16.xpose.msra.mxu0 %v2536
        %2548 = vmatprep.subr.bf16.mxu0 0
        %2549 = vmatpush1.bf16.xpose.msra.mxu0 %v2537
        %2550 = vmatprep.subr.bf16.mxu0 0
        %2551 = vmatpush1.bf16.xpose.msra.mxu0 %v2538
        %2552 = vmatprep.subr.bf16.mxu0 0
        %2553 = vmatpush1.bf16.xpose.msra.mxu0 %v2539
        %2554 = vmatprep.subr.bf16.mxu0 0
        %2555 = vmatpush1.bf16.xpose.msra.mxu0 %v2540
        %2556 = vmatprep.subr.bf16.mxu0 0
        %2557 = vmatpush1.bf16.xpose.msra.mxu0 %v2541
        %2558 = vmatprep.subr.bf16.mxu0 0
        %2559 = vmatpush1.bf16.xpose.msra.mxu0 0
        %2560 = vmatprep.subr.bf16.mxu0 0
        %2561 = vmatpush1.bf16.xpose.msra.mxu0 0
        %2562 = vmatprep.subr.bf16.mxu0 0
        %2563 = vmatpush1.bf16.xpose.msra.mxu0 0
        %2564 = vmatprep.subr.bf16.mxu0 0
        %2565 = vmatpush1.bf16.xpose.msra.mxu0 0
        %2566 = vmatprep.subr.bf16.mxu0 0
        %2567 = vmatpush1.bf16.xpose.msra.mxu0 0
        %2568 = vmatprep.subr.bf16.mxu0 0
        %2569 = vmatpush1.bf16.xpose.msra.mxu0 0
        %2570 = vmatprep.subr.bf16.mxu0 0
        %2571 = vmatpush1.bf16.xpose.msra.mxu0 0
        %2572 = vmatprep.subr.bf16.mxu0 0
        %2573 = vmatpush1.bf16.xpose.msra.mxu0 0
        %2574 = vmatprep.mubr.bf16.mxu0 0
        %2575 = vmatmul.mubr.bf16.gmra.mrb[0].mxu0 %v2249
        %v2576 = vpop.f32.mrb[0].mxu0
        %v2577 = vadd.f32 0.0, %v2576
        %v2578 = vpop.f32.mrb[0].mxu0
        %v2579 = vpop.f32.mrb[0].mxu0
        %v2580 = vpop.f32.mrb[0].mxu0
        %2581 = vdwg.mxu0
        %v2582 = vpack.c.bf16 %v998, %v998
        %v2583 = vpack.c.bf16 %v1030, %v1030
        %2584 = vrot.lane.b32.xlu0 %v1244, 96
        %v2585 = vpop.permute.xlu0 %2584
        %2586 = vrot.lane.b32.xlu0 %v1245, 96
        %v2587 = vpop.permute.xlu0 %2586
        %2588 = vrot.lane.b32.xlu0 %v1246, 96
        %v2589 = vpop.permute.xlu0 %2588
        %2590 = vrot.lane.b32.xlu0 %v1247, 96
        %v2591 = vpop.permute.xlu0 %2590
        %2592 = vrot.lane.b32.xlu0 %v1248, 96
        %v2593 = vpop.permute.xlu0 %2592
        %2594 = vrot.lane.b32.xlu0 %v1249, 96
        %v2595 = vpop.permute.xlu0 %2594
        %2596 = vrot.lane.b32.xlu0 %v1250, 96
        %v2597 = vpop.permute.xlu0 %2596
        %2598 = vrot.lane.b32.xlu0 %v1251, 96
        %v2599 = vpop.permute.xlu0 %2598
        %v2601 = vsel %vm1254, %v2585, 0
        %v2604 = vsel %vm1254, %v2587, 0
        %v2607 = vsel %vm1254, %v2589, 0
        %v2610 = vsel %vm1254, %v2591, 0
        %v2613 = vsel %vm1254, %v2593, 0
        %v2616 = vsel %vm1254, %v2595, 0
        %v2619 = vsel %vm1254, %v2597, 0
        %v2622 = vsel %vm1254, %v2599, 0
        %v2625 = vsel %vm1279, %v2582, 0
        %2627 = vmatprep.subr.bf16.mxu0 0
        %2628 = vmatpush1.bf16.msra.mxu0 %v2625
        %2629 = vmatprep.subr.bf16.mxu0 0
        %2630 = vmatpush1.bf16.msra.mxu0 0
        %2631 = vmatprep.subr.bf16.mxu0 0
        %2632 = vmatpush1.bf16.msra.mxu0 0
        %2633 = vmatprep.subr.bf16.mxu0 0
        %2634 = vmatpush1.bf16.msra.mxu0 0
        %2635 = vmatprep.subr.bf16.mxu0 0
        %2636 = vmatpush1.bf16.msra.mxu0 0
        %2637 = vmatprep.subr.bf16.mxu0 0
        %2638 = vmatpush1.bf16.msra.mxu0 0
        %2639 = vmatprep.subr.bf16.mxu0 0
        %2640 = vmatpush1.bf16.msra.mxu0 0
        %2641 = vmatprep.subr.bf16.mxu0 0
        %2642 = vmatpush1.bf16.msra.mxu0 0
        %2643 = vmatprep.subr.bf16.mxu0 0
        %2644 = vmatpush1.bf16.msra.mxu0 0
        %2645 = vmatprep.subr.bf16.mxu0 0
        %2646 = vmatpush1.bf16.msra.mxu0 0
        %2647 = vmatprep.subr.bf16.mxu0 0
        %2648 = vmatpush1.bf16.msra.mxu0 0
        %2649 = vmatprep.subr.bf16.mxu0 0
        %2650 = vmatpush1.bf16.msra.mxu0 0
        %2651 = vmatprep.subr.bf16.mxu0 0
        %2652 = vmatpush1.bf16.msra.mxu0 0
        %2653 = vmatprep.subr.bf16.mxu0 0
        %2654 = vmatpush1.bf16.msra.mxu0 0
        %2655 = vmatprep.subr.bf16.mxu0 0
        %2656 = vmatpush1.bf16.msra.mxu0 0
        %2657 = vmatprep.subr.bf16.mxu0 0
        %2658 = vmatpush1.bf16.msra.mxu0 0
        %2659 = vmatprep.mubr.bf16.mxu0 0
        %2660 = vmatmul.mubr.bf16.gmra.mrb[0].mxu0 %v2601
        %v2661 = vpop.f32.mrb[0].mxu0
        %v2662 = vadd.f32 0.0, %v2661
        %v2663 = vpop.f32.mrb[0].mxu0
        %v2664 = vpop.f32.mrb[0].mxu0
        %v2665 = vadd.f32 0.0, %v2664
        %v2666 = vpop.f32.mrb[0].mxu0
        %2667 = vmatprep.mubr.bf16.mxu0 0
        %2668 = vmatmul.mubr.bf16.gmra.mrb[0].mxu0 %v2604
        %v2669 = vpop.f32.mrb[0].mxu0
        %v2670 = vadd.f32 0.0, %v2669
        %v2671 = vpop.f32.mrb[0].mxu0
        %v2672 = vpop.f32.mrb[0].mxu0
        %v2673 = vadd.f32 0.0, %v2672
        %v2674 = vpop.f32.mrb[0].mxu0
        %2675 = vmatprep.mubr.bf16.mxu0 0
        %2676 = vmatmul.mubr.bf16.gmra.mrb[0].mxu0 %v2607
        %v2677 = vpop.f32.mrb[0].mxu0
        %v2678 = vadd.f32 0.0, %v2677
        %v2679 = vpop.f32.mrb[0].mxu0
        %v2680 = vpop.f32.mrb[0].mxu0
        %v2681 = vadd.f32 0.0, %v2680
        %v2682 = vpop.f32.mrb[0].mxu0
        %2683 = vmatprep.mubr.bf16.mxu0 0
        %2684 = vmatmul.mubr.bf16.gmra.mrb[0].mxu0 %v2610
        %v2685 = vpop.f32.mrb[0].mxu0
        %v2686 = vadd.f32 0.0, %v2685
        %v2687 = vpop.f32.mrb[0].mxu0
        %v2688 = vpop.f32.mrb[0].mxu0
        %v2689 = vadd.f32 0.0, %v2688
        %v2690 = vpop.f32.mrb[0].mxu0
        %2691 = vmatprep.mubr.bf16.mxu0 0
        %2692 = vmatmul.mubr.bf16.gmra.mrb[0].mxu0 %v2613
        %v2693 = vpop.f32.mrb[0].mxu0
        %v2694 = vadd.f32 0.0, %v2693
        %v2695 = vpop.f32.mrb[0].mxu0
        %v2696 = vpop.f32.mrb[0].mxu0
        %v2697 = vadd.f32 0.0, %v2696
        %v2698 = vpop.f32.mrb[0].mxu0
        %2699 = vmatprep.mubr.bf16.mxu0 0
        %2700 = vmatmul.mubr.bf16.gmra.mrb[0].mxu0 %v2616
        %v2701 = vpop.f32.mrb[0].mxu0
        %v2702 = vadd.f32 0.0, %v2701
        %v2703 = vpop.f32.mrb[0].mxu0
        %v2704 = vpop.f32.mrb[0].mxu0
        %v2705 = vadd.f32 0.0, %v2704
        %v2706 = vpop.f32.mrb[0].mxu0
        %2707 = vmatprep.mubr.bf16.mxu0 0
        %2708 = vmatmul.mubr.bf16.gmra.mrb[0].mxu0 %v2619
        %v2709 = vpop.f32.mrb[0].mxu0
        %v2710 = vadd.f32 0.0, %v2709
        %v2711 = vpop.f32.mrb[0].mxu0
        %v2712 = vpop.f32.mrb[0].mxu0
        %v2713 = vadd.f32 0.0, %v2712
        %v2714 = vpop.f32.mrb[0].mxu0
        %2715 = vmatprep.mubr.bf16.mxu0 0
        %2716 = vmatmul.mubr.bf16.gmra.mrb[0].mxu0 %v2622
        %v2717 = vpop.f32.mrb[0].mxu0
        %v2718 = vadd.f32 0.0, %v2717
        %v2719 = vpop.f32.mrb[0].mxu0
        %v2720 = vpop.f32.mrb[0].mxu0
        %v2721 = vadd.f32 0.0, %v2720
        %v2722 = vpop.f32.mrb[0].mxu0
        %2723 = vdwg.mxu0
        %2724 = vmax.xlane.f32.xlu0 %v2662
        %v2725 = vpop.xlane.xlu0 %2724
        %2726 = vmax.xlane.f32.xlu0 %v2665
        %v2727 = vpop.xlane.xlu0 %2726
        %2728 = vmax.xlane.f32.xlu0 %v2670
        %v2729 = vpop.xlane.xlu0 %2728
        %2730 = vmax.xlane.f32.xlu0 %v2673
        %v2731 = vpop.xlane.xlu0 %2730
        %2732 = vmax.xlane.f32.xlu0 %v2678
        %v2733 = vpop.xlane.xlu0 %2732
        %2734 = vmax.xlane.f32.xlu0 %v2681
        %v2735 = vpop.xlane.xlu0 %2734
        %2736 = vmax.xlane.f32.xlu0 %v2686
        %v2737 = vpop.xlane.xlu0 %2736
        %2738 = vmax.xlane.f32.xlu0 %v2689
        %v2739 = vpop.xlane.xlu0 %2738
        %2740 = vmax.xlane.f32.xlu0 %v2694
        %v2741 = vpop.xlane.xlu0 %2740
        %2742 = vmax.xlane.f32.xlu0 %v2697
        %v2743 = vpop.xlane.xlu0 %2742
        %2744 = vmax.xlane.f32.xlu0 %v2702
        %v2745 = vpop.xlane.xlu0 %2744
        %2746 = vmax.xlane.f32.xlu0 %v2705
        %v2747 = vpop.xlane.xlu0 %2746
        %2748 = vmax.xlane.f32.xlu0 %v2710
        %v2749 = vpop.xlane.xlu0 %2748
        %2750 = vmax.xlane.f32.xlu0 %v2713
        %v2751 = vpop.xlane.xlu0 %2750
        %2752 = vmax.xlane.f32.xlu0 %v2718
        %v2753 = vpop.xlane.xlu0 %2752
        %2754 = vmax.xlane.f32.xlu0 %v2721
        %v2755 = vpop.xlane.xlu0 %2754
        %v2756 = vsub.f32 %v2662, %v2725
        %v2757 = vsub.f32 %v2665, %v2727
        %v2758 = vsub.f32 %v2670, %v2729
        %v2759 = vsub.f32 %v2673, %v2731
        %v2760 = vsub.f32 %v2678, %v2733
        %v2761 = vsub.f32 %v2681, %v2735
        %v2762 = vsub.f32 %v2686, %v2737
        %v2763 = vsub.f32 %v2689, %v2739
        %v2764 = vsub.f32 %v2694, %v2741
        %v2765 = vsub.f32 %v2697, %v2743
        %v2766 = vsub.f32 %v2702, %v2745
        %v2767 = vsub.f32 %v2705, %v2747
        %v2768 = vsub.f32 %v2710, %v2749
        %v2769 = vsub.f32 %v2713, %v2751
        %v2770 = vsub.f32 %v2718, %v2753
        %v2771 = vsub.f32 %v2721, %v2755
        %v2772 = vmul.f32 %v2756, 1.442695
        %v2773 = vpow.pop %v2772
        %v2774 = vmul.f32 %v2757, 1.442695
        %v2775 = vpow.pop %v2774
        %v2776 = vmul.f32 %v2758, 1.442695
        %v2777 = vpow.pop %v2776
        %v2778 = vmul.f32 %v2759, 1.442695
        %v2779 = vpow.pop %v2778
        %v2780 = vmul.f32 %v2760, 1.442695
        %v2781 = vpow.pop %v2780
        %v2782 = vmul.f32 %v2761, 1.442695
        %v2783 = vpow.pop %v2782
        %v2784 = vmul.f32 %v2762, 1.442695
        %v2785 = vpow.pop %v2784
        %v2786 = vmul.f32 %v2763, 1.442695
        %v2787 = vpow.pop %v2786
        %v2788 = vmul.f32 %v2764, 1.442695
        %v2789 = vpow.pop %v2788
        %v2790 = vmul.f32 %v2765, 1.442695
        %v2791 = vpow.pop %v2790
        %v2792 = vmul.f32 %v2766, 1.442695
        %v2793 = vpow.pop %v2792
        %v2794 = vmul.f32 %v2767, 1.442695
        %v2795 = vpow.pop %v2794
        %v2796 = vmul.f32 %v2768, 1.442695
        %v2797 = vpow.pop %v2796
        %v2798 = vmul.f32 %v2769, 1.442695
        %v2799 = vpow.pop %v2798
        %v2800 = vmul.f32 %v2770, 1.442695
        %v2801 = vpow.pop %v2800
        %v2802 = vmul.f32 %v2771, 1.442695
        %v2803 = vpow.pop %v2802
        %2804 = vadd.xlane.f32.xlu0 %v2773
        %v2805 = vpop.xlane.xlu0 %2804
        %2806 = vadd.xlane.f32.xlu0 %v2775
        %v2807 = vpop.xlane.xlu0 %2806
        %2808 = vadd.xlane.f32.xlu0 %v2777
        %v2809 = vpop.xlane.xlu0 %2808
        %2810 = vadd.xlane.f32.xlu0 %v2779
        %v2811 = vpop.xlane.xlu0 %2810
        %2812 = vadd.xlane.f32.xlu0 %v2781
        %v2813 = vpop.xlane.xlu0 %2812
        %2814 = vadd.xlane.f32.xlu0 %v2783
        %v2815 = vpop.xlane.xlu0 %2814
        %2816 = vadd.xlane.f32.xlu0 %v2785
        %v2817 = vpop.xlane.xlu0 %2816
        %2818 = vadd.xlane.f32.xlu0 %v2787
        %v2819 = vpop.xlane.xlu0 %2818
        %2820 = vadd.xlane.f32.xlu0 %v2789
        %v2821 = vpop.xlane.xlu0 %2820
        %2822 = vadd.xlane.f32.xlu0 %v2791
        %v2823 = vpop.xlane.xlu0 %2822
        %2824 = vadd.xlane.f32.xlu0 %v2793
        %v2825 = vpop.xlane.xlu0 %2824
        %2826 = vadd.xlane.f32.xlu0 %v2795
        %v2827 = vpop.xlane.xlu0 %2826
        %2828 = vadd.xlane.f32.xlu0 %v2797
        %v2829 = vpop.xlane.xlu0 %2828
        %2830 = vadd.xlane.f32.xlu0 %v2799
        %v2831 = vpop.xlane.xlu0 %2830
        %2832 = vadd.xlane.f32.xlu0 %v2801
        %v2833 = vpop.xlane.xlu0 %2832
        %2834 = vadd.xlane.f32.xlu0 %v2803
        %v2835 = vpop.xlane.xlu0 %2834
        %v2836 = vrcp.pop %v2805
        %v2837 = vrcp.pop %v2807
        %v2838 = vrcp.pop %v2809
        %v2839 = vrcp.pop %v2811
        %v2840 = vrcp.pop %v2813
        %v2841 = vrcp.pop %v2815
        %v2842 = vrcp.pop %v2817
        %v2843 = vrcp.pop %v2819
        %v2844 = vrcp.pop %v2821
        %v2845 = vrcp.pop %v2823
        %v2846 = vrcp.pop %v2825
        %v2847 = vrcp.pop %v2827
        %v2848 = vrcp.pop %v2829
        %v2849 = vrcp.pop %v2831
        %v2850 = vrcp.pop %v2833
        %v2851 = vrcp.pop %v2835
        %v2852 = vmul.f32 %v2773, %v2836
        %v2853 = vmul.f32 %v2775, %v2837
        %v2854 = vmul.f32 %v2777, %v2838
        %v2855 = vmul.f32 %v2779, %v2839
        %v2856 = vmul.f32 %v2781, %v2840
        %v2857 = vmul.f32 %v2783, %v2841
        %v2858 = vmul.f32 %v2785, %v2842
        %v2859 = vmul.f32 %v2787, %v2843
        %v2860 = vmul.f32 %v2789, %v2844
        %v2861 = vmul.f32 %v2791, %v2845
        %v2862 = vmul.f32 %v2793, %v2846
        %v2863 = vmul.f32 %v2795, %v2847
        %v2864 = vmul.f32 %v2797, %v2848
        %v2865 = vmul.f32 %v2799, %v2849
        %v2866 = vmul.f32 %v2801, %v2850
        %v2867 = vmul.f32 %v2803, %v2851
        %v2868 = vpack.c.bf16 %v2853, %v2852
        %v2869 = vpack.c.bf16 %v2855, %v2854
        %v2870 = vpack.c.bf16 %v2857, %v2856
        %v2871 = vpack.c.bf16 %v2859, %v2858
        %v2872 = vpack.c.bf16 %v2861, %v2860
        %v2873 = vpack.c.bf16 %v2863, %v2862
        %v2874 = vpack.c.bf16 %v2865, %v2864
        %v2875 = vpack.c.bf16 %v2867, %v2866
        %2876 = vmatprep.subr.bf16.mxu0 0
        %2877 = vmatpush1.bf16.xpose.msra.mxu0 %v2868
        %2878 = vmatprep.subr.bf16.mxu0 0
        %2879 = vmatpush1.bf16.xpose.msra.mxu0 %v2869
        %2880 = vmatprep.subr.bf16.mxu0 0
        %2881 = vmatpush1.bf16.xpose.msra.mxu0 %v2870
        %2882 = vmatprep.subr.bf16.mxu0 0
        %2883 = vmatpush1.bf16.xpose.msra.mxu0 %v2871
        %2884 = vmatprep.subr.bf16.mxu0 0
        %2885 = vmatpush1.bf16.xpose.msra.mxu0 %v2872
        %2886 = vmatprep.subr.bf16.mxu0 0
        %2887 = vmatpush1.bf16.xpose.msra.mxu0 %v2873
        %2888 = vmatprep.subr.bf16.mxu0 0
        %2889 = vmatpush1.bf16.xpose.msra.mxu0 %v2874
        %2890 = vmatprep.subr.bf16.mxu0 0
        %2891 = vmatpush1.bf16.xpose.msra.mxu0 %v2875
        %2892 = vmatprep.subr.bf16.mxu0 0
        %2893 = vmatpush1.bf16.xpose.msra.mxu0 0
        %2894 = vmatprep.subr.bf16.mxu0 0
        %2895 = vmatpush1.bf16.xpose.msra.mxu0 0
        %2896 = vmatprep.subr.bf16.mxu0 0
        %2897 = vmatpush1.bf16.xpose.msra.mxu0 0
        %2898 = vmatprep.subr.bf16.mxu0 0
        %2899 = vmatpush1.bf16.xpose.msra.mxu0 0
        %2900 = vmatprep.subr.bf16.mxu0 0
        %2901 = vmatpush1.bf16.xpose.msra.mxu0 0
        %2902 = vmatprep.subr.bf16.mxu0 0
        %2903 = vmatpush1.bf16.xpose.msra.mxu0 0
        %2904 = vmatprep.subr.bf16.mxu0 0
        %2905 = vmatpush1.bf16.xpose.msra.mxu0 0
        %2906 = vmatprep.subr.bf16.mxu0 0
        %2907 = vmatpush1.bf16.xpose.msra.mxu0 0
        %2908 = vmatprep.mubr.bf16.mxu0 0
        %2909 = vmatmul.mubr.bf16.gmra.mrb[0].mxu0 %v2583
        %v2910 = vpop.f32.mrb[0].mxu0
        %v2911 = vadd.f32 0.0, %v2910
        %v2912 = vpop.f32.mrb[0].mxu0
        %v2913 = vpop.f32.mrb[0].mxu0
        %v2914 = vpop.f32.mrb[0].mxu0
        %2915 = vdwg.mxu0
        %v2916 = vpack.c.bf16 %v1001, %v1001
        %v2917 = vpack.c.bf16 %v1033, %v1033
        %2918 = vrot.lane.b32.xlu0 %v1244, 88
        %v2919 = vpop.permute.xlu0 %2918
        %2920 = vrot.lane.b32.xlu0 %v1245, 88
        %v2921 = vpop.permute.xlu0 %2920
        %2922 = vrot.lane.b32.xlu0 %v1246, 88
        %v2923 = vpop.permute.xlu0 %2922
        %2924 = vrot.lane.b32.xlu0 %v1247, 88
        %v2925 = vpop.permute.xlu0 %2924
        %2926 = vrot.lane.b32.xlu0 %v1248, 88
        %v2927 = vpop.permute.xlu0 %2926
        %2928 = vrot.lane.b32.xlu0 %v1249, 88
        %v2929 = vpop.permute.xlu0 %2928
        %2930 = vrot.lane.b32.xlu0 %v1250, 88
        %v2931 = vpop.permute.xlu0 %2930
        %2932 = vrot.lane.b32.xlu0 %v1251, 88
        %v2933 = vpop.permute.xlu0 %2932
        %v2935 = vsel %vm1254, %v2919, 0
        %v2938 = vsel %vm1254, %v2921, 0
        %v2941 = vsel %vm1254, %v2923, 0
        %v2944 = vsel %vm1254, %v2925, 0
        %v2947 = vsel %vm1254, %v2927, 0
        %v2950 = vsel %vm1254, %v2929, 0
        %v2953 = vsel %vm1254, %v2931, 0
        %v2956 = vsel %vm1254, %v2933, 0
        %v2959 = vsel %vm1279, %v2916, 0
        %2961 = vmatprep.subr.bf16.mxu0 0
        %2962 = vmatpush1.bf16.msra.mxu0 %v2959
        %2963 = vmatprep.subr.bf16.mxu0 0
        %2964 = vmatpush1.bf16.msra.mxu0 0
        %2965 = vmatprep.subr.bf16.mxu0 0
        %2966 = vmatpush1.bf16.msra.mxu0 0
        %2967 = vmatprep.subr.bf16.mxu0 0
        %2968 = vmatpush1.bf16.msra.mxu0 0
        %2969 = vmatprep.subr.bf16.mxu0 0
        %2970 = vmatpush1.bf16.msra.mxu0 0
        %2971 = vmatprep.subr.bf16.mxu0 0
        %2972 = vmatpush1.bf16.msra.mxu0 0
        %2973 = vmatprep.subr.bf16.mxu0 0
        %2974 = vmatpush1.bf16.msra.mxu0 0
        %2975 = vmatprep.subr.bf16.mxu0 0
        %2976 = vmatpush1.bf16.msra.mxu0 0
        %2977 = vmatprep.subr.bf16.mxu0 0
        %2978 = vmatpush1.bf16.msra.mxu0 0
        %2979 = vmatprep.subr.bf16.mxu0 0
        %2980 = vmatpush1.bf16.msra.mxu0 0
        %2981 = vmatprep.subr.bf16.mxu0 0
        %2982 = vmatpush1.bf16.msra.mxu0 0
        %2983 = vmatprep.subr.bf16.mxu0 0
        %2984 = vmatpush1.bf16.msra.mxu0 0
        %2985 = vmatprep.subr.bf16.mxu0 0
        %2986 = vmatpush1.bf16.msra.mxu0 0
        %2987 = vmatprep.subr.bf16.mxu0 0
        %2988 = vmatpush1.bf16.msra.mxu0 0
        %2989 = vmatprep.subr.bf16.mxu0 0
        %2990 = vmatpush1.bf16.msra.mxu0 0
        %2991 = vmatprep.subr.bf16.mxu0 0
        %2992 = vmatpush1.bf16.msra.mxu0 0
        %2993 = vmatprep.mubr.bf16.mxu0 0
        %2994 = vmatmul.mubr.bf16.gmra.mrb[0].mxu0 %v2935
        %v2995 = vpop.f32.mrb[0].mxu0
        %v2996 = vadd.f32 0.0, %v2995
        %v2997 = vpop.f32.mrb[0].mxu0
        %v2998 = vpop.f32.mrb[0].mxu0
        %v2999 = vadd.f32 0.0, %v2998
        %v3000 = vpop.f32.mrb[0].mxu0
        %3001 = vmatprep.mubr.bf16.mxu0 0
        %3002 = vmatmul.mubr.bf16.gmra.mrb[0].mxu0 %v2938
        %v3003 = vpop.f32.mrb[0].mxu0
        %v3004 = vadd.f32 0.0, %v3003
        %v3005 = vpop.f32.mrb[0].mxu0
        %v3006 = vpop.f32.mrb[0].mxu0
        %v3007 = vadd.f32 0.0, %v3006
        %v3008 = vpop.f32.mrb[0].mxu0
        %3009 = vmatprep.mubr.bf16.mxu0 0
        %3010 = vmatmul.mubr.bf16.gmra.mrb[0].mxu0 %v2941
        %v3011 = vpop.f32.mrb[0].mxu0
        %v3012 = vadd.f32 0.0, %v3011
        %v3013 = vpop.f32.mrb[0].mxu0
        %v3014 = vpop.f32.mrb[0].mxu0
        %v3015 = vadd.f32 0.0, %v3014
        %v3016 = vpop.f32.mrb[0].mxu0
        %3017 = vmatprep.mubr.bf16.mxu0 0
        %3018 = vmatmul.mubr.bf16.gmra.mrb[0].mxu0 %v2944
        %v3019 = vpop.f32.mrb[0].mxu0
        %v3020 = vadd.f32 0.0, %v3019
        %v3021 = vpop.f32.mrb[0].mxu0
        %v3022 = vpop.f32.mrb[0].mxu0
        %v3023 = vadd.f32 0.0, %v3022
        %v3024 = vpop.f32.mrb[0].mxu0
        %3025 = vmatprep.mubr.bf16.mxu0 0
        %3026 = vmatmul.mubr.bf16.gmra.mrb[0].mxu0 %v2947
        %v3027 = vpop.f32.mrb[0].mxu0
        %v3028 = vadd.f32 0.0, %v3027
        %v3029 = vpop.f32.mrb[0].mxu0
        %v3030 = vpop.f32.mrb[0].mxu0
        %v3031 = vadd.f32 0.0, %v3030
        %v3032 = vpop.f32.mrb[0].mxu0
        %3033 = vmatprep.mubr.bf16.mxu0 0
        %3034 = vmatmul.mubr.bf16.gmra.mrb[0].mxu0 %v2950
        %v3035 = vpop.f32.mrb[0].mxu0
        %v3036 = vadd.f32 0.0, %v3035
        %v3037 = vpop.f32.mrb[0].mxu0
        %v3038 = vpop.f32.mrb[0].mxu0
        %v3039 = vadd.f32 0.0, %v3038
        %v3040 = vpop.f32.mrb[0].mxu0
        %3041 = vmatprep.mubr.bf16.mxu0 0
        %3042 = vmatmul.mubr.bf16.gmra.mrb[0].mxu0 %v2953
        %v3043 = vpop.f32.mrb[0].mxu0
        %v3044 = vadd.f32 0.0, %v3043
        %v3045 = vpop.f32.mrb[0].mxu0
        %v3046 = vpop.f32.mrb[0].mxu0
        %v3047 = vadd.f32 0.0, %v3046
        %v3048 = vpop.f32.mrb[0].mxu0
        %3049 = vmatprep.mubr.bf16.mxu0 0
        %3050 = vmatmul.mubr.bf16.gmra.mrb[0].mxu0 %v2956
        %v3051 = vpop.f32.mrb[0].mxu0
        %v3052 = vadd.f32 0.0, %v3051
        %v3053 = vpop.f32.mrb[0].mxu0
        %v3054 = vpop.f32.mrb[0].mxu0
        %v3055 = vadd.f32 0.0, %v3054
        %v3056 = vpop.f32.mrb[0].mxu0
        %3057 = vdwg.mxu0
        %3058 = vmax.xlane.f32.xlu0 %v2996
        %v3059 = vpop.xlane.xlu0 %3058
        %3060 = vmax.xlane.f32.xlu0 %v2999
        %v3061 = vpop.xlane.xlu0 %3060
        %3062 = vmax.xlane.f32.xlu0 %v3004
        %v3063 = vpop.xlane.xlu0 %3062
        %3064 = vmax.xlane.f32.xlu0 %v3007
        %v3065 = vpop.xlane.xlu0 %3064
        %3066 = vmax.xlane.f32.xlu0 %v3012
        %v3067 = vpop.xlane.xlu0 %3066
        %3068 = vmax.xlane.f32.xlu0 %v3015
        %v3069 = vpop.xlane.xlu0 %3068
        %3070 = vmax.xlane.f32.xlu0 %v3020
        %v3071 = vpop.xlane.xlu0 %3070
        %3072 = vmax.xlane.f32.xlu0 %v3023
        %v3073 = vpop.xlane.xlu0 %3072
        %3074 = vmax.xlane.f32.xlu0 %v3028
        %v3075 = vpop.xlane.xlu0 %3074
        %3076 = vmax.xlane.f32.xlu0 %v3031
        %v3077 = vpop.xlane.xlu0 %3076
        %3078 = vmax.xlane.f32.xlu0 %v3036
        %v3079 = vpop.xlane.xlu0 %3078
        %3080 = vmax.xlane.f32.xlu0 %v3039
        %v3081 = vpop.xlane.xlu0 %3080
        %3082 = vmax.xlane.f32.xlu0 %v3044
        %v3083 = vpop.xlane.xlu0 %3082
        %3084 = vmax.xlane.f32.xlu0 %v3047
        %v3085 = vpop.xlane.xlu0 %3084
        %3086 = vmax.xlane.f32.xlu0 %v3052
        %v3087 = vpop.xlane.xlu0 %3086
        %3088 = vmax.xlane.f32.xlu0 %v3055
        %v3089 = vpop.xlane.xlu0 %3088
        %v3090 = vsub.f32 %v2996, %v3059
        %v3091 = vsub.f32 %v2999, %v3061
        %v3092 = vsub.f32 %v3004, %v3063
        %v3093 = vsub.f32 %v3007, %v3065
        %v3094 = vsub.f32 %v3012, %v3067
        %v3095 = vsub.f32 %v3015, %v3069
        %v3096 = vsub.f32 %v3020, %v3071
        %v3097 = vsub.f32 %v3023, %v3073
        %v3098 = vsub.f32 %v3028, %v3075
        %v3099 = vsub.f32 %v3031, %v3077
        %v3100 = vsub.f32 %v3036, %v3079
        %v3101 = vsub.f32 %v3039, %v3081
        %v3102 = vsub.f32 %v3044, %v3083
        %v3103 = vsub.f32 %v3047, %v3085
        %v3104 = vsub.f32 %v3052, %v3087
        %v3105 = vsub.f32 %v3055, %v3089
        %v3106 = vmul.f32 %v3090, 1.442695
        %v3107 = vpow.pop %v3106
        %v3108 = vmul.f32 %v3091, 1.442695
        %v3109 = vpow.pop %v3108
        %v3110 = vmul.f32 %v3092, 1.442695
        %v3111 = vpow.pop %v3110
        %v3112 = vmul.f32 %v3093, 1.442695
        %v3113 = vpow.pop %v3112
        %v3114 = vmul.f32 %v3094, 1.442695
        %v3115 = vpow.pop %v3114
        %v3116 = vmul.f32 %v3095, 1.442695
        %v3117 = vpow.pop %v3116
        %v3118 = vmul.f32 %v3096, 1.442695
        %v3119 = vpow.pop %v3118
        %v3120 = vmul.f32 %v3097, 1.442695
        %v3121 = vpow.pop %v3120
        %v3122 = vmul.f32 %v3098, 1.442695
        %v3123 = vpow.pop %v3122
        %v3124 = vmul.f32 %v3099, 1.442695
        %v3125 = vpow.pop %v3124
        %v3126 = vmul.f32 %v3100, 1.442695
        %v3127 = vpow.pop %v3126
        %v3128 = vmul.f32 %v3101, 1.442695
        %v3129 = vpow.pop %v3128
        %v3130 = vmul.f32 %v3102, 1.442695
        %v3131 = vpow.pop %v3130
        %v3132 = vmul.f32 %v3103, 1.442695
        %v3133 = vpow.pop %v3132
        %v3134 = vmul.f32 %v3104, 1.442695
        %v3135 = vpow.pop %v3134
        %v3136 = vmul.f32 %v3105, 1.442695
        %v3137 = vpow.pop %v3136
        %3138 = vadd.xlane.f32.xlu0 %v3107
        %v3139 = vpop.xlane.xlu0 %3138
        %3140 = vadd.xlane.f32.xlu0 %v3109
        %v3141 = vpop.xlane.xlu0 %3140
        %3142 = vadd.xlane.f32.xlu0 %v3111
        %v3143 = vpop.xlane.xlu0 %3142
        %3144 = vadd.xlane.f32.xlu0 %v3113
        %v3145 = vpop.xlane.xlu0 %3144
        %3146 = vadd.xlane.f32.xlu0 %v3115
        %v3147 = vpop.xlane.xlu0 %3146
        %3148 = vadd.xlane.f32.xlu0 %v3117
        %v3149 = vpop.xlane.xlu0 %3148
        %3150 = vadd.xlane.f32.xlu0 %v3119
        %v3151 = vpop.xlane.xlu0 %3150
        %3152 = vadd.xlane.f32.xlu0 %v3121
        %v3153 = vpop.xlane.xlu0 %3152
        %3154 = vadd.xlane.f32.xlu0 %v3123
        %v3155 = vpop.xlane.xlu0 %3154
        %3156 = vadd.xlane.f32.xlu0 %v3125
        %v3157 = vpop.xlane.xlu0 %3156
        %3158 = vadd.xlane.f32.xlu0 %v3127
        %v3159 = vpop.xlane.xlu0 %3158
        %3160 = vadd.xlane.f32.xlu0 %v3129
        %v3161 = vpop.xlane.xlu0 %3160
        %3162 = vadd.xlane.f32.xlu0 %v3131
        %v3163 = vpop.xlane.xlu0 %3162
        %3164 = vadd.xlane.f32.xlu0 %v3133
        %v3165 = vpop.xlane.xlu0 %3164
        %3166 = vadd.xlane.f32.xlu0 %v3135
        %v3167 = vpop.xlane.xlu0 %3166
        %3168 = vadd.xlane.f32.xlu0 %v3137
        %v3169 = vpop.xlane.xlu0 %3168
        %v3170 = vrcp.pop %v3139
        %v3171 = vrcp.pop %v3141
        %v3172 = vrcp.pop %v3143
        %v3173 = vrcp.pop %v3145
        %v3174 = vrcp.pop %v3147
        %v3175 = vrcp.pop %v3149
        %v3176 = vrcp.pop %v3151
        %v3177 = vrcp.pop %v3153
        %v3178 = vrcp.pop %v3155
        %v3179 = vrcp.pop %v3157
        %v3180 = vrcp.pop %v3159
        %v3181 = vrcp.pop %v3161
        %v3182 = vrcp.pop %v3163
        %v3183 = vrcp.pop %v3165
        %v3184 = vrcp.pop %v3167
        %v3185 = vrcp.pop %v3169
        %v3186 = vmul.f32 %v3107, %v3170
        %v3187 = vmul.f32 %v3109, %v3171
        %v3188 = vmul.f32 %v3111, %v3172
        %v3189 = vmul.f32 %v3113, %v3173
        %v3190 = vmul.f32 %v3115, %v3174
        %v3191 = vmul.f32 %v3117, %v3175
        %v3192 = vmul.f32 %v3119, %v3176
        %v3193 = vmul.f32 %v3121, %v3177
        %v3194 = vmul.f32 %v3123, %v3178
        %v3195 = vmul.f32 %v3125, %v3179
        %v3196 = vmul.f32 %v3127, %v3180
        %v3197 = vmul.f32 %v3129, %v3181
        %v3198 = vmul.f32 %v3131, %v3182
        %v3199 = vmul.f32 %v3133, %v3183
        %v3200 = vmul.f32 %v3135, %v3184
        %v3201 = vmul.f32 %v3137, %v3185
        %v3202 = vpack.c.bf16 %v3187, %v3186
        %v3203 = vpack.c.bf16 %v3189, %v3188
        %v3204 = vpack.c.bf16 %v3191, %v3190
        %v3205 = vpack.c.bf16 %v3193, %v3192
        %v3206 = vpack.c.bf16 %v3195, %v3194
        %v3207 = vpack.c.bf16 %v3197, %v3196
        %v3208 = vpack.c.bf16 %v3199, %v3198
        %v3209 = vpack.c.bf16 %v3201, %v3200
        %3210 = vmatprep.subr.bf16.mxu0 0
        %3211 = vmatpush1.bf16.xpose.msra.mxu0 %v3202
        %3212 = vmatprep.subr.bf16.mxu0 0
        %3213 = vmatpush1.bf16.xpose.msra.mxu0 %v3203
        %3214 = vmatprep.subr.bf16.mxu0 0
        %3215 = vmatpush1.bf16.xpose.msra.mxu0 %v3204
        %3216 = vmatprep.subr.bf16.mxu0 0
        %3217 = vmatpush1.bf16.xpose.msra.mxu0 %v3205
        %3218 = vmatprep.subr.bf16.mxu0 0
        %3219 = vmatpush1.bf16.xpose.msra.mxu0 %v3206
        %3220 = vmatprep.subr.bf16.mxu0 0
        %3221 = vmatpush1.bf16.xpose.msra.mxu0 %v3207
        %3222 = vmatprep.subr.bf16.mxu0 0
        %3223 = vmatpush1.bf16.xpose.msra.mxu0 %v3208
        %3224 = vmatprep.subr.bf16.mxu0 0
        %3225 = vmatpush1.bf16.xpose.msra.mxu0 %v3209
        %3226 = vmatprep.subr.bf16.mxu0 0
        %3227 = vmatpush1.bf16.xpose.msra.mxu0 0
        %3228 = vmatprep.subr.bf16.mxu0 0
        %3229 = vmatpush1.bf16.xpose.msra.mxu0 0
        %3230 = vmatprep.subr.bf16.mxu0 0
        %3231 = vmatpush1.bf16.xpose.msra.mxu0 0
        %3232 = vmatprep.subr.bf16.mxu0 0
        %3233 = vmatpush1.bf16.xpose.msra.mxu0 0
        %3234 = vmatprep.subr.bf16.mxu0 0
        %3235 = vmatpush1.bf16.xpose.msra.mxu0 0
        %3236 = vmatprep.subr.bf16.mxu0 0
        %3237 = vmatpush1.bf16.xpose.msra.mxu0 0
        %3238 = vmatprep.subr.bf16.mxu0 0
        %3239 = vmatpush1.bf16.xpose.msra.mxu0 0
        %3240 = vmatprep.subr.bf16.mxu0 0
        %3241 = vmatpush1.bf16.xpose.msra.mxu0 0
        %3242 = vmatprep.mubr.bf16.mxu0 0
        %3243 = vmatmul.mubr.bf16.gmra.mrb[0].mxu0 %v2917
        %v3244 = vpop.f32.mrb[0].mxu0
        %v3245 = vadd.f32 0.0, %v3244
        %v3246 = vpop.f32.mrb[0].mxu0
        %v3247 = vpop.f32.mrb[0].mxu0
        %v3248 = vpop.f32.mrb[0].mxu0
        %3249 = vdwg.mxu0
        %v3250 = vpack.c.bf16 %v1006, %v1006
        %v3251 = vpack.c.bf16 %v1038, %v1038
        %3252 = vrot.lane.b32.xlu0 %v1244, 80
        %v3253 = vpop.permute.xlu0 %3252
        %3254 = vrot.lane.b32.xlu0 %v1245, 80
        %v3255 = vpop.permute.xlu0 %3254
        %3256 = vrot.lane.b32.xlu0 %v1246, 80
        %v3257 = vpop.permute.xlu0 %3256
        %3258 = vrot.lane.b32.xlu0 %v1247, 80
        %v3259 = vpop.permute.xlu0 %3258
        %3260 = vrot.lane.b32.xlu0 %v1248, 80
        %v3261 = vpop.permute.xlu0 %3260
        %3262 = vrot.lane.b32.xlu0 %v1249, 80
        %v3263 = vpop.permute.xlu0 %3262
        %3264 = vrot.lane.b32.xlu0 %v1250, 80
        %v3265 = vpop.permute.xlu0 %3264
        %3266 = vrot.lane.b32.xlu0 %v1251, 80
        %v3267 = vpop.permute.xlu0 %3266
        %v3269 = vsel %vm1254, %v3253, 0
        %v3272 = vsel %vm1254, %v3255, 0
        %v3275 = vsel %vm1254, %v3257, 0
        %v3278 = vsel %vm1254, %v3259, 0
        %v3281 = vsel %vm1254, %v3261, 0
        %v3284 = vsel %vm1254, %v3263, 0
        %v3287 = vsel %vm1254, %v3265, 0
        %v3290 = vsel %vm1254, %v3267, 0
        %v3293 = vsel %vm1279, %v3250, 0
        %3295 = vmatprep.subr.bf16.mxu0 0
        %3296 = vmatpush1.bf16.msra.mxu0 %v3293
        %3297 = vmatprep.subr.bf16.mxu0 0
        %3298 = vmatpush1.bf16.msra.mxu0 0
        %3299 = vmatprep.subr.bf16.mxu0 0
        %3300 = vmatpush1.bf16.msra.mxu0 0
        %3301 = vmatprep.subr.bf16.mxu0 0
        %3302 = vmatpush1.bf16.msra.mxu0 0
        %3303 = vmatprep.subr.bf16.mxu0 0
        %3304 = vmatpush1.bf16.msra.mxu0 0
        %3305 = vmatprep.subr.bf16.mxu0 0
        %3306 = vmatpush1.bf16.msra.mxu0 0
        %3307 = vmatprep.subr.bf16.mxu0 0
        %3308 = vmatpush1.bf16.msra.mxu0 0
        %3309 = vmatprep.subr.bf16.mxu0 0
        %3310 = vmatpush1.bf16.msra.mxu0 0
        %3311 = vmatprep.subr.bf16.mxu0 0
        %3312 = vmatpush1.bf16.msra.mxu0 0
        %3313 = vmatprep.subr.bf16.mxu0 0
        %3314 = vmatpush1.bf16.msra.mxu0 0
        %3315 = vmatprep.subr.bf16.mxu0 0
        %3316 = vmatpush1.bf16.msra.mxu0 0
        %3317 = vmatprep.subr.bf16.mxu0 0
        %3318 = vmatpush1.bf16.msra.mxu0 0
        %3319 = vmatprep.subr.bf16.mxu0 0
        %3320 = vmatpush1.bf16.msra.mxu0 0
        %3321 = vmatprep.subr.bf16.mxu0 0
        %3322 = vmatpush1.bf16.msra.mxu0 0
        %3323 = vmatprep.subr.bf16.mxu0 0
        %3324 = vmatpush1.bf16.msra.mxu0 0
        %3325 = vmatprep.subr.bf16.mxu0 0
        %3326 = vmatpush1.bf16.msra.mxu0 0
        %3327 = vmatprep.mubr.bf16.mxu0 0
        %3328 = vmatmul.mubr.bf16.gmra.mrb[0].mxu0 %v3269
        %v3329 = vpop.f32.mrb[0].mxu0
        %v3330 = vadd.f32 0.0, %v3329
        %v3331 = vpop.f32.mrb[0].mxu0
        %v3332 = vpop.f32.mrb[0].mxu0
        %v3333 = vadd.f32 0.0, %v3332
        %v3334 = vpop.f32.mrb[0].mxu0
        %3335 = vmatprep.mubr.bf16.mxu0 0
        %3336 = vmatmul.mubr.bf16.gmra.mrb[0].mxu0 %v3272
        %v3337 = vpop.f32.mrb[0].mxu0
        %v3338 = vadd.f32 0.0, %v3337
        %v3339 = vpop.f32.mrb[0].mxu0
        %v3340 = vpop.f32.mrb[0].mxu0
        %v3341 = vadd.f32 0.0, %v3340
        %v3342 = vpop.f32.mrb[0].mxu0
        %3343 = vmatprep.mubr.bf16.mxu0 0
        %3344 = vmatmul.mubr.bf16.gmra.mrb[0].mxu0 %v3275
        %v3345 = vpop.f32.mrb[0].mxu0
        %v3346 = vadd.f32 0.0, %v3345
        %v3347 = vpop.f32.mrb[0].mxu0
        %v3348 = vpop.f32.mrb[0].mxu0
        %v3349 = vadd.f32 0.0, %v3348
        %v3350 = vpop.f32.mrb[0].mxu0
        %3351 = vmatprep.mubr.bf16.mxu0 0
        %3352 = vmatmul.mubr.bf16.gmra.mrb[0].mxu0 %v3278
        %v3353 = vpop.f32.mrb[0].mxu0
        %v3354 = vadd.f32 0.0, %v3353
        %v3355 = vpop.f32.mrb[0].mxu0
        %v3356 = vpop.f32.mrb[0].mxu0
        %v3357 = vadd.f32 0.0, %v3356
        %v3358 = vpop.f32.mrb[0].mxu0
        %3359 = vmatprep.mubr.bf16.mxu0 0
        %3360 = vmatmul.mubr.bf16.gmra.mrb[0].mxu0 %v3281
        %v3361 = vpop.f32.mrb[0].mxu0
        %v3362 = vadd.f32 0.0, %v3361
        %v3363 = vpop.f32.mrb[0].mxu0
        %v3364 = vpop.f32.mrb[0].mxu0
        %v3365 = vadd.f32 0.0, %v3364
        %v3366 = vpop.f32.mrb[0].mxu0
        %3367 = vmatprep.mubr.bf16.mxu0 0
        %3368 = vmatmul.mubr.bf16.gmra.mrb[0].mxu0 %v3284
        %v3369 = vpop.f32.mrb[0].mxu0
        %v3370 = vadd.f32 0.0, %v3369
        %v3371 = vpop.f32.mrb[0].mxu0
        %v3372 = vpop.f32.mrb[0].mxu0
        %v3373 = vadd.f32 0.0, %v3372
        %v3374 = vpop.f32.mrb[0].mxu0
        %3375 = vmatprep.mubr.bf16.mxu0 0
        %3376 = vmatmul.mubr.bf16.gmra.mrb[0].mxu0 %v3287
        %v3377 = vpop.f32.mrb[0].mxu0
        %v3378 = vadd.f32 0.0, %v3377
        %v3379 = vpop.f32.mrb[0].mxu0
        %v3380 = vpop.f32.mrb[0].mxu0
        %v3381 = vadd.f32 0.0, %v3380
        %v3382 = vpop.f32.mrb[0].mxu0
        %3383 = vmatprep.mubr.bf16.mxu0 0
        %3384 = vmatmul.mubr.bf16.gmra.mrb[0].mxu0 %v3290
        %v3385 = vpop.f32.mrb[0].mxu0
        %v3386 = vadd.f32 0.0, %v3385
        %v3387 = vpop.f32.mrb[0].mxu0
        %v3388 = vpop.f32.mrb[0].mxu0
        %v3389 = vadd.f32 0.0, %v3388
        %v3390 = vpop.f32.mrb[0].mxu0
        %3391 = vdwg.mxu0
        %3392 = vmax.xlane.f32.xlu0 %v3330
        %v3393 = vpop.xlane.xlu0 %3392
        %3394 = vmax.xlane.f32.xlu0 %v3333
        %v3395 = vpop.xlane.xlu0 %3394
        %3396 = vmax.xlane.f32.xlu0 %v3338
        %v3397 = vpop.xlane.xlu0 %3396
        %3398 = vmax.xlane.f32.xlu0 %v3341
        %v3399 = vpop.xlane.xlu0 %3398
        %3400 = vmax.xlane.f32.xlu0 %v3346
        %v3401 = vpop.xlane.xlu0 %3400
        %3402 = vmax.xlane.f32.xlu0 %v3349
        %v3403 = vpop.xlane.xlu0 %3402
        %3404 = vmax.xlane.f32.xlu0 %v3354
        %v3405 = vpop.xlane.xlu0 %3404
        %3406 = vmax.xlane.f32.xlu0 %v3357
        %v3407 = vpop.xlane.xlu0 %3406
        %3408 = vmax.xlane.f32.xlu0 %v3362
        %v3409 = vpop.xlane.xlu0 %3408
        %3410 = vmax.xlane.f32.xlu0 %v3365
        %v3411 = vpop.xlane.xlu0 %3410
        %3412 = vmax.xlane.f32.xlu0 %v3370
        %v3413 = vpop.xlane.xlu0 %3412
        %3414 = vmax.xlane.f32.xlu0 %v3373
        %v3415 = vpop.xlane.xlu0 %3414
        %3416 = vmax.xlane.f32.xlu0 %v3378
        %v3417 = vpop.xlane.xlu0 %3416
        %3418 = vmax.xlane.f32.xlu0 %v3381
        %v3419 = vpop.xlane.xlu0 %3418
        %3420 = vmax.xlane.f32.xlu0 %v3386
        %v3421 = vpop.xlane.xlu0 %3420
        %3422 = vmax.xlane.f32.xlu0 %v3389
        %v3423 = vpop.xlane.xlu0 %3422
        %v3424 = vsub.f32 %v3330, %v3393
        %v3425 = vsub.f32 %v3333, %v3395
        %v3426 = vsub.f32 %v3338, %v3397
        %v3427 = vsub.f32 %v3341, %v3399
        %v3428 = vsub.f32 %v3346, %v3401
        %v3429 = vsub.f32 %v3349, %v3403
        %v3430 = vsub.f32 %v3354, %v3405
        %v3431 = vsub.f32 %v3357, %v3407
        %v3432 = vsub.f32 %v3362, %v3409
        %v3433 = vsub.f32 %v3365, %v3411
        %v3434 = vsub.f32 %v3370, %v3413
        %v3435 = vsub.f32 %v3373, %v3415
        %v3436 = vsub.f32 %v3378, %v3417
        %v3437 = vsub.f32 %v3381, %v3419
        %v3438 = vsub.f32 %v3386, %v3421
        %v3439 = vsub.f32 %v3389, %v3423
        %v3440 = vmul.f32 %v3424, 1.442695
        %v3441 = vpow.pop %v3440
        %v3442 = vmul.f32 %v3425, 1.442695
        %v3443 = vpow.pop %v3442
        %v3444 = vmul.f32 %v3426, 1.442695
        %v3445 = vpow.pop %v3444
        %v3446 = vmul.f32 %v3427, 1.442695
        %v3447 = vpow.pop %v3446
        %v3448 = vmul.f32 %v3428, 1.442695
        %v3449 = vpow.pop %v3448
        %v3450 = vmul.f32 %v3429, 1.442695
        %v3451 = vpow.pop %v3450
        %v3452 = vmul.f32 %v3430, 1.442695
        %v3453 = vpow.pop %v3452
        %v3454 = vmul.f32 %v3431, 1.442695
        %v3455 = vpow.pop %v3454
        %v3456 = vmul.f32 %v3432, 1.442695
        %v3457 = vpow.pop %v3456
        %v3458 = vmul.f32 %v3433, 1.442695
        %v3459 = vpow.pop %v3458
        %v3460 = vmul.f32 %v3434, 1.442695
        %v3461 = vpow.pop %v3460
        %v3462 = vmul.f32 %v3435, 1.442695
        %v3463 = vpow.pop %v3462
        %v3464 = vmul.f32 %v3436, 1.442695
        %v3465 = vpow.pop %v3464
        %v3466 = vmul.f32 %v3437, 1.442695
        %v3467 = vpow.pop %v3466
        %v3468 = vmul.f32 %v3438, 1.442695
        %v3469 = vpow.pop %v3468
        %v3470 = vmul.f32 %v3439, 1.442695
        %v3471 = vpow.pop %v3470
        %3472 = vadd.xlane.f32.xlu0 %v3441
        %v3473 = vpop.xlane.xlu0 %3472
        %3474 = vadd.xlane.f32.xlu0 %v3443
        %v3475 = vpop.xlane.xlu0 %3474
        %3476 = vadd.xlane.f32.xlu0 %v3445
        %v3477 = vpop.xlane.xlu0 %3476
        %3478 = vadd.xlane.f32.xlu0 %v3447
        %v3479 = vpop.xlane.xlu0 %3478
        %3480 = vadd.xlane.f32.xlu0 %v3449
        %v3481 = vpop.xlane.xlu0 %3480
        %3482 = vadd.xlane.f32.xlu0 %v3451
        %v3483 = vpop.xlane.xlu0 %3482
        %3484 = vadd.xlane.f32.xlu0 %v3453
        %v3485 = vpop.xlane.xlu0 %3484
        %3486 = vadd.xlane.f32.xlu0 %v3455
        %v3487 = vpop.xlane.xlu0 %3486
        %3488 = vadd.xlane.f32.xlu0 %v3457
        %v3489 = vpop.xlane.xlu0 %3488
        %3490 = vadd.xlane.f32.xlu0 %v3459
        %v3491 = vpop.xlane.xlu0 %3490
        %3492 = vadd.xlane.f32.xlu0 %v3461
        %v3493 = vpop.xlane.xlu0 %3492
        %3494 = vadd.xlane.f32.xlu0 %v3463
        %v3495 = vpop.xlane.xlu0 %3494
        %3496 = vadd.xlane.f32.xlu0 %v3465
        %v3497 = vpop.xlane.xlu0 %3496
        %3498 = vadd.xlane.f32.xlu0 %v3467
        %v3499 = vpop.xlane.xlu0 %3498
        %3500 = vadd.xlane.f32.xlu0 %v3469
        %v3501 = vpop.xlane.xlu0 %3500
        %3502 = vadd.xlane.f32.xlu0 %v3471
        %v3503 = vpop.xlane.xlu0 %3502
        %v3504 = vrcp.pop %v3473
        %v3505 = vrcp.pop %v3475
        %v3506 = vrcp.pop %v3477
        %v3507 = vrcp.pop %v3479
        %v3508 = vrcp.pop %v3481
        %v3509 = vrcp.pop %v3483
        %v3510 = vrcp.pop %v3485
        %v3511 = vrcp.pop %v3487
        %v3512 = vrcp.pop %v3489
        %v3513 = vrcp.pop %v3491
        %v3514 = vrcp.pop %v3493
        %v3515 = vrcp.pop %v3495
        %v3516 = vrcp.pop %v3497
        %v3517 = vrcp.pop %v3499
        %v3518 = vrcp.pop %v3501
        %v3519 = vrcp.pop %v3503
        %v3520 = vmul.f32 %v3441, %v3504
        %v3521 = vmul.f32 %v3443, %v3505
        %v3522 = vmul.f32 %v3445, %v3506
        %v3523 = vmul.f32 %v3447, %v3507
        %v3524 = vmul.f32 %v3449, %v3508
        %v3525 = vmul.f32 %v3451, %v3509
        %v3526 = vmul.f32 %v3453, %v3510
        %v3527 = vmul.f32 %v3455, %v3511
        %v3528 = vmul.f32 %v3457, %v3512
        %v3529 = vmul.f32 %v3459, %v3513
        %v3530 = vmul.f32 %v3461, %v3514
        %v3531 = vmul.f32 %v3463, %v3515
        %v3532 = vmul.f32 %v3465, %v3516
        %v3533 = vmul.f32 %v3467, %v3517
        %v3534 = vmul.f32 %v3469, %v3518
        %v3535 = vmul.f32 %v3471, %v3519
        %v3536 = vpack.c.bf16 %v3521, %v3520
        %v3537 = vpack.c.bf16 %v3523, %v3522
        %v3538 = vpack.c.bf16 %v3525, %v3524
        %v3539 = vpack.c.bf16 %v3527, %v3526
        %v3540 = vpack.c.bf16 %v3529, %v3528
        %v3541 = vpack.c.bf16 %v3531, %v3530
        %v3542 = vpack.c.bf16 %v3533, %v3532
        %v3543 = vpack.c.bf16 %v3535, %v3534
        %3544 = vmatprep.subr.bf16.mxu0 0
        %3545 = vmatpush1.bf16.xpose.msra.mxu0 %v3536
        %3546 = vmatprep.subr.bf16.mxu0 0
        %3547 = vmatpush1.bf16.xpose.msra.mxu0 %v3537
        %3548 = vmatprep.subr.bf16.mxu0 0
        %3549 = vmatpush1.bf16.xpose.msra.mxu0 %v3538
        %3550 = vmatprep.subr.bf16.mxu0 0
        %3551 = vmatpush1.bf16.xpose.msra.mxu0 %v3539
        %3552 = vmatprep.subr.bf16.mxu0 0
        %3553 = vmatpush1.bf16.xpose.msra.mxu0 %v3540
        %3554 = vmatprep.subr.bf16.mxu0 0
        %3555 = vmatpush1.bf16.xpose.msra.mxu0 %v3541
        %3556 = vmatprep.subr.bf16.mxu0 0
        %3557 = vmatpush1.bf16.xpose.msra.mxu0 %v3542
        %3558 = vmatprep.subr.bf16.mxu0 0
        %3559 = vmatpush1.bf16.xpose.msra.mxu0 %v3543
        %3560 = vmatprep.subr.bf16.mxu0 0
        %3561 = vmatpush1.bf16.xpose.msra.mxu0 0
        %3562 = vmatprep.subr.bf16.mxu0 0
        %3563 = vmatpush1.bf16.xpose.msra.mxu0 0
        %3564 = vmatprep.subr.bf16.mxu0 0
        %3565 = vmatpush1.bf16.xpose.msra.mxu0 0
        %3566 = vmatprep.subr.bf16.mxu0 0
        %3567 = vmatpush1.bf16.xpose.msra.mxu0 0
        %3568 = vmatprep.subr.bf16.mxu0 0
        %3569 = vmatpush1.bf16.xpose.msra.mxu0 0
        %3570 = vmatprep.subr.bf16.mxu0 0
        %3571 = vmatpush1.bf16.xpose.msra.mxu0 0
        %3572 = vmatprep.subr.bf16.mxu0 0
        %3573 = vmatpush1.bf16.xpose.msra.mxu0 0
        %3574 = vmatprep.subr.bf16.mxu0 0
        %3575 = vmatpush1.bf16.xpose.msra.mxu0 0
        %3576 = vmatprep.mubr.bf16.mxu0 0
        %3577 = vmatmul.mubr.bf16.gmra.mrb[0].mxu0 %v3251
        %v3578 = vpop.f32.mrb[0].mxu0
        %v3579 = vadd.f32 0.0, %v3578
        %v3580 = vpop.f32.mrb[0].mxu0
        %v3581 = vpop.f32.mrb[0].mxu0
        %v3582 = vpop.f32.mrb[0].mxu0
        %3583 = vdwg.mxu0
        %v3584 = vpack.c.bf16 %v1009, %v1009
        %v3585 = vpack.c.bf16 %v1041, %v1041
        %3586 = vrot.lane.b32.xlu0 %v1244, 72
        %v3587 = vpop.permute.xlu0 %3586
        %3588 = vrot.lane.b32.xlu0 %v1245, 72
        %v3589 = vpop.permute.xlu0 %3588
        %3590 = vrot.lane.b32.xlu0 %v1246, 72
        %v3591 = vpop.permute.xlu0 %3590
        %3592 = vrot.lane.b32.xlu0 %v1247, 72
        %v3593 = vpop.permute.xlu0 %3592
        %3594 = vrot.lane.b32.xlu0 %v1248, 72
        %v3595 = vpop.permute.xlu0 %3594
        %3596 = vrot.lane.b32.xlu0 %v1249, 72
        %v3597 = vpop.permute.xlu0 %3596
        %3598 = vrot.lane.b32.xlu0 %v1250, 72
        %v3599 = vpop.permute.xlu0 %3598
        %3600 = vrot.lane.b32.xlu0 %v1251, 72
        %v3601 = vpop.permute.xlu0 %3600
        %v3603 = vsel %vm1254, %v3587, 0
        %v3606 = vsel %vm1254, %v3589, 0
        %v3609 = vsel %vm1254, %v3591, 0
        %v3612 = vsel %vm1254, %v3593, 0
        %v3615 = vsel %vm1254, %v3595, 0
        %v3618 = vsel %vm1254, %v3597, 0
        %v3621 = vsel %vm1254, %v3599, 0
        %v3624 = vsel %vm1254, %v3601, 0
        %v3627 = vsel %vm1279, %v3584, 0
        %3629 = vmatprep.subr.bf16.mxu0 0
        %3630 = vmatpush1.bf16.msra.mxu0 %v3627
        %3631 = vmatprep.subr.bf16.mxu0 0
        %3632 = vmatpush1.bf16.msra.mxu0 0
        %3633 = vmatprep.subr.bf16.mxu0 0
        %3634 = vmatpush1.bf16.msra.mxu0 0
        %3635 = vmatprep.subr.bf16.mxu0 0
        %3636 = vmatpush1.bf16.msra.mxu0 0
        %3637 = vmatprep.subr.bf16.mxu0 0
        %3638 = vmatpush1.bf16.msra.mxu0 0
        %3639 = vmatprep.subr.bf16.mxu0 0
        %3640 = vmatpush1.bf16.msra.mxu0 0
        %3641 = vmatprep.subr.bf16.mxu0 0
        %3642 = vmatpush1.bf16.msra.mxu0 0
        %3643 = vmatprep.subr.bf16.mxu0 0
        %3644 = vmatpush1.bf16.msra.mxu0 0
        %3645 = vmatprep.subr.bf16.mxu0 0
        %3646 = vmatpush1.bf16.msra.mxu0 0
        %3647 = vmatprep.subr.bf16.mxu0 0
        %3648 = vmatpush1.bf16.msra.mxu0 0
        %3649 = vmatprep.subr.bf16.mxu0 0
        %3650 = vmatpush1.bf16.msra.mxu0 0
        %3651 = vmatprep.subr.bf16.mxu0 0
        %3652 = vmatpush1.bf16.msra.mxu0 0
        %3653 = vmatprep.subr.bf16.mxu0 0
        %3654 = vmatpush1.bf16.msra.mxu0 0
        %3655 = vmatprep.subr.bf16.mxu0 0
        %3656 = vmatpush1.bf16.msra.mxu0 0
        %3657 = vmatprep.subr.bf16.mxu0 0
        %3658 = vmatpush1.bf16.msra.mxu0 0
        %3659 = vmatprep.subr.bf16.mxu0 0
        %3660 = vmatpush1.bf16.msra.mxu0 0
        %3661 = vmatprep.mubr.bf16.mxu0 0
        %3662 = vmatmul.mubr.bf16.gmra.mrb[0].mxu0 %v3603
        %v3663 = vpop.f32.mrb[0].mxu0
        %v3664 = vadd.f32 0.0, %v3663
        %v3665 = vpop.f32.mrb[0].mxu0
        %v3666 = vpop.f32.mrb[0].mxu0
        %v3667 = vadd.f32 0.0, %v3666
        %v3668 = vpop.f32.mrb[0].mxu0
        %3669 = vmatprep.mubr.bf16.mxu0 0
        %3670 = vmatmul.mubr.bf16.gmra.mrb[0].mxu0 %v3606
        %v3671 = vpop.f32.mrb[0].mxu0
        %v3672 = vadd.f32 0.0, %v3671
        %v3673 = vpop.f32.mrb[0].mxu0
        %v3674 = vpop.f32.mrb[0].mxu0
        %v3675 = vadd.f32 0.0, %v3674
        %v3676 = vpop.f32.mrb[0].mxu0
        %3677 = vmatprep.mubr.bf16.mxu0 0
        %3678 = vmatmul.mubr.bf16.gmra.mrb[0].mxu0 %v3609
        %v3679 = vpop.f32.mrb[0].mxu0
        %v3680 = vadd.f32 0.0, %v3679
        %v3681 = vpop.f32.mrb[0].mxu0
        %v3682 = vpop.f32.mrb[0].mxu0
        %v3683 = vadd.f32 0.0, %v3682
        %v3684 = vpop.f32.mrb[0].mxu0
        %3685 = vmatprep.mubr.bf16.mxu0 0
        %3686 = vmatmul.mubr.bf16.gmra.mrb[0].mxu0 %v3612
        %v3687 = vpop.f32.mrb[0].mxu0
        %v3688 = vadd.f32 0.0, %v3687
        %v3689 = vpop.f32.mrb[0].mxu0
        %v3690 = vpop.f32.mrb[0].mxu0
        %v3691 = vadd.f32 0.0, %v3690
        %v3692 = vpop.f32.mrb[0].mxu0
        %3693 = vmatprep.mubr.bf16.mxu0 0
        %3694 = vmatmul.mubr.bf16.gmra.mrb[0].mxu0 %v3615
        %v3695 = vpop.f32.mrb[0].mxu0
        %v3696 = vadd.f32 0.0, %v3695
        %v3697 = vpop.f32.mrb[0].mxu0
        %v3698 = vpop.f32.mrb[0].mxu0
        %v3699 = vadd.f32 0.0, %v3698
        %v3700 = vpop.f32.mrb[0].mxu0
        %3701 = vmatprep.mubr.bf16.mxu0 0
        %3702 = vmatmul.mubr.bf16.gmra.mrb[0].mxu0 %v3618
        %v3703 = vpop.f32.mrb[0].mxu0
        %v3704 = vadd.f32 0.0, %v3703
        %v3705 = vpop.f32.mrb[0].mxu0
        %v3706 = vpop.f32.mrb[0].mxu0
        %v3707 = vadd.f32 0.0, %v3706
        %v3708 = vpop.f32.mrb[0].mxu0
        %3709 = vmatprep.mubr.bf16.mxu0 0
        %3710 = vmatmul.mubr.bf16.gmra.mrb[0].mxu0 %v3621
        %v3711 = vpop.f32.mrb[0].mxu0
        %v3712 = vadd.f32 0.0, %v3711
        %v3713 = vpop.f32.mrb[0].mxu0
        %v3714 = vpop.f32.mrb[0].mxu0
        %v3715 = vadd.f32 0.0, %v3714
        %v3716 = vpop.f32.mrb[0].mxu0
        %3717 = vmatprep.mubr.bf16.mxu0 0
        %3718 = vmatmul.mubr.bf16.gmra.mrb[0].mxu0 %v3624
        %v3719 = vpop.f32.mrb[0].mxu0
        %v3720 = vadd.f32 0.0, %v3719
        %v3721 = vpop.f32.mrb[0].mxu0
        %v3722 = vpop.f32.mrb[0].mxu0
        %v3723 = vadd.f32 0.0, %v3722
        %v3724 = vpop.f32.mrb[0].mxu0
        %3725 = vdwg.mxu0
        %3726 = vmax.xlane.f32.xlu0 %v3664
        %v3727 = vpop.xlane.xlu0 %3726
        %3728 = vmax.xlane.f32.xlu0 %v3667
        %v3729 = vpop.xlane.xlu0 %3728
        %3730 = vmax.xlane.f32.xlu0 %v3672
        %v3731 = vpop.xlane.xlu0 %3730
        %3732 = vmax.xlane.f32.xlu0 %v3675
        %v3733 = vpop.xlane.xlu0 %3732
        %3734 = vmax.xlane.f32.xlu0 %v3680
        %v3735 = vpop.xlane.xlu0 %3734
        %3736 = vmax.xlane.f32.xlu0 %v3683
        %v3737 = vpop.xlane.xlu0 %3736
        %3738 = vmax.xlane.f32.xlu0 %v3688
        %v3739 = vpop.xlane.xlu0 %3738
        %3740 = vmax.xlane.f32.xlu0 %v3691
        %v3741 = vpop.xlane.xlu0 %3740
        %3742 = vmax.xlane.f32.xlu0 %v3696
        %v3743 = vpop.xlane.xlu0 %3742
        %3744 = vmax.xlane.f32.xlu0 %v3699
        %v3745 = vpop.xlane.xlu0 %3744
        %3746 = vmax.xlane.f32.xlu0 %v3704
        %v3747 = vpop.xlane.xlu0 %3746
        %3748 = vmax.xlane.f32.xlu0 %v3707
        %v3749 = vpop.xlane.xlu0 %3748
        %3750 = vmax.xlane.f32.xlu0 %v3712
        %v3751 = vpop.xlane.xlu0 %3750
        %3752 = vmax.xlane.f32.xlu0 %v3715
        %v3753 = vpop.xlane.xlu0 %3752
        %3754 = vmax.xlane.f32.xlu0 %v3720
        %v3755 = vpop.xlane.xlu0 %3754
        %3756 = vmax.xlane.f32.xlu0 %v3723
        %v3757 = vpop.xlane.xlu0 %3756
        %v3758 = vsub.f32 %v3664, %v3727
        %v3759 = vsub.f32 %v3667, %v3729
        %v3760 = vsub.f32 %v3672, %v3731
        %v3761 = vsub.f32 %v3675, %v3733
        %v3762 = vsub.f32 %v3680, %v3735
        %v3763 = vsub.f32 %v3683, %v3737
        %v3764 = vsub.f32 %v3688, %v3739
        %v3765 = vsub.f32 %v3691, %v3741
        %v3766 = vsub.f32 %v3696, %v3743
        %v3767 = vsub.f32 %v3699, %v3745
        %v3768 = vsub.f32 %v3704, %v3747
        %v3769 = vsub.f32 %v3707, %v3749
        %v3770 = vsub.f32 %v3712, %v3751
        %v3771 = vsub.f32 %v3715, %v3753
        %v3772 = vsub.f32 %v3720, %v3755
        %v3773 = vsub.f32 %v3723, %v3757
        %v3774 = vmul.f32 %v3758, 1.442695
        %v3775 = vpow.pop %v3774
        %v3776 = vmul.f32 %v3759, 1.442695
        %v3777 = vpow.pop %v3776
        %v3778 = vmul.f32 %v3760, 1.442695
        %v3779 = vpow.pop %v3778
        %v3780 = vmul.f32 %v3761, 1.442695
        %v3781 = vpow.pop %v3780
        %v3782 = vmul.f32 %v3762, 1.442695
        %v3783 = vpow.pop %v3782
        %v3784 = vmul.f32 %v3763, 1.442695
        %v3785 = vpow.pop %v3784
        %v3786 = vmul.f32 %v3764, 1.442695
        %v3787 = vpow.pop %v3786
        %v3788 = vmul.f32 %v3765, 1.442695
        %v3789 = vpow.pop %v3788
        %v3790 = vmul.f32 %v3766, 1.442695
        %v3791 = vpow.pop %v3790
        %v3792 = vmul.f32 %v3767, 1.442695
        %v3793 = vpow.pop %v3792
        %v3794 = vmul.f32 %v3768, 1.442695
        %v3795 = vpow.pop %v3794
        %v3796 = vmul.f32 %v3769, 1.442695
        %v3797 = vpow.pop %v3796
        %v3798 = vmul.f32 %v3770, 1.442695
        %v3799 = vpow.pop %v3798
        %v3800 = vmul.f32 %v3771, 1.442695
        %v3801 = vpow.pop %v3800
        %v3802 = vmul.f32 %v3772, 1.442695
        %v3803 = vpow.pop %v3802
        %v3804 = vmul.f32 %v3773, 1.442695
        %v3805 = vpow.pop %v3804
        %3806 = vadd.xlane.f32.xlu0 %v3775
        %v3807 = vpop.xlane.xlu0 %3806
        %3808 = vadd.xlane.f32.xlu0 %v3777
        %v3809 = vpop.xlane.xlu0 %3808
        %3810 = vadd.xlane.f32.xlu0 %v3779
        %v3811 = vpop.xlane.xlu0 %3810
        %3812 = vadd.xlane.f32.xlu0 %v3781
        %v3813 = vpop.xlane.xlu0 %3812
        %3814 = vadd.xlane.f32.xlu0 %v3783
        %v3815 = vpop.xlane.xlu0 %3814
        %3816 = vadd.xlane.f32.xlu0 %v3785
        %v3817 = vpop.xlane.xlu0 %3816
        %3818 = vadd.xlane.f32.xlu0 %v3787
        %v3819 = vpop.xlane.xlu0 %3818
        %3820 = vadd.xlane.f32.xlu0 %v3789
        %v3821 = vpop.xlane.xlu0 %3820
        %3822 = vadd.xlane.f32.xlu0 %v3791
        %v3823 = vpop.xlane.xlu0 %3822
        %3824 = vadd.xlane.f32.xlu0 %v3793
        %v3825 = vpop.xlane.xlu0 %3824
        %3826 = vadd.xlane.f32.xlu0 %v3795
        %v3827 = vpop.xlane.xlu0 %3826
        %3828 = vadd.xlane.f32.xlu0 %v3797
        %v3829 = vpop.xlane.xlu0 %3828
        %3830 = vadd.xlane.f32.xlu0 %v3799
        %v3831 = vpop.xlane.xlu0 %3830
        %3832 = vadd.xlane.f32.xlu0 %v3801
        %v3833 = vpop.xlane.xlu0 %3832
        %3834 = vadd.xlane.f32.xlu0 %v3803
        %v3835 = vpop.xlane.xlu0 %3834
        %3836 = vadd.xlane.f32.xlu0 %v3805
        %v3837 = vpop.xlane.xlu0 %3836
        %v3838 = vrcp.pop %v3807
        %v3839 = vrcp.pop %v3809
        %v3840 = vrcp.pop %v3811
        %v3841 = vrcp.pop %v3813
        %v3842 = vrcp.pop %v3815
        %v3843 = vrcp.pop %v3817
        %v3844 = vrcp.pop %v3819
        %v3845 = vrcp.pop %v3821
        %v3846 = vrcp.pop %v3823
        %v3847 = vrcp.pop %v3825
        %v3848 = vrcp.pop %v3827
        %v3849 = vrcp.pop %v3829
        %v3850 = vrcp.pop %v3831
        %v3851 = vrcp.pop %v3833
        %v3852 = vrcp.pop %v3835
        %v3853 = vrcp.pop %v3837
        %v3854 = vmul.f32 %v3775, %v3838
        %v3855 = vmul.f32 %v3777, %v3839
        %v3856 = vmul.f32 %v3779, %v3840
        %v3857 = vmul.f32 %v3781, %v3841
        %v3858 = vmul.f32 %v3783, %v3842
        %v3859 = vmul.f32 %v3785, %v3843
        %v3860 = vmul.f32 %v3787, %v3844
        %v3861 = vmul.f32 %v3789, %v3845
        %v3862 = vmul.f32 %v3791, %v3846
        %v3863 = vmul.f32 %v3793, %v3847
        %v3864 = vmul.f32 %v3795, %v3848
        %v3865 = vmul.f32 %v3797, %v3849
        %v3866 = vmul.f32 %v3799, %v3850
        %v3867 = vmul.f32 %v3801, %v3851
        %v3868 = vmul.f32 %v3803, %v3852
        %v3869 = vmul.f32 %v3805, %v3853
        %v3870 = vpack.c.bf16 %v3855, %v3854
        %v3871 = vpack.c.bf16 %v3857, %v3856
        %v3872 = vpack.c.bf16 %v3859, %v3858
        %v3873 = vpack.c.bf16 %v3861, %v3860
        %v3874 = vpack.c.bf16 %v3863, %v3862
        %v3875 = vpack.c.bf16 %v3865, %v3864
        %v3876 = vpack.c.bf16 %v3867, %v3866
        %v3877 = vpack.c.bf16 %v3869, %v3868
        %3878 = vmatprep.subr.bf16.mxu0 0
        %3879 = vmatpush1.bf16.xpose.msra.mxu0 %v3870
        %3880 = vmatprep.subr.bf16.mxu0 0
        %3881 = vmatpush1.bf16.xpose.msra.mxu0 %v3871
        %3882 = vmatprep.subr.bf16.mxu0 0
        %3883 = vmatpush1.bf16.xpose.msra.mxu0 %v3872
        %3884 = vmatprep.subr.bf16.mxu0 0
        %3885 = vmatpush1.bf16.xpose.msra.mxu0 %v3873
        %3886 = vmatprep.subr.bf16.mxu0 0
        %3887 = vmatpush1.bf16.xpose.msra.mxu0 %v3874
        %3888 = vmatprep.subr.bf16.mxu0 0
        %3889 = vmatpush1.bf16.xpose.msra.mxu0 %v3875
        %3890 = vmatprep.subr.bf16.mxu0 0
        %3891 = vmatpush1.bf16.xpose.msra.mxu0 %v3876
        %3892 = vmatprep.subr.bf16.mxu0 0
        %3893 = vmatpush1.bf16.xpose.msra.mxu0 %v3877
        %3894 = vmatprep.subr.bf16.mxu0 0
        %3895 = vmatpush1.bf16.xpose.msra.mxu0 0
        %3896 = vmatprep.subr.bf16.mxu0 0
        %3897 = vmatpush1.bf16.xpose.msra.mxu0 0
        %3898 = vmatprep.subr.bf16.mxu0 0
        %3899 = vmatpush1.bf16.xpose.msra.mxu0 0
        %3900 = vmatprep.subr.bf16.mxu0 0
        %3901 = vmatpush1.bf16.xpose.msra.mxu0 0
        %3902 = vmatprep.subr.bf16.mxu0 0
        %3903 = vmatpush1.bf16.xpose.msra.mxu0 0
        %3904 = vmatprep.subr.bf16.mxu0 0
        %3905 = vmatpush1.bf16.xpose.msra.mxu0 0
        %3906 = vmatprep.subr.bf16.mxu0 0
        %3907 = vmatpush1.bf16.xpose.msra.mxu0 0
        %3908 = vmatprep.subr.bf16.mxu0 0
        %3909 = vmatpush1.bf16.xpose.msra.mxu0 0
        %3910 = vmatprep.mubr.bf16.mxu0 0
        %3911 = vmatmul.mubr.bf16.gmra.mrb[0].mxu0 %v3585
        %v3912 = vpop.f32.mrb[0].mxu0
        %v3913 = vadd.f32 0.0, %v3912
        %v3914 = vpop.f32.mrb[0].mxu0
        %v3915 = vpop.f32.mrb[0].mxu0
        %v3916 = vpop.f32.mrb[0].mxu0
        %3917 = vdwg.mxu0
        %v3918 = vpack.c.bf16 %v1909, %v1567
        %v3919 = vpack.c.bf16 %v2577, %v2243
        %v3920 = vpack.c.bf16 %v3245, %v2911
        %v3921 = vpack.c.bf16 %v3913, %v3579
        %v3922 = vld [vmem:[%s8] sm:$0xf]
        %v3923 = vld [vmem:[%s8 + $0x4] sm:$0xf]
        %v3924 = vld [vmem:[%s8 + $0x8] sm:$0xf]
        %v3925 = vld [vmem:[%s8 + $0xc] sm:$0xf]
        %v3926 = vld [vmem:[%s8 + $0x10] sm:$0xf]
        %v3927 = vld [vmem:[%s8 + $0x14] sm:$0xf]
        %v3928 = vld [vmem:[%s8 + $0x18] sm:$0xf]
        %v3929 = vld [vmem:[%s8 + $0x1c] sm:$0xf]
        %v3930 = vld [vmem:[%s9] sm:$0xff]
        %v3931 = vld [vmem:[%s9 + $0x8] sm:$0xff]
        %v3932 = vld [vmem:[%s9 + $0x10] sm:$0xff]
        %v3933 = vld [vmem:[%s9 + $0x18] sm:$0xff]
        %v3934 = vld [vmem:[%s9 + $0x20] sm:$0xff]
        %v3935 = vld [vmem:[%s9 + $0x28] sm:$0xff]
        %v3936 = vld [vmem:[%s9 + $0x30] sm:$0xff]
        %v3937 = vld [vmem:[%s9 + $0x38] sm:$0xff]
        %3939 = vset.pattern.permute.xlu0 0
        %3940 = vperm.xlu0 %3939, %v3930
        %v3941 = vpop.permute.xlu0 %3940
        %3944 = vset.pattern.permute.xlu0 0
        %3945 = vperm.xlu0 %3944, %v3931
        %v3946 = vpop.permute.xlu0 %3945
        %3949 = vset.pattern.permute.xlu0 0
        %3950 = vperm.xlu0 %3949, %v3932
        %v3951 = vpop.permute.xlu0 %3950
        %3954 = vset.pattern.permute.xlu0 0
        %3955 = vperm.xlu0 %3954, %v3933
        %v3956 = vpop.permute.xlu0 %3955
        %3959 = vset.pattern.permute.xlu0 0
        %3960 = vperm.xlu0 %3959, %v3934
        %v3961 = vpop.permute.xlu0 %3960
        %3964 = vset.pattern.permute.xlu0 0
        %3965 = vperm.xlu0 %3964, %v3935
        %v3966 = vpop.permute.xlu0 %3965
        %3969 = vset.pattern.permute.xlu0 0
        %3970 = vperm.xlu0 %3969, %v3936
        %v3971 = vpop.permute.xlu0 %3970
        %3974 = vset.pattern.permute.xlu0 0
        %3975 = vperm.xlu0 %3974, %v3937
        %v3976 = vpop.permute.xlu0 %3975
        %v3986 = vunpack.c.l.b16 %v3922
        %v3987 = vunpack.c.l.b16 %v3923
        %v3988 = vunpack.c.l.b16 %v3924
        %v3989 = vunpack.c.l.b16 %v3925
        %v3990 = vunpack.c.l.b16 %v3926
        %v3991 = vunpack.c.l.b16 %v3927
        %v3992 = vunpack.c.l.b16 %v3928
        %v3993 = vunpack.c.l.b16 %v3929
        %v3994 = vpack.c.b16 %v3987, %v3986
        %v3995 = vpack.c.b16 %v3989, %v3988
        %v3996 = vpack.c.b16 %v3991, %v3990
        %v3997 = vpack.c.b16 %v3993, %v3992
        %v3999 = vsel %vm922, %v3994, 0
        %v4002 = vsel %vm922, %v3995, 0
        %v4005 = vsel %vm922, %v3996, 0
        %v4008 = vsel %vm922, %v3997, 0
        %4010 = vmatprep.subr.bf16.mxu0 0
        %4011 = vmatpush1.bf16.msra.mxu0 %v3918
        %4012 = vmatprep.subr.bf16.mxu0 0
        %4013 = vmatpush1.bf16.msra.mxu0 %v3919
        %4014 = vmatprep.subr.bf16.mxu0 0
        %4015 = vmatpush1.bf16.msra.mxu0 %v3920
        %4016 = vmatprep.subr.bf16.mxu0 0
        %4017 = vmatpush1.bf16.msra.mxu0 %v3921
        %4018 = vmatprep.subr.bf16.mxu0 0
        %4019 = vmatpush1.bf16.msra.mxu0 0
        %4020 = vmatprep.subr.bf16.mxu0 0
        %4021 = vmatpush1.bf16.msra.mxu0 0
        %4022 = vmatprep.subr.bf16.mxu0 0
        %4023 = vmatpush1.bf16.msra.mxu0 0
        %4024 = vmatprep.subr.bf16.mxu0 0
        %4025 = vmatpush1.bf16.msra.mxu0 0
        %4026 = vmatprep.subr.bf16.mxu0 0
        %4027 = vmatpush1.bf16.msra.mxu0 0
        %4028 = vmatprep.subr.bf16.mxu0 0
        %4029 = vmatpush1.bf16.msra.mxu0 0
        %4030 = vmatprep.subr.bf16.mxu0 0
        %4031 = vmatpush1.bf16.msra.mxu0 0
        %4032 = vmatprep.subr.bf16.mxu0 0
        %4033 = vmatpush1.bf16.msra.mxu0 0
        %4034 = vmatprep.subr.bf16.mxu0 0
        %4035 = vmatpush1.bf16.msra.mxu0 0
        %4036 = vmatprep.subr.bf16.mxu0 0
        %4037 = vmatpush1.bf16.msra.mxu0 0
        %4038 = vmatprep.subr.bf16.mxu0 0
        %4039 = vmatpush1.bf16.msra.mxu0 0
        %4040 = vmatprep.subr.bf16.mxu0 0
        %4041 = vmatpush1.bf16.msra.mxu0 0
        %4042 = vmatprep.mubr.bf16.mxu0 0
        %4043 = vmatmul.mubr.bf16.gmra.mrb[0].mxu0 %v3999
        %v4044 = vpop.f32.mrb[0].mxu0
        %v4045 = vadd.f32 %v3941, %v4044
        %v4046 = vpop.f32.mrb[0].mxu0
        %v4047 = vpop.f32.mrb[0].mxu0
        %v4048 = vadd.f32 %v3946, %v4047
        %v4049 = vpop.f32.mrb[0].mxu0
        %4050 = vmatprep.mubr.bf16.mxu0 0
        %4051 = vmatmul.mubr.bf16.gmra.mrb[0].mxu0 %v4002
        %v4052 = vpop.f32.mrb[0].mxu0
        %v4053 = vadd.f32 %v3951, %v4052
        %v4054 = vpop.f32.mrb[0].mxu0
        %v4055 = vpop.f32.mrb[0].mxu0
        %v4056 = vadd.f32 %v3956, %v4055
        %v4057 = vpop.f32.mrb[0].mxu0
        %4058 = vmatprep.mubr.bf16.mxu0 0
        %4059 = vmatmul.mubr.bf16.gmra.mrb[0].mxu0 %v4005
        %v4060 = vpop.f32.mrb[0].mxu0
        %v4061 = vadd.f32 %v3961, %v4060
        %v4062 = vpop.f32.mrb[0].mxu0
        %v4063 = vpop.f32.mrb[0].mxu0
        %v4064 = vadd.f32 %v3966, %v4063
        %v4065 = vpop.f32.mrb[0].mxu0
        %4066 = vmatprep.mubr.bf16.mxu0 0
        %4067 = vmatmul.mubr.bf16.gmra.mrb[0].mxu0 %v4008
        %v4068 = vpop.f32.mrb[0].mxu0
        %v4069 = vadd.f32 %v3971, %v4068
        %v4070 = vpop.f32.mrb[0].mxu0
        %v4071 = vpop.f32.mrb[0].mxu0
        %v4072 = vadd.f32 %v3976, %v4071
        %v4073 = vpop.f32.mrb[0].mxu0
        %4074 = vdwg.mxu0
        %v4075 = vadd.f32 %v4045, %v758
        %v4076 = vadd.f32 %v4048, %v759
        %v4077 = vadd.f32 %v4053, %v760
        %v4078 = vadd.f32 %v4056, %v761
        %v4079 = vadd.f32 %v4061, %v762
        %v4080 = vadd.f32 %v4064, %v763
        %v4081 = vadd.f32 %v4069, %v764
        %v4082 = vadd.f32 %v4072, %v765
        %v4083 = vadd.f32 %v4075, %v4076
        %v4084 = vadd.f32 %v4083, %v4077
        %v4085 = vadd.f32 %v4084, %v4078
        %v4086 = vadd.f32 %v4085, %v4079
        %v4087 = vadd.f32 %v4086, %v4080
        %v4088 = vadd.f32 %v4087, %v4081
        %v4089 = vadd.f32 %v4088, %v4082
        %v4090 = vrot.slane %v4089, 4
        %v4091 = vadd.f32 %v4089, %v4090
        %v4092 = vrot.slane %v4091, 2
        %v4093 = vadd.f32 %v4091, %v4092
        %v4094 = vrot.slane %v4093, 1
        %v4095 = vadd.f32 %v4093, %v4094
        %v4096 = vmul.f32 %v4095, %v596
        %v4097 = vsub.f32 %v4075, %v4096
        %v4098 = vsub.f32 %v4076, %v4096
        %v4099 = vsub.f32 %v4077, %v4096
        %v4100 = vsub.f32 %v4078, %v4096
        %v4101 = vsub.f32 %v4079, %v4096
        %v4102 = vsub.f32 %v4080, %v4096
        %v4103 = vsub.f32 %v4081, %v4096
        %v4104 = vsub.f32 %v4082, %v4096
        %v4105 = vmul.f32 %v4097, %v4097
        %v4106 = vmul.f32 %v4098, %v4098
        %v4107 = vmul.f32 %v4099, %v4099
        %v4108 = vmul.f32 %v4100, %v4100
        %v4109 = vmul.f32 %v4101, %v4101
        %v4110 = vmul.f32 %v4102, %v4102
        %v4111 = vmul.f32 %v4103, %v4103
        %v4112 = vmul.f32 %v4104, %v4104
        %v4113 = vadd.f32 %v4105, %v4106
        %v4114 = vadd.f32 %v4113, %v4107
        %v4115 = vadd.f32 %v4114, %v4108
        %v4116 = vadd.f32 %v4115, %v4109
        %v4117 = vadd.f32 %v4116, %v4110
        %v4118 = vadd.f32 %v4117, %v4111
        %v4119 = vadd.f32 %v4118, %v4112
        %v4120 = vrot.slane %v4119, 4
        %v4121 = vadd.f32 %v4119, %v4120
        %v4122 = vrot.slane %v4121, 2
        %v4123 = vadd.f32 %v4121, %v4122
        %v4124 = vrot.slane %v4123, 1
        %v4125 = vadd.f32 %v4123, %v4124
        %v4126 = vmul.f32 %v4125, %v596
        %v4127 = vadd.f32 %v4126, 1e-05
        %v4128 = vrsqrt.pop %v4127
        %v4129 = vmul.f32 %v4097, %v4128
        %v4130 = vmul.f32 %v4098, %v4128
        %v4131 = vmul.f32 %v4099, %v4128
        %v4132 = vmul.f32 %v4100, %v4128
        %v4133 = vmul.f32 %v4101, %v4128
        %v4134 = vmul.f32 %v4102, %v4128
        %v4135 = vmul.f32 %v4103, %v4128
        %v4136 = vmul.f32 %v4104, %v4128
        %v4137 = vld [vmem:[%s10] sm:$0xff]
        %v4138 = vld [vmem:[%s10 + $0x8] sm:$0xff]
        %v4139 = vld [vmem:[%s10 + $0x10] sm:$0xff]
        %v4140 = vld [vmem:[%s10 + $0x18] sm:$0xff]
        %v4141 = vld [vmem:[%s10 + $0x20] sm:$0xff]
        %v4142 = vld [vmem:[%s10 + $0x28] sm:$0xff]
        %v4143 = vld [vmem:[%s10 + $0x30] sm:$0xff]
        %v4144 = vld [vmem:[%s10 + $0x38] sm:$0xff]
        %4146 = vset.pattern.permute.xlu0 0
        %4147 = vperm.xlu0 %4146, %v4137
        %v4148 = vpop.permute.xlu0 %4147
        %4151 = vset.pattern.permute.xlu0 0
        %4152 = vperm.xlu0 %4151, %v4138
        %v4153 = vpop.permute.xlu0 %4152
        %4156 = vset.pattern.permute.xlu0 0
        %4157 = vperm.xlu0 %4156, %v4139
        %v4158 = vpop.permute.xlu0 %4157
        %4161 = vset.pattern.permute.xlu0 0
        %4162 = vperm.xlu0 %4161, %v4140
        %v4163 = vpop.permute.xlu0 %4162
        %4166 = vset.pattern.permute.xlu0 0
        %4167 = vperm.xlu0 %4166, %v4141
        %v4168 = vpop.permute.xlu0 %4167
        %4171 = vset.pattern.permute.xlu0 0
        %4172 = vperm.xlu0 %4171, %v4142
        %v4173 = vpop.permute.xlu0 %4172
        %4176 = vset.pattern.permute.xlu0 0
        %4177 = vperm.xlu0 %4176, %v4143
        %v4178 = vpop.permute.xlu0 %4177
        %4181 = vset.pattern.permute.xlu0 0
        %4182 = vperm.xlu0 %4181, %v4144
        %v4183 = vpop.permute.xlu0 %4182
        %v4185 = vmul.f32 %v4129, %v4148
        %v4186 = vmul.f32 %v4130, %v4153
        %v4187 = vmul.f32 %v4131, %v4158
        %v4188 = vmul.f32 %v4132, %v4163
        %v4189 = vmul.f32 %v4133, %v4168
        %v4190 = vmul.f32 %v4134, %v4173
        %v4191 = vmul.f32 %v4135, %v4178
        %v4192 = vmul.f32 %v4136, %v4183
        %v4193 = vld [vmem:[%s11] sm:$0xff]
        %v4194 = vld [vmem:[%s11 + $0x8] sm:$0xff]
        %v4195 = vld [vmem:[%s11 + $0x10] sm:$0xff]
        %v4196 = vld [vmem:[%s11 + $0x18] sm:$0xff]
        %v4197 = vld [vmem:[%s11 + $0x20] sm:$0xff]
        %v4198 = vld [vmem:[%s11 + $0x28] sm:$0xff]
        %v4199 = vld [vmem:[%s11 + $0x30] sm:$0xff]
        %v4200 = vld [vmem:[%s11 + $0x38] sm:$0xff]
        %4202 = vset.pattern.permute.xlu0 0
        %4203 = vperm.xlu0 %4202, %v4193
        %v4204 = vpop.permute.xlu0 %4203
        %4207 = vset.pattern.permute.xlu0 0
        %4208 = vperm.xlu0 %4207, %v4194
        %v4209 = vpop.permute.xlu0 %4208
        %4212 = vset.pattern.permute.xlu0 0
        %4213 = vperm.xlu0 %4212, %v4195
        %v4214 = vpop.permute.xlu0 %4213
        %4217 = vset.pattern.permute.xlu0 0
        %4218 = vperm.xlu0 %4217, %v4196
        %v4219 = vpop.permute.xlu0 %4218
        %4222 = vset.pattern.permute.xlu0 0
        %4223 = vperm.xlu0 %4222, %v4197
        %v4224 = vpop.permute.xlu0 %4223
        %4227 = vset.pattern.permute.xlu0 0
        %4228 = vperm.xlu0 %4227, %v4198
        %v4229 = vpop.permute.xlu0 %4228
        %4232 = vset.pattern.permute.xlu0 0
        %4233 = vperm.xlu0 %4232, %v4199
        %v4234 = vpop.permute.xlu0 %4233
        %4237 = vset.pattern.permute.xlu0 0
        %4238 = vperm.xlu0 %4237, %v4200
        %v4239 = vpop.permute.xlu0 %4238
        %v4241 = vadd.f32 %v4185, %v4204
        %v4242 = vadd.f32 %v4186, %v4209
        %v4243 = vadd.f32 %v4187, %v4214
        %v4244 = vadd.f32 %v4188, %v4219
        %v4245 = vadd.f32 %v4189, %v4224
        %v4246 = vadd.f32 %v4190, %v4229
        %v4247 = vadd.f32 %v4191, %v4234
        %v4248 = vadd.f32 %v4192, %v4239
        %v4249 = vadd.f32 %v4241, %v575
        %v4250 = vadd.f32 %v4242, %v576
        %v4251 = vadd.f32 %v4243, %v577
        %v4252 = vadd.f32 %v4244, %v578
        %v4253 = vadd.f32 %v4245, %v579
        %v4254 = vadd.f32 %v4246, %v580
        %v4255 = vadd.f32 %v4247, %v581
        %v4256 = vadd.f32 %v4248, %v582
        %v4257 = vld [vmem:[%s12] sm:$0xf]
        %v4258 = vld [vmem:[%s12 + $0x4] sm:$0xf]
        %v4259 = vld [vmem:[%s12 + $0x8] sm:$0xf]
        %v4260 = vld [vmem:[%s12 + $0xc] sm:$0xf]
        %v4261 = vld [vmem:[%s12 + $0x10] sm:$0xf]
        %v4262 = vld [vmem:[%s12 + $0x14] sm:$0xf]
        %v4263 = vld [vmem:[%s12 + $0x18] sm:$0xf]
        %v4264 = vld [vmem:[%s12 + $0x1c] sm:$0xf]
        %v4265 = vld [vmem:[%s12 + $0x20] sm:$0xf]
        %v4266 = vld [vmem:[%s12 + $0x24] sm:$0xf]
        %v4267 = vld [vmem:[%s12 + $0x28] sm:$0xf]
        %v4268 = vld [vmem:[%s12 + $0x2c] sm:$0xf]
        %v4269 = vld [vmem:[%s12 + $0x30] sm:$0xf]
        %v4270 = vld [vmem:[%s12 + $0x34] sm:$0xf]
        %v4271 = vld [vmem:[%s12 + $0x38] sm:$0xf]
        %v4272 = vld [vmem:[%s12 + $0x3c] sm:$0xf]
        %v4273 = vpack.c.bf16 %v4250, %v4249
        %v4274 = vpack.c.bf16 %v4252, %v4251
        %v4275 = vpack.c.bf16 %v4254, %v4253
        %v4276 = vpack.c.bf16 %v4256, %v4255
        %v4277 = vld [vmem:[%s13] sm:$0xff]
        %v4278 = vld [vmem:[%s13 + $0x8] sm:$0xff]
        %v4279 = vld [vmem:[%s13 + $0x10] sm:$0xff]
        %v4280 = vld [vmem:[%s13 + $0x18] sm:$0xff]
        %v4281 = vld [vmem:[%s13 + $0x20] sm:$0xff]
        %v4282 = vld [vmem:[%s13 + $0x28] sm:$0xff]
        %v4283 = vld [vmem:[%s13 + $0x30] sm:$0xff]
        %v4284 = vld [vmem:[%s13 + $0x38] sm:$0xff]
        %v4285 = vld [vmem:[%s13 + $0x40] sm:$0xff]
        %v4286 = vld [vmem:[%s13 + $0x48] sm:$0xff]
        %v4287 = vld [vmem:[%s13 + $0x50] sm:$0xff]
        %v4288 = vld [vmem:[%s13 + $0x58] sm:$0xff]
        %v4289 = vld [vmem:[%s13 + $0x60] sm:$0xff]
        %v4290 = vld [vmem:[%s13 + $0x68] sm:$0xff]
        %v4291 = vld [vmem:[%s13 + $0x70] sm:$0xff]
        %v4292 = vld [vmem:[%s13 + $0x78] sm:$0xff]
        %4294 = vset.pattern.permute.xlu0 0
        %4295 = vperm.xlu0 %4294, %v4277
        %v4296 = vpop.permute.xlu0 %4295
        %4299 = vset.pattern.permute.xlu0 0
        %4300 = vperm.xlu0 %4299, %v4278
        %v4301 = vpop.permute.xlu0 %4300
        %4304 = vset.pattern.permute.xlu0 0
        %4305 = vperm.xlu0 %4304, %v4279
        %v4306 = vpop.permute.xlu0 %4305
        %4309 = vset.pattern.permute.xlu0 0
        %4310 = vperm.xlu0 %4309, %v4280
        %v4311 = vpop.permute.xlu0 %4310
        %4314 = vset.pattern.permute.xlu0 0
        %4315 = vperm.xlu0 %4314, %v4281
        %v4316 = vpop.permute.xlu0 %4315
        %4319 = vset.pattern.permute.xlu0 0
        %4320 = vperm.xlu0 %4319, %v4282
        %v4321 = vpop.permute.xlu0 %4320
        %4324 = vset.pattern.permute.xlu0 0
        %4325 = vperm.xlu0 %4324, %v4283
        %v4326 = vpop.permute.xlu0 %4325
        %4329 = vset.pattern.permute.xlu0 0
        %4330 = vperm.xlu0 %4329, %v4284
        %v4331 = vpop.permute.xlu0 %4330
        %4334 = vset.pattern.permute.xlu0 0
        %4335 = vperm.xlu0 %4334, %v4285
        %v4336 = vpop.permute.xlu0 %4335
        %4339 = vset.pattern.permute.xlu0 0
        %4340 = vperm.xlu0 %4339, %v4286
        %v4341 = vpop.permute.xlu0 %4340
        %4344 = vset.pattern.permute.xlu0 0
        %4345 = vperm.xlu0 %4344, %v4287
        %v4346 = vpop.permute.xlu0 %4345
        %4349 = vset.pattern.permute.xlu0 0
        %4350 = vperm.xlu0 %4349, %v4288
        %v4351 = vpop.permute.xlu0 %4350
        %4354 = vset.pattern.permute.xlu0 0
        %4355 = vperm.xlu0 %4354, %v4289
        %v4356 = vpop.permute.xlu0 %4355
        %4359 = vset.pattern.permute.xlu0 0
        %4360 = vperm.xlu0 %4359, %v4290
        %v4361 = vpop.permute.xlu0 %4360
        %4364 = vset.pattern.permute.xlu0 0
        %4365 = vperm.xlu0 %4364, %v4291
        %v4366 = vpop.permute.xlu0 %4365
        %4369 = vset.pattern.permute.xlu0 0
        %4370 = vperm.xlu0 %4369, %v4292
        %v4371 = vpop.permute.xlu0 %4370
        %v4389 = vunpack.c.l.b16 %v4257
        %v4390 = vunpack.c.l.b16 %v4258
        %v4391 = vunpack.c.l.b16 %v4259
        %v4392 = vunpack.c.l.b16 %v4260
        %v4393 = vunpack.c.l.b16 %v4261
        %v4394 = vunpack.c.l.b16 %v4262
        %v4395 = vunpack.c.l.b16 %v4263
        %v4396 = vunpack.c.l.b16 %v4264
        %v4397 = vunpack.c.l.b16 %v4265
        %v4398 = vunpack.c.l.b16 %v4266
        %v4399 = vunpack.c.l.b16 %v4267
        %v4400 = vunpack.c.l.b16 %v4268
        %v4401 = vunpack.c.l.b16 %v4269
        %v4402 = vunpack.c.l.b16 %v4270
        %v4403 = vunpack.c.l.b16 %v4271
        %v4404 = vunpack.c.l.b16 %v4272
        %v4405 = vpack.c.b16 %v4390, %v4389
        %v4406 = vpack.c.b16 %v4392, %v4391
        %v4407 = vpack.c.b16 %v4394, %v4393
        %v4408 = vpack.c.b16 %v4396, %v4395
        %v4409 = vpack.c.b16 %v4398, %v4397
        %v4410 = vpack.c.b16 %v4400, %v4399
        %v4411 = vpack.c.b16 %v4402, %v4401
        %v4412 = vpack.c.b16 %v4404, %v4403
        %v4414 = vsel %vm922, %v4405, 0
        %v4417 = vsel %vm922, %v4406, 0
        %v4420 = vsel %vm922, %v4407, 0
        %v4423 = vsel %vm922, %v4408, 0
        %v4426 = vsel %vm922, %v4409, 0
        %v4429 = vsel %vm922, %v4410, 0
        %v4432 = vsel %vm922, %v4411, 0
        %v4435 = vsel %vm922, %v4412, 0
        %4437 = vmatprep.subr.bf16.mxu0 0
        %4438 = vmatpush1.bf16.msra.mxu0 %v4273
        %4439 = vmatprep.subr.bf16.mxu0 0
        %4440 = vmatpush1.bf16.msra.mxu0 %v4274
        %4441 = vmatprep.subr.bf16.mxu0 0
        %4442 = vmatpush1.bf16.msra.mxu0 %v4275
        %4443 = vmatprep.subr.bf16.mxu0 0
        %4444 = vmatpush1.bf16.msra.mxu0 %v4276
        %4445 = vmatprep.subr.bf16.mxu0 0
        %4446 = vmatpush1.bf16.msra.mxu0 0
        %4447 = vmatprep.subr.bf16.mxu0 0
        %4448 = vmatpush1.bf16.msra.mxu0 0
        %4449 = vmatprep.subr.bf16.mxu0 0
        %4450 = vmatpush1.bf16.msra.mxu0 0
        %4451 = vmatprep.subr.bf16.mxu0 0
        %4452 = vmatpush1.bf16.msra.mxu0 0
        %4453 = vmatprep.subr.bf16.mxu0 0
        %4454 = vmatpush1.bf16.msra.mxu0 0
        %4455 = vmatprep.subr.bf16.mxu0 0
        %4456 = vmatpush1.bf16.msra.mxu0 0
        %4457 = vmatprep.subr.bf16.mxu0 0
        %4458 = vmatpush1.bf16.msra.mxu0 0
        %4459 = vmatprep.subr.bf16.mxu0 0
        %4460 = vmatpush1.bf16.msra.mxu0 0
        %4461 = vmatprep.subr.bf16.mxu0 0
        %4462 = vmatpush1.bf16.msra.mxu0 0
        %4463 = vmatprep.subr.bf16.mxu0 0
        %4464 = vmatpush1.bf16.msra.mxu0 0
        %4465 = vmatprep.subr.bf16.mxu0 0
        %4466 = vmatpush1.bf16.msra.mxu0 0
        %4467 = vmatprep.subr.bf16.mxu0 0
        %4468 = vmatpush1.bf16.msra.mxu0 0
        %4469 = vmatprep.mubr.bf16.mxu0 0
        %4470 = vmatmul.mubr.bf16.gmra.mrb[0].mxu0 %v4414
        %v4471 = vpop.f32.mrb[0].mxu0
        %v4472 = vadd.f32 %v4296, %v4471
        %v4473 = vpop.f32.mrb[0].mxu0
        %v4474 = vpop.f32.mrb[0].mxu0
        %v4475 = vadd.f32 %v4301, %v4474
        %v4476 = vpop.f32.mrb[0].mxu0
        %4477 = vmatprep.mubr.bf16.mxu0 0
        %4478 = vmatmul.mubr.bf16.gmra.mrb[0].mxu0 %v4417
        %v4479 = vpop.f32.mrb[0].mxu0
        %v4480 = vadd.f32 %v4306, %v4479
        %v4481 = vpop.f32.mrb[0].mxu0
        %v4482 = vpop.f32.mrb[0].mxu0
        %v4483 = vadd.f32 %v4311, %v4482
        %v4484 = vpop.f32.mrb[0].mxu0
        %4485 = vmatprep.mubr.bf16.mxu0 0
        %4486 = vmatmul.mubr.bf16.gmra.mrb[0].mxu0 %v4420
        %v4487 = vpop.f32.mrb[0].mxu0
        %v4488 = vadd.f32 %v4316, %v4487
        %v4489 = vpop.f32.mrb[0].mxu0
        %v4490 = vpop.f32.mrb[0].mxu0
        %v4491 = vadd.f32 %v4321, %v4490
        %v4492 = vpop.f32.mrb[0].mxu0
        %4493 = vmatprep.mubr.bf16.mxu0 0
        %4494 = vmatmul.mubr.bf16.gmra.mrb[0].mxu0 %v4423
        %v4495 = vpop.f32.mrb[0].mxu0
        %v4496 = vadd.f32 %v4326, %v4495
        %v4497 = vpop.f32.mrb[0].mxu0
        %v4498 = vpop.f32.mrb[0].mxu0
        %v4499 = vadd.f32 %v4331, %v4498
        %v4500 = vpop.f32.mrb[0].mxu0
        %4501 = vmatprep.mubr.bf16.mxu0 0
        %4502 = vmatmul.mubr.bf16.gmra.mrb[0].mxu0 %v4426
        %v4503 = vpop.f32.mrb[0].mxu0
        %v4504 = vadd.f32 %v4336, %v4503
        %v4505 = vpop.f32.mrb[0].mxu0
        %v4506 = vpop.f32.mrb[0].mxu0
        %v4507 = vadd.f32 %v4341, %v4506
        %v4508 = vpop.f32.mrb[0].mxu0
        %4509 = vmatprep.mubr.bf16.mxu0 0
        %4510 = vmatmul.mubr.bf16.gmra.mrb[0].mxu0 %v4429
        %v4511 = vpop.f32.mrb[0].mxu0
        %v4512 = vadd.f32 %v4346, %v4511
        %v4513 = vpop.f32.mrb[0].mxu0
        %v4514 = vpop.f32.mrb[0].mxu0
        %v4515 = vadd.f32 %v4351, %v4514
        %v4516 = vpop.f32.mrb[0].mxu0
        %4517 = vmatprep.mubr.bf16.mxu0 0
        %4518 = vmatmul.mubr.bf16.gmra.mrb[0].mxu0 %v4432
        %v4519 = vpop.f32.mrb[0].mxu0
        %v4520 = vadd.f32 %v4356, %v4519
        %v4521 = vpop.f32.mrb[0].mxu0
        %v4522 = vpop.f32.mrb[0].mxu0
        %v4523 = vadd.f32 %v4361, %v4522
        %v4524 = vpop.f32.mrb[0].mxu0
        %4525 = vmatprep.mubr.bf16.mxu0 0
        %4526 = vmatmul.mubr.bf16.gmra.mrb[0].mxu0 %v4435
        %v4527 = vpop.f32.mrb[0].mxu0
        %v4528 = vadd.f32 %v4366, %v4527
        %v4529 = vpop.f32.mrb[0].mxu0
        %v4530 = vpop.f32.mrb[0].mxu0
        %v4531 = vadd.f32 %v4371, %v4530
        %v4532 = vpop.f32.mrb[0].mxu0
        %4533 = vdwg.mxu0
        %v4534 = vmax.f32 %v4472, 0.0
        %v4535 = vmax.f32 %v4475, 0.0
        %v4536 = vmax.f32 %v4480, 0.0
        %v4537 = vmax.f32 %v4483, 0.0
        %v4538 = vmax.f32 %v4488, 0.0
        %v4539 = vmax.f32 %v4491, 0.0
        %v4540 = vmax.f32 %v4496, 0.0
        %v4541 = vmax.f32 %v4499, 0.0
        %v4542 = vmax.f32 %v4504, 0.0
        %v4543 = vmax.f32 %v4507, 0.0
        %v4544 = vmax.f32 %v4512, 0.0
        %v4545 = vmax.f32 %v4515, 0.0
        %v4546 = vmax.f32 %v4520, 0.0
        %v4547 = vmax.f32 %v4523, 0.0
        %v4548 = vmax.f32 %v4528, 0.0
        %v4549 = vmax.f32 %v4531, 0.0
        %v4550 = vlaneseq
        %v4551 = vand.u32 %v4550, 127
        %v4552 = vld [vmem:[%s14] sm:$0xff]
        %v4553 = vld [vmem:[%s14 + $0x8] sm:$0xff]
        %v4554 = vld [vmem:[%s14 + $0x10] sm:$0xff]
        %v4555 = vld [vmem:[%s14 + $0x18] sm:$0xff]
        %v4556 = vld [vmem:[%s14 + $0x20] sm:$0xff]
        %v4557 = vld [vmem:[%s14 + $0x28] sm:$0xff]
        %v4558 = vld [vmem:[%s14 + $0x30] sm:$0xff]
        %v4559 = vld [vmem:[%s14 + $0x38] sm:$0xff]
        %v4560 = vld [vmem:[%s14 + $0x40] sm:$0xff]
        %v4561 = vld [vmem:[%s14 + $0x48] sm:$0xff]
        %v4562 = vld [vmem:[%s14 + $0x50] sm:$0xff]
        %v4563 = vld [vmem:[%s14 + $0x58] sm:$0xff]
        %v4564 = vld [vmem:[%s14 + $0x60] sm:$0xff]
        %v4565 = vld [vmem:[%s14 + $0x68] sm:$0xff]
        %v4566 = vld [vmem:[%s14 + $0x70] sm:$0xff]
        %v4567 = vld [vmem:[%s14 + $0x78] sm:$0xff]
        %4569 = vset.pattern.permute.xlu0 2
        %4570 = vperm.xlu0 %4569, %v4552
        %v4571 = vpop.permute.xlu0 %4570
        %4574 = vset.pattern.permute.xlu0 2
        %4575 = vperm.xlu0 %4574, %v4553
        %v4576 = vpop.permute.xlu0 %4575
        %4579 = vset.pattern.permute.xlu0 2
        %4580 = vperm.xlu0 %4579, %v4554
        %v4581 = vpop.permute.xlu0 %4580
        %4584 = vset.pattern.permute.xlu0 2
        %4585 = vperm.xlu0 %4584, %v4555
        %v4586 = vpop.permute.xlu0 %4585
        %4589 = vset.pattern.permute.xlu0 2
        %4590 = vperm.xlu0 %4589, %v4556
        %v4591 = vpop.permute.xlu0 %4590
        %4594 = vset.pattern.permute.xlu0 2
        %4595 = vperm.xlu0 %4594, %v4557
        %v4596 = vpop.permute.xlu0 %4595
        %4599 = vset.pattern.permute.xlu0 2
        %4600 = vperm.xlu0 %4599, %v4558
        %v4601 = vpop.permute.xlu0 %4600
        %4604 = vset.pattern.permute.xlu0 2
        %4605 = vperm.xlu0 %4604, %v4559
        %v4606 = vpop.permute.xlu0 %4605
        %4609 = vset.pattern.permute.xlu0 2
        %4610 = vperm.xlu0 %4609, %v4560
        %v4611 = vpop.permute.xlu0 %4610
        %4614 = vset.pattern.permute.xlu0 2
        %4615 = vperm.xlu0 %4614, %v4561
        %v4616 = vpop.permute.xlu0 %4615
        %4619 = vset.pattern.permute.xlu0 2
        %4620 = vperm.xlu0 %4619, %v4562
        %v4621 = vpop.permute.xlu0 %4620
        %4624 = vset.pattern.permute.xlu0 2
        %4625 = vperm.xlu0 %4624, %v4563
        %v4626 = vpop.permute.xlu0 %4625
        %4629 = vset.pattern.permute.xlu0 2
        %4630 = vperm.xlu0 %4629, %v4564
        %v4631 = vpop.permute.xlu0 %4630
        %4634 = vset.pattern.permute.xlu0 2
        %4635 = vperm.xlu0 %4634, %v4565
        %v4636 = vpop.permute.xlu0 %4635
        %4639 = vset.pattern.permute.xlu0 2
        %4640 = vperm.xlu0 %4639, %v4566
        %v4641 = vpop.permute.xlu0 %4640
        %4644 = vset.pattern.permute.xlu0 2
        %4645 = vperm.xlu0 %4644, %v4567
        %v4646 = vpop.permute.xlu0 %4645
        %v4648 = vmul.f32 %v4534, %v4571
        %v4649 = vmul.f32 %v4535, %v4576
        %v4650 = vmul.f32 %v4536, %v4581
        %v4651 = vmul.f32 %v4537, %v4586
        %v4652 = vmul.f32 %v4538, %v4591
        %v4653 = vmul.f32 %v4539, %v4596
        %v4654 = vmul.f32 %v4540, %v4601
        %v4655 = vmul.f32 %v4541, %v4606
        %v4656 = vmul.f32 %v4542, %v4611
        %v4657 = vmul.f32 %v4543, %v4616
        %v4658 = vmul.f32 %v4544, %v4621
        %v4659 = vmul.f32 %v4545, %v4626
        %v4660 = vmul.f32 %v4546, %v4631
        %v4661 = vmul.f32 %v4547, %v4636
        %v4662 = vmul.f32 %v4548, %v4641
        %v4663 = vmul.f32 %v4549, %v4646
        %v4664 = vld [vmem:[%s15] sm:$0xff]
        %v4665 = vld [vmem:[%s15 + $0x8] sm:$0xff]
        %v4666 = vld [vmem:[%s15 + $0x10] sm:$0xff]
        %v4667 = vld [vmem:[%s15 + $0x18] sm:$0xff]
        %v4668 = vld [vmem:[%s15 + $0x20] sm:$0xff]
        %v4669 = vld [vmem:[%s15 + $0x28] sm:$0xff]
        %v4670 = vld [vmem:[%s15 + $0x30] sm:$0xff]
        %v4671 = vld [vmem:[%s15 + $0x38] sm:$0xff]
        %v4672 = vld [vmem:[%s15 + $0x40] sm:$0xff]
        %v4673 = vld [vmem:[%s15 + $0x48] sm:$0xff]
        %v4674 = vld [vmem:[%s15 + $0x50] sm:$0xff]
        %v4675 = vld [vmem:[%s15 + $0x58] sm:$0xff]
        %v4676 = vld [vmem:[%s15 + $0x60] sm:$0xff]
        %v4677 = vld [vmem:[%s15 + $0x68] sm:$0xff]
        %v4678 = vld [vmem:[%s15 + $0x70] sm:$0xff]
        %v4679 = vld [vmem:[%s15 + $0x78] sm:$0xff]
        %4681 = vset.pattern.permute.xlu0 0
        %4682 = vperm.xlu0 %4681, %v4664
        %v4683 = vpop.permute.xlu0 %4682
        %4686 = vset.pattern.permute.xlu0 0
        %4687 = vperm.xlu0 %4686, %v4665
        %v4688 = vpop.permute.xlu0 %4687
        %4691 = vset.pattern.permute.xlu0 0
        %4692 = vperm.xlu0 %4691, %v4666
        %v4693 = vpop.permute.xlu0 %4692
        %4696 = vset.pattern.permute.xlu0 0
        %4697 = vperm.xlu0 %4696, %v4667
        %v4698 = vpop.permute.xlu0 %4697
        %4701 = vset.pattern.permute.xlu0 0
        %4702 = vperm.xlu0 %4701, %v4668
        %v4703 = vpop.permute.xlu0 %4702
        %4706 = vset.pattern.permute.xlu0 0
        %4707 = vperm.xlu0 %4706, %v4669
        %v4708 = vpop.permute.xlu0 %4707
        %4711 = vset.pattern.permute.xlu0 0
        %4712 = vperm.xlu0 %4711, %v4670
        %v4713 = vpop.permute.xlu0 %4712
        %4716 = vset.pattern.permute.xlu0 0
        %4717 = vperm.xlu0 %4716, %v4671
        %v4718 = vpop.permute.xlu0 %4717
        %4721 = vset.pattern.permute.xlu0 0
        %4722 = vperm.xlu0 %4721, %v4672
        %v4723 = vpop.permute.xlu0 %4722
        %4726 = vset.pattern.permute.xlu0 0
        %4727 = vperm.xlu0 %4726, %v4673
        %v4728 = vpop.permute.xlu0 %4727
        %4731 = vset.pattern.permute.xlu0 0
        %4732 = vperm.xlu0 %4731, %v4674
        %v4733 = vpop.permute.xlu0 %4732
        %4736 = vset.pattern.permute.xlu0 0
        %4737 = vperm.xlu0 %4736, %v4675
        %v4738 = vpop.permute.xlu0 %4737
        %4741 = vset.pattern.permute.xlu0 0
        %4742 = vperm.xlu0 %4741, %v4676
        %v4743 = vpop.permute.xlu0 %4742
        %4746 = vset.pattern.permute.xlu0 0
        %4747 = vperm.xlu0 %4746, %v4677
        %v4748 = vpop.permute.xlu0 %4747
        %4751 = vset.pattern.permute.xlu0 0
        %4752 = vperm.xlu0 %4751, %v4678
        %v4753 = vpop.permute.xlu0 %4752
        %4756 = vset.pattern.permute.xlu0 0
        %4757 = vperm.xlu0 %4756, %v4679
        %v4758 = vpop.permute.xlu0 %4757
        %v4760 = vadd.f32 %v4648, %v4683
        %v4761 = vadd.f32 %v4649, %v4688
        %v4762 = vadd.f32 %v4650, %v4693
        %v4763 = vadd.f32 %v4651, %v4698
        %v4764 = vadd.f32 %v4652, %v4703
        %v4765 = vadd.f32 %v4653, %v4708
        %v4766 = vadd.f32 %v4654, %v4713
        %v4767 = vadd.f32 %v4655, %v4718
        %v4768 = vadd.f32 %v4656, %v4723
        %v4769 = vadd.f32 %v4657, %v4728
        %v4770 = vadd.f32 %v4658, %v4733
        %v4771 = vadd.f32 %v4659, %v4738
        %v4772 = vadd.f32 %v4660, %v4743
        %v4773 = vadd.f32 %v4661, %v4748
        %v4774 = vadd.f32 %v4662, %v4753
        %v4775 = vadd.f32 %v4663, %v4758
        %4776 = vrot.lane.b32.xlu0 %v4534, 2
        %v4777 = vpop.permute.xlu0 %4776
        %4778 = vrot.lane.b32.xlu0 %v4535, 2
        %v4779 = vpop.permute.xlu0 %4778
        %4780 = vrot.lane.b32.xlu0 %v4536, 2
        %v4781 = vpop.permute.xlu0 %4780
        %4782 = vrot.lane.b32.xlu0 %v4537, 2
        %v4783 = vpop.permute.xlu0 %4782
        %4784 = vrot.lane.b32.xlu0 %v4538, 2
        %v4785 = vpop.permute.xlu0 %4784
        %4786 = vrot.lane.b32.xlu0 %v4539, 2
        %v4787 = vpop.permute.xlu0 %4786
        %4788 = vrot.lane.b32.xlu0 %v4540, 2
        %v4789 = vpop.permute.xlu0 %4788
        %4790 = vrot.lane.b32.xlu0 %v4541, 2
        %v4791 = vpop.permute.xlu0 %4790
        %4792 = vrot.lane.b32.xlu0 %v4542, 2
        %v4793 = vpop.permute.xlu0 %4792
        %4794 = vrot.lane.b32.xlu0 %v4543, 2
        %v4795 = vpop.permute.xlu0 %4794
        %4796 = vrot.lane.b32.xlu0 %v4544, 2
        %v4797 = vpop.permute.xlu0 %4796
        %4798 = vrot.lane.b32.xlu0 %v4545, 2
        %v4799 = vpop.permute.xlu0 %4798
        %4800 = vrot.lane.b32.xlu0 %v4546, 2
        %v4801 = vpop.permute.xlu0 %4800
        %4802 = vrot.lane.b32.xlu0 %v4547, 2
        %v4803 = vpop.permute.xlu0 %4802
        %4804 = vrot.lane.b32.xlu0 %v4548, 2
        %v4805 = vpop.permute.xlu0 %4804
        %4806 = vrot.lane.b32.xlu0 %v4549, 2
        %v4807 = vpop.permute.xlu0 %4806
        %vm4808 = vcmp.ge.s32.totalorder %v4551, 2
        %v4809 = vsel %vm4808, %v4777, 0.0
        %v4810 = vsel %vm4808, %v4779, 0.0
        %v4811 = vsel %vm4808, %v4781, 0.0
        %v4812 = vsel %vm4808, %v4783, 0.0
        %v4813 = vsel %vm4808, %v4785, 0.0
        %v4814 = vsel %vm4808, %v4787, 0.0
        %v4815 = vsel %vm4808, %v4789, 0.0
        %v4816 = vsel %vm4808, %v4791, 0.0
        %v4817 = vsel %vm4808, %v4793, 0.0
        %v4818 = vsel %vm4808, %v4795, 0.0
        %v4819 = vsel %vm4808, %v4797, 0.0
        %v4820 = vsel %vm4808, %v4799, 0.0
        %v4821 = vsel %vm4808, %v4801, 0.0
        %v4822 = vsel %vm4808, %v4803, 0.0
        %v4823 = vsel %vm4808, %v4805, 0.0
        %v4824 = vsel %vm4808, %v4807, 0.0
        %4825 = vset.pattern.permute.xlu0 0
        %4826 = vperm.xlu0 %4825, %v4552
        %v4827 = vpop.permute.xlu0 %4826
        %4829 = vset.pattern.permute.xlu0 0
        %4830 = vperm.xlu0 %4829, %v4553
        %v4831 = vpop.permute.xlu0 %4830
        %4833 = vset.pattern.permute.xlu0 0
        %4834 = vperm.xlu0 %4833, %v4554
        %v4835 = vpop.permute.xlu0 %4834
        %4837 = vset.pattern.permute.xlu0 0
        %4838 = vperm.xlu0 %4837, %v4555
        %v4839 = vpop.permute.xlu0 %4838
        %4841 = vset.pattern.permute.xlu0 0
        %4842 = vperm.xlu0 %4841, %v4556
        %v4843 = vpop.permute.xlu0 %4842
        %4845 = vset.pattern.permute.xlu0 0
        %4846 = vperm.xlu0 %4845, %v4557
        %v4847 = vpop.permute.xlu0 %4846
        %4849 = vset.pattern.permute.xlu0 0
        %4850 = vperm.xlu0 %4849, %v4558
        %v4851 = vpop.permute.xlu0 %4850
        %4853 = vset.pattern.permute.xlu0 0
        %4854 = vperm.xlu0 %4853, %v4559
        %v4855 = vpop.permute.xlu0 %4854
        %4857 = vset.pattern.permute.xlu0 0
        %4858 = vperm.xlu0 %4857, %v4560
        %v4859 = vpop.permute.xlu0 %4858
        %4861 = vset.pattern.permute.xlu0 0
        %4862 = vperm.xlu0 %4861, %v4561
        %v4863 = vpop.permute.xlu0 %4862
        %4865 = vset.pattern.permute.xlu0 0
        %4866 = vperm.xlu0 %4865, %v4562
        %v4867 = vpop.permute.xlu0 %4866
        %4869 = vset.pattern.permute.xlu0 0
        %4870 = vperm.xlu0 %4869, %v4563
        %v4871 = vpop.permute.xlu0 %4870
        %4873 = vset.pattern.permute.xlu0 0
        %4874 = vperm.xlu0 %4873, %v4564
        %v4875 = vpop.permute.xlu0 %4874
        %4877 = vset.pattern.permute.xlu0 0
        %4878 = vperm.xlu0 %4877, %v4565
        %v4879 = vpop.permute.xlu0 %4878
        %4881 = vset.pattern.permute.xlu0 0
        %4882 = vperm.xlu0 %4881, %v4566
        %v4883 = vpop.permute.xlu0 %4882
        %4885 = vset.pattern.permute.xlu0 0
        %4886 = vperm.xlu0 %4885, %v4567
        %v4887 = vpop.permute.xlu0 %4886
        %v4889 = vmul.f32 %v4809, %v4827
        %v4890 = vmul.f32 %v4810, %v4831
        %v4891 = vmul.f32 %v4811, %v4835
        %v4892 = vmul.f32 %v4812, %v4839
        %v4893 = vmul.f32 %v4813, %v4843
        %v4894 = vmul.f32 %v4814, %v4847
        %v4895 = vmul.f32 %v4815, %v4851
        %v4896 = vmul.f32 %v4816, %v4855
        %v4897 = vmul.f32 %v4817, %v4859
        %v4898 = vmul.f32 %v4818, %v4863
        %v4899 = vmul.f32 %v4819, %v4867
        %v4900 = vmul.f32 %v4820, %v4871
        %v4901 = vmul.f32 %v4821, %v4875
        %v4902 = vmul.f32 %v4822, %v4879
        %v4903 = vmul.f32 %v4823, %v4883
        %v4904 = vmul.f32 %v4824, %v4887
        %v4905 = vadd.f32 %v4760, %v4889
        %v4906 = vadd.f32 %v4761, %v4890
        %v4907 = vadd.f32 %v4762, %v4891
        %v4908 = vadd.f32 %v4763, %v4892
        %v4909 = vadd.f32 %v4764, %v4893
        %v4910 = vadd.f32 %v4765, %v4894
        %v4911 = vadd.f32 %v4766, %v4895
        %v4912 = vadd.f32 %v4767, %v4896
        %v4913 = vadd.f32 %v4768, %v4897
        %v4914 = vadd.f32 %v4769, %v4898
        %v4915 = vadd.f32 %v4770, %v4899
        %v4916 = vadd.f32 %v4771, %v4900
        %v4917 = vadd.f32 %v4772, %v4901
        %v4918 = vadd.f32 %v4773, %v4902
        %v4919 = vadd.f32 %v4774, %v4903
        %v4920 = vadd.f32 %v4775, %v4904
        %4921 = vrot.lane.b32.xlu0 %v4534, 1
        %v4922 = vpop.permute.xlu0 %4921
        %4923 = vrot.lane.b32.xlu0 %v4535, 1
        %v4924 = vpop.permute.xlu0 %4923
        %4925 = vrot.lane.b32.xlu0 %v4536, 1
        %v4926 = vpop.permute.xlu0 %4925
        %4927 = vrot.lane.b32.xlu0 %v4537, 1
        %v4928 = vpop.permute.xlu0 %4927
        %4929 = vrot.lane.b32.xlu0 %v4538, 1
        %v4930 = vpop.permute.xlu0 %4929
        %4931 = vrot.lane.b32.xlu0 %v4539, 1
        %v4932 = vpop.permute.xlu0 %4931
        %4933 = vrot.lane.b32.xlu0 %v4540, 1
        %v4934 = vpop.permute.xlu0 %4933
        %4935 = vrot.lane.b32.xlu0 %v4541, 1
        %v4936 = vpop.permute.xlu0 %4935
        %4937 = vrot.lane.b32.xlu0 %v4542, 1
        %v4938 = vpop.permute.xlu0 %4937
        %4939 = vrot.lane.b32.xlu0 %v4543, 1
        %v4940 = vpop.permute.xlu0 %4939
        %4941 = vrot.lane.b32.xlu0 %v4544, 1
        %v4942 = vpop.permute.xlu0 %4941
        %4943 = vrot.lane.b32.xlu0 %v4545, 1
        %v4944 = vpop.permute.xlu0 %4943
        %4945 = vrot.lane.b32.xlu0 %v4546, 1
        %v4946 = vpop.permute.xlu0 %4945
        %4947 = vrot.lane.b32.xlu0 %v4547, 1
        %v4948 = vpop.permute.xlu0 %4947
        %4949 = vrot.lane.b32.xlu0 %v4548, 1
        %v4950 = vpop.permute.xlu0 %4949
        %4951 = vrot.lane.b32.xlu0 %v4549, 1
        %v4952 = vpop.permute.xlu0 %4951
        %vm4953 = vcmp.ge.s32.totalorder %v4551, 1
        %v4954 = vsel %vm4953, %v4922, 0.0
        %v4955 = vsel %vm4953, %v4924, 0.0
        %v4956 = vsel %vm4953, %v4926, 0.0
        %v4957 = vsel %vm4953, %v4928, 0.0
        %v4958 = vsel %vm4953, %v4930, 0.0
        %v4959 = vsel %vm4953, %v4932, 0.0
        %v4960 = vsel %vm4953, %v4934, 0.0
        %v4961 = vsel %vm4953, %v4936, 0.0
        %v4962 = vsel %vm4953, %v4938, 0.0
        %v4963 = vsel %vm4953, %v4940, 0.0
        %v4964 = vsel %vm4953, %v4942, 0.0
        %v4965 = vsel %vm4953, %v4944, 0.0
        %v4966 = vsel %vm4953, %v4946, 0.0
        %v4967 = vsel %vm4953, %v4948, 0.0
        %v4968 = vsel %vm4953, %v4950, 0.0
        %v4969 = vsel %vm4953, %v4952, 0.0
        %4970 = vset.pattern.permute.xlu0 1
        %4971 = vperm.xlu0 %4970, %v4552
        %v4972 = vpop.permute.xlu0 %4971
        %4974 = vset.pattern.permute.xlu0 1
        %4975 = vperm.xlu0 %4974, %v4553
        %v4976 = vpop.permute.xlu0 %4975
        %4978 = vset.pattern.permute.xlu0 1
        %4979 = vperm.xlu0 %4978, %v4554
        %v4980 = vpop.permute.xlu0 %4979
        %4982 = vset.pattern.permute.xlu0 1
        %4983 = vperm.xlu0 %4982, %v4555
        %v4984 = vpop.permute.xlu0 %4983
        %4986 = vset.pattern.permute.xlu0 1
        %4987 = vperm.xlu0 %4986, %v4556
        %v4988 = vpop.permute.xlu0 %4987
        %4990 = vset.pattern.permute.xlu0 1
        %4991 = vperm.xlu0 %4990, %v4557
        %v4992 = vpop.permute.xlu0 %4991
        %4994 = vset.pattern.permute.xlu0 1
        %4995 = vperm.xlu0 %4994, %v4558
        %v4996 = vpop.permute.xlu0 %4995
        %4998 = vset.pattern.permute.xlu0 1
        %4999 = vperm.xlu0 %4998, %v4559
        %v5000 = vpop.permute.xlu0 %4999
        %5002 = vset.pattern.permute.xlu0 1
        %5003 = vperm.xlu0 %5002, %v4560
        %v5004 = vpop.permute.xlu0 %5003
        %5006 = vset.pattern.permute.xlu0 1
        %5007 = vperm.xlu0 %5006, %v4561
        %v5008 = vpop.permute.xlu0 %5007
        %5010 = vset.pattern.permute.xlu0 1
        %5011 = vperm.xlu0 %5010, %v4562
        %v5012 = vpop.permute.xlu0 %5011
        %5014 = vset.pattern.permute.xlu0 1
        %5015 = vperm.xlu0 %5014, %v4563
        %v5016 = vpop.permute.xlu0 %5015
        %5018 = vset.pattern.permute.xlu0 1
        %5019 = vperm.xlu0 %5018, %v4564
        %v5020 = vpop.permute.xlu0 %5019
        %5022 = vset.pattern.permute.xlu0 1
        %5023 = vperm.xlu0 %5022, %v4565
        %v5024 = vpop.permute.xlu0 %5023
        %5026 = vset.pattern.permute.xlu0 1
        %5027 = vperm.xlu0 %5026, %v4566
        %v5028 = vpop.permute.xlu0 %5027
        %5030 = vset.pattern.permute.xlu0 1
        %5031 = vperm.xlu0 %5030, %v4567
        %v5032 = vpop.permute.xlu0 %5031
        %v5034 = vmul.f32 %v4954, %v4972
        %v5035 = vmul.f32 %v4955, %v4976
        %v5036 = vmul.f32 %v4956, %v4980
        %v5037 = vmul.f32 %v4957, %v4984
        %v5038 = vmul.f32 %v4958, %v4988
        %v5039 = vmul.f32 %v4959, %v4992
        %v5040 = vmul.f32 %v4960, %v4996
        %v5041 = vmul.f32 %v4961, %v5000
        %v5042 = vmul.f32 %v4962, %v5004
        %v5043 = vmul.f32 %v4963, %v5008
        %v5044 = vmul.f32 %v4964, %v5012
        %v5045 = vmul.f32 %v4965, %v5016
        %v5046 = vmul.f32 %v4966, %v5020
        %v5047 = vmul.f32 %v4967, %v5024
        %v5048 = vmul.f32 %v4968, %v5028
        %v5049 = vmul.f32 %v4969, %v5032
        %v5050 = vadd.f32 %v4905, %v5034
        %v5051 = vadd.f32 %v4906, %v5035
        %v5052 = vadd.f32 %v4907, %v5036
        %v5053 = vadd.f32 %v4908, %v5037
        %v5054 = vadd.f32 %v4909, %v5038
        %v5055 = vadd.f32 %v4910, %v5039
        %v5056 = vadd.f32 %v4911, %v5040
        %v5057 = vadd.f32 %v4912, %v5041
        %v5058 = vadd.f32 %v4913, %v5042
        %v5059 = vadd.f32 %v4914, %v5043
        %v5060 = vadd.f32 %v4915, %v5044
        %v5061 = vadd.f32 %v4916, %v5045
        %v5062 = vadd.f32 %v4917, %v5046
        %v5063 = vadd.f32 %v4918, %v5047
        %v5064 = vadd.f32 %v4919, %v5048
        %v5065 = vadd.f32 %v4920, %v5049
        %5066 = vrot.lane.b32.xlu0 %v4534, 127
        %v5067 = vpop.permute.xlu0 %5066
        %5068 = vrot.lane.b32.xlu0 %v4535, 127
        %v5069 = vpop.permute.xlu0 %5068
        %5070 = vrot.lane.b32.xlu0 %v4536, 127
        %v5071 = vpop.permute.xlu0 %5070
        %5072 = vrot.lane.b32.xlu0 %v4537, 127
        %v5073 = vpop.permute.xlu0 %5072
        %5074 = vrot.lane.b32.xlu0 %v4538, 127
        %v5075 = vpop.permute.xlu0 %5074
        %5076 = vrot.lane.b32.xlu0 %v4539, 127
        %v5077 = vpop.permute.xlu0 %5076
        %5078 = vrot.lane.b32.xlu0 %v4540, 127
        %v5079 = vpop.permute.xlu0 %5078
        %5080 = vrot.lane.b32.xlu0 %v4541, 127
        %v5081 = vpop.permute.xlu0 %5080
        %5082 = vrot.lane.b32.xlu0 %v4542, 127
        %v5083 = vpop.permute.xlu0 %5082
        %5084 = vrot.lane.b32.xlu0 %v4543, 127
        %v5085 = vpop.permute.xlu0 %5084
        %5086 = vrot.lane.b32.xlu0 %v4544, 127
        %v5087 = vpop.permute.xlu0 %5086
        %5088 = vrot.lane.b32.xlu0 %v4545, 127
        %v5089 = vpop.permute.xlu0 %5088
        %5090 = vrot.lane.b32.xlu0 %v4546, 127
        %v5091 = vpop.permute.xlu0 %5090
        %5092 = vrot.lane.b32.xlu0 %v4547, 127
        %v5093 = vpop.permute.xlu0 %5092
        %5094 = vrot.lane.b32.xlu0 %v4548, 127
        %v5095 = vpop.permute.xlu0 %5094
        %5096 = vrot.lane.b32.xlu0 %v4549, 127
        %v5097 = vpop.permute.xlu0 %5096
        %vm5098 = vcmp.lt.s32.totalorder %v4551, 127
        %v5099 = vsel %vm5098, %v5067, 0.0
        %v5100 = vsel %vm5098, %v5069, 0.0
        %v5101 = vsel %vm5098, %v5071, 0.0
        %v5102 = vsel %vm5098, %v5073, 0.0
        %v5103 = vsel %vm5098, %v5075, 0.0
        %v5104 = vsel %vm5098, %v5077, 0.0
        %v5105 = vsel %vm5098, %v5079, 0.0
        %v5106 = vsel %vm5098, %v5081, 0.0
        %v5107 = vsel %vm5098, %v5083, 0.0
        %v5108 = vsel %vm5098, %v5085, 0.0
        %v5109 = vsel %vm5098, %v5087, 0.0
        %v5110 = vsel %vm5098, %v5089, 0.0
        %v5111 = vsel %vm5098, %v5091, 0.0
        %v5112 = vsel %vm5098, %v5093, 0.0
        %v5113 = vsel %vm5098, %v5095, 0.0
        %v5114 = vsel %vm5098, %v5097, 0.0
        %5115 = vset.pattern.permute.xlu0 3
        %5116 = vperm.xlu0 %5115, %v4552
        %v5117 = vpop.permute.xlu0 %5116
        %5119 = vset.pattern.permute.xlu0 3
        %5120 = vperm.xlu0 %5119, %v4553
        %v5121 = vpop.permute.xlu0 %5120
        %5123 = vset.pattern.permute.xlu0 3
        %5124 = vperm.xlu0 %5123, %v4554
        %v5125 = vpop.permute.xlu0 %5124
        %5127 = vset.pattern.permute.xlu0 3
        %5128 = vperm.xlu0 %5127, %v4555
        %v5129 = vpop.permute.xlu0 %5128
        %5131 = vset.pattern.permute.xlu0 3
        %5132 = vperm.xlu0 %5131, %v4556
        %v5133 = vpop.permute.xlu0 %5132
        %5135 = vset.pattern.permute.xlu0 3
        %5136 = vperm.xlu0 %5135, %v4557
        %v5137 = vpop.permute.xlu0 %5136
        %5139 = vset.pattern.permute.xlu0 3
        %5140 = vperm.xlu0 %5139, %v4558
        %v5141 = vpop.permute.xlu0 %5140
        %5143 = vset.pattern.permute.xlu0 3
        %5144 = vperm.xlu0 %5143, %v4559
        %v5145 = vpop.permute.xlu0 %5144
        %5147 = vset.pattern.permute.xlu0 3
        %5148 = vperm.xlu0 %5147, %v4560
        %v5149 = vpop.permute.xlu0 %5148
        %5151 = vset.pattern.permute.xlu0 3
        %5152 = vperm.xlu0 %5151, %v4561
        %v5153 = vpop.permute.xlu0 %5152
        %5155 = vset.pattern.permute.xlu0 3
        %5156 = vperm.xlu0 %5155, %v4562
        %v5157 = vpop.permute.xlu0 %5156
        %5159 = vset.pattern.permute.xlu0 3
        %5160 = vperm.xlu0 %5159, %v4563
        %v5161 = vpop.permute.xlu0 %5160
        %5163 = vset.pattern.permute.xlu0 3
        %5164 = vperm.xlu0 %5163, %v4564
        %v5165 = vpop.permute.xlu0 %5164
        %5167 = vset.pattern.permute.xlu0 3
        %5168 = vperm.xlu0 %5167, %v4565
        %v5169 = vpop.permute.xlu0 %5168
        %5171 = vset.pattern.permute.xlu0 3
        %5172 = vperm.xlu0 %5171, %v4566
        %v5173 = vpop.permute.xlu0 %5172
        %5175 = vset.pattern.permute.xlu0 3
        %5176 = vperm.xlu0 %5175, %v4567
        %v5177 = vpop.permute.xlu0 %5176
        %v5179 = vmul.f32 %v5099, %v5117
        %v5180 = vmul.f32 %v5100, %v5121
        %v5181 = vmul.f32 %v5101, %v5125
        %v5182 = vmul.f32 %v5102, %v5129
        %v5183 = vmul.f32 %v5103, %v5133
        %v5184 = vmul.f32 %v5104, %v5137
        %v5185 = vmul.f32 %v5105, %v5141
        %v5186 = vmul.f32 %v5106, %v5145
        %v5187 = vmul.f32 %v5107, %v5149
        %v5188 = vmul.f32 %v5108, %v5153
        %v5189 = vmul.f32 %v5109, %v5157
        %v5190 = vmul.f32 %v5110, %v5161
        %v5191 = vmul.f32 %v5111, %v5165
        %v5192 = vmul.f32 %v5112, %v5169
        %v5193 = vmul.f32 %v5113, %v5173
        %v5194 = vmul.f32 %v5114, %v5177
        %v5195 = vadd.f32 %v5050, %v5179
        %v5196 = vadd.f32 %v5051, %v5180
        %v5197 = vadd.f32 %v5052, %v5181
        %v5198 = vadd.f32 %v5053, %v5182
        %v5199 = vadd.f32 %v5054, %v5183
        %v5200 = vadd.f32 %v5055, %v5184
        %v5201 = vadd.f32 %v5056, %v5185
        %v5202 = vadd.f32 %v5057, %v5186
        %v5203 = vadd.f32 %v5058, %v5187
        %v5204 = vadd.f32 %v5059, %v5188
        %v5205 = vadd.f32 %v5060, %v5189
        %v5206 = vadd.f32 %v5061, %v5190
        %v5207 = vadd.f32 %v5062, %v5191
        %v5208 = vadd.f32 %v5063, %v5192
        %v5209 = vadd.f32 %v5064, %v5193
        %v5210 = vadd.f32 %v5065, %v5194
        %5211 = vrot.lane.b32.xlu0 %v4534, 126
        %v5212 = vpop.permute.xlu0 %5211
        %5213 = vrot.lane.b32.xlu0 %v4535, 126
        %v5214 = vpop.permute.xlu0 %5213
        %5215 = vrot.lane.b32.xlu0 %v4536, 126
        %v5216 = vpop.permute.xlu0 %5215
        %5217 = vrot.lane.b32.xlu0 %v4537, 126
        %v5218 = vpop.permute.xlu0 %5217
        %5219 = vrot.lane.b32.xlu0 %v4538, 126
        %v5220 = vpop.permute.xlu0 %5219
        %5221 = vrot.lane.b32.xlu0 %v4539, 126
        %v5222 = vpop.permute.xlu0 %5221
        %5223 = vrot.lane.b32.xlu0 %v4540, 126
        %v5224 = vpop.permute.xlu0 %5223
        %5225 = vrot.lane.b32.xlu0 %v4541, 126
        %v5226 = vpop.permute.xlu0 %5225
        %5227 = vrot.lane.b32.xlu0 %v4542, 126
        %v5228 = vpop.permute.xlu0 %5227
        %5229 = vrot.lane.b32.xlu0 %v4543, 126
        %v5230 = vpop.permute.xlu0 %5229
        %5231 = vrot.lane.b32.xlu0 %v4544, 126
        %v5232 = vpop.permute.xlu0 %5231
        %5233 = vrot.lane.b32.xlu0 %v4545, 126
        %v5234 = vpop.permute.xlu0 %5233
        %5235 = vrot.lane.b32.xlu0 %v4546, 126
        %v5236 = vpop.permute.xlu0 %5235
        %5237 = vrot.lane.b32.xlu0 %v4547, 126
        %v5238 = vpop.permute.xlu0 %5237
        %5239 = vrot.lane.b32.xlu0 %v4548, 126
        %v5240 = vpop.permute.xlu0 %5239
        %5241 = vrot.lane.b32.xlu0 %v4549, 126
        %v5242 = vpop.permute.xlu0 %5241
        %vm5243 = vcmp.lt.s32.totalorder %v4551, 126
        %v5244 = vsel %vm5243, %v5212, 0.0
        %v5245 = vsel %vm5243, %v5214, 0.0
        %v5246 = vsel %vm5243, %v5216, 0.0
        %v5247 = vsel %vm5243, %v5218, 0.0
        %v5248 = vsel %vm5243, %v5220, 0.0
        %v5249 = vsel %vm5243, %v5222, 0.0
        %v5250 = vsel %vm5243, %v5224, 0.0
        %v5251 = vsel %vm5243, %v5226, 0.0
        %v5252 = vsel %vm5243, %v5228, 0.0
        %v5253 = vsel %vm5243, %v5230, 0.0
        %v5254 = vsel %vm5243, %v5232, 0.0
        %v5255 = vsel %vm5243, %v5234, 0.0
        %v5256 = vsel %vm5243, %v5236, 0.0
        %v5257 = vsel %vm5243, %v5238, 0.0
        %v5258 = vsel %vm5243, %v5240, 0.0
        %v5259 = vsel %vm5243, %v5242, 0.0
        %5260 = vset.pattern.permute.xlu0 4
        %5261 = vperm.xlu0 %5260, %v4552
        %v5262 = vpop.permute.xlu0 %5261
        %5264 = vset.pattern.permute.xlu0 4
        %5265 = vperm.xlu0 %5264, %v4553
        %v5266 = vpop.permute.xlu0 %5265
        %5268 = vset.pattern.permute.xlu0 4
        %5269 = vperm.xlu0 %5268, %v4554
        %v5270 = vpop.permute.xlu0 %5269
        %5272 = vset.pattern.permute.xlu0 4
        %5273 = vperm.xlu0 %5272, %v4555
        %v5274 = vpop.permute.xlu0 %5273
        %5276 = vset.pattern.permute.xlu0 4
        %5277 = vperm.xlu0 %5276, %v4556
        %v5278 = vpop.permute.xlu0 %5277
        %5280 = vset.pattern.permute.xlu0 4
        %5281 = vperm.xlu0 %5280, %v4557
        %v5282 = vpop.permute.xlu0 %5281
        %5284 = vset.pattern.permute.xlu0 4
        %5285 = vperm.xlu0 %5284, %v4558
        %v5286 = vpop.permute.xlu0 %5285
        %5288 = vset.pattern.permute.xlu0 4
        %5289 = vperm.xlu0 %5288, %v4559
        %v5290 = vpop.permute.xlu0 %5289
        %5292 = vset.pattern.permute.xlu0 4
        %5293 = vperm.xlu0 %5292, %v4560
        %v5294 = vpop.permute.xlu0 %5293
        %5296 = vset.pattern.permute.xlu0 4
        %5297 = vperm.xlu0 %5296, %v4561
        %v5298 = vpop.permute.xlu0 %5297
        %5300 = vset.pattern.permute.xlu0 4
        %5301 = vperm.xlu0 %5300, %v4562
        %v5302 = vpop.permute.xlu0 %5301
        %5304 = vset.pattern.permute.xlu0 4
        %5305 = vperm.xlu0 %5304, %v4563
        %v5306 = vpop.permute.xlu0 %5305
        %5308 = vset.pattern.permute.xlu0 4
        %5309 = vperm.xlu0 %5308, %v4564
        %v5310 = vpop.permute.xlu0 %5309
        %5312 = vset.pattern.permute.xlu0 4
        %5313 = vperm.xlu0 %5312, %v4565
        %v5314 = vpop.permute.xlu0 %5313
        %5316 = vset.pattern.permute.xlu0 4
        %5317 = vperm.xlu0 %5316, %v4566
        %v5318 = vpop.permute.xlu0 %5317
        %5320 = vset.pattern.permute.xlu0 4
        %5321 = vperm.xlu0 %5320, %v4567
        %v5322 = vpop.permute.xlu0 %5321
        %v5324 = vmul.f32 %v5244, %v5262
        %v5325 = vmul.f32 %v5245, %v5266
        %v5326 = vmul.f32 %v5246, %v5270
        %v5327 = vmul.f32 %v5247, %v5274
        %v5328 = vmul.f32 %v5248, %v5278
        %v5329 = vmul.f32 %v5249, %v5282
        %v5330 = vmul.f32 %v5250, %v5286
        %v5331 = vmul.f32 %v5251, %v5290
        %v5332 = vmul.f32 %v5252, %v5294
        %v5333 = vmul.f32 %v5253, %v5298
        %v5334 = vmul.f32 %v5254, %v5302
        %v5335 = vmul.f32 %v5255, %v5306
        %v5336 = vmul.f32 %v5256, %v5310
        %v5337 = vmul.f32 %v5257, %v5314
        %v5338 = vmul.f32 %v5258, %v5318
        %v5339 = vmul.f32 %v5259, %v5322
        %v5340 = vadd.f32 %v5195, %v5324
        %v5341 = vadd.f32 %v5196, %v5325
        %v5342 = vadd.f32 %v5197, %v5326
        %v5343 = vadd.f32 %v5198, %v5327
        %v5344 = vadd.f32 %v5199, %v5328
        %v5345 = vadd.f32 %v5200, %v5329
        %v5346 = vadd.f32 %v5201, %v5330
        %v5347 = vadd.f32 %v5202, %v5331
        %v5348 = vadd.f32 %v5203, %v5332
        %v5349 = vadd.f32 %v5204, %v5333
        %v5350 = vadd.f32 %v5205, %v5334
        %v5351 = vadd.f32 %v5206, %v5335
        %v5352 = vadd.f32 %v5207, %v5336
        %v5353 = vadd.f32 %v5208, %v5337
        %v5354 = vadd.f32 %v5209, %v5338
        %v5355 = vadd.f32 %v5210, %v5339
        %v5356 = vmax.f32 %v5340, 0.0
        %v5357 = vmax.f32 %v5341, 0.0
        %v5358 = vmax.f32 %v5342, 0.0
        %v5359 = vmax.f32 %v5343, 0.0
        %v5360 = vmax.f32 %v5344, 0.0
        %v5361 = vmax.f32 %v5345, 0.0
        %v5362 = vmax.f32 %v5346, 0.0
        %v5363 = vmax.f32 %v5347, 0.0
        %v5364 = vmax.f32 %v5348, 0.0
        %v5365 = vmax.f32 %v5349, 0.0
        %v5366 = vmax.f32 %v5350, 0.0
        %v5367 = vmax.f32 %v5351, 0.0
        %v5368 = vmax.f32 %v5352, 0.0
        %v5369 = vmax.f32 %v5353, 0.0
        %v5370 = vmax.f32 %v5354, 0.0
        %v5371 = vmax.f32 %v5355, 0.0
        %v5372 = vld [vmem:[%s16] sm:$0xf]
        %v5373 = vld [vmem:[%s16 + $0x4] sm:$0xf]
        %v5374 = vld [vmem:[%s16 + $0x8] sm:$0xf]
        %v5375 = vld [vmem:[%s16 + $0xc] sm:$0xf]
        %v5376 = vld [vmem:[%s16 + $0x10] sm:$0xf]
        %v5377 = vld [vmem:[%s16 + $0x14] sm:$0xf]
        %v5378 = vld [vmem:[%s16 + $0x18] sm:$0xf]
        %v5379 = vld [vmem:[%s16 + $0x1c] sm:$0xf]
        %v5380 = vpack.c.bf16 %v5357, %v5356
        %v5381 = vpack.c.bf16 %v5359, %v5358
        %v5382 = vpack.c.bf16 %v5361, %v5360
        %v5383 = vpack.c.bf16 %v5363, %v5362
        %v5384 = vpack.c.bf16 %v5365, %v5364
        %v5385 = vpack.c.bf16 %v5367, %v5366
        %v5386 = vpack.c.bf16 %v5369, %v5368
        %v5387 = vpack.c.bf16 %v5371, %v5370
        %v5388 = vld [vmem:[%s17] sm:$0xff]
        %v5389 = vld [vmem:[%s17 + $0x8] sm:$0xff]
        %v5390 = vld [vmem:[%s17 + $0x10] sm:$0xff]
        %v5391 = vld [vmem:[%s17 + $0x18] sm:$0xff]
        %v5392 = vld [vmem:[%s17 + $0x20] sm:$0xff]
        %v5393 = vld [vmem:[%s17 + $0x28] sm:$0xff]
        %v5394 = vld [vmem:[%s17 + $0x30] sm:$0xff]
        %v5395 = vld [vmem:[%s17 + $0x38] sm:$0xff]
        %5397 = vset.pattern.permute.xlu0 0
        %5398 = vperm.xlu0 %5397, %v5388
        %v5399 = vpop.permute.xlu0 %5398
        %5402 = vset.pattern.permute.xlu0 0
        %5403 = vperm.xlu0 %5402, %v5389
        %v5404 = vpop.permute.xlu0 %5403
        %5407 = vset.pattern.permute.xlu0 0
        %5408 = vperm.xlu0 %5407, %v5390
        %v5409 = vpop.permute.xlu0 %5408
        %5412 = vset.pattern.permute.xlu0 0
        %5413 = vperm.xlu0 %5412, %v5391
        %v5414 = vpop.permute.xlu0 %5413
        %5417 = vset.pattern.permute.xlu0 0
        %5418 = vperm.xlu0 %5417, %v5392
        %v5419 = vpop.permute.xlu0 %5418
        %5422 = vset.pattern.permute.xlu0 0
        %5423 = vperm.xlu0 %5422, %v5393
        %v5424 = vpop.permute.xlu0 %5423
        %5427 = vset.pattern.permute.xlu0 0
        %5428 = vperm.xlu0 %5427, %v5394
        %v5429 = vpop.permute.xlu0 %5428
        %5432 = vset.pattern.permute.xlu0 0
        %5433 = vperm.xlu0 %5432, %v5395
        %v5434 = vpop.permute.xlu0 %5433
        %v5444 = vunpack.c.l.b16 %v5372
        %v5445 = vunpack.c.l.b16 %v5373
        %v5446 = vunpack.c.l.b16 %v5374
        %v5447 = vunpack.c.l.b16 %v5375
        %v5448 = vunpack.c.l.b16 %v5376
        %v5449 = vunpack.c.l.b16 %v5377
        %v5450 = vunpack.c.l.b16 %v5378
        %v5451 = vunpack.c.l.b16 %v5379
        %v5452 = vpack.c.b16 %v5445, %v5444
        %v5453 = vpack.c.b16 %v5447, %v5446
        %v5454 = vpack.c.b16 %v5449, %v5448
        %v5455 = vpack.c.b16 %v5451, %v5450
        %5460 = vmatprep.subr.bf16.mxu0 0
        %5461 = vmatpush1.bf16.msra.mxu0 %v5380
        %5462 = vmatprep.subr.bf16.mxu0 0
        %5463 = vmatpush1.bf16.msra.mxu0 %v5381
        %5464 = vmatprep.subr.bf16.mxu0 0
        %5465 = vmatpush1.bf16.msra.mxu0 %v5382
        %5466 = vmatprep.subr.bf16.mxu0 0
        %5467 = vmatpush1.bf16.msra.mxu0 %v5383
        %5468 = vmatprep.subr.bf16.mxu0 0
        %5469 = vmatpush1.bf16.msra.mxu0 %v5384
        %5470 = vmatprep.subr.bf16.mxu0 0
        %5471 = vmatpush1.bf16.msra.mxu0 %v5385
        %5472 = vmatprep.subr.bf16.mxu0 0
        %5473 = vmatpush1.bf16.msra.mxu0 %v5386
        %5474 = vmatprep.subr.bf16.mxu0 0
        %5475 = vmatpush1.bf16.msra.mxu0 %v5387
        %5476 = vmatprep.subr.bf16.mxu0 0
        %5477 = vmatpush1.bf16.msra.mxu0 0
        %5478 = vmatprep.subr.bf16.mxu0 0
        %5479 = vmatpush1.bf16.msra.mxu0 0
        %5480 = vmatprep.subr.bf16.mxu0 0
        %5481 = vmatpush1.bf16.msra.mxu0 0
        %5482 = vmatprep.subr.bf16.mxu0 0
        %5483 = vmatpush1.bf16.msra.mxu0 0
        %5484 = vmatprep.subr.bf16.mxu0 0
        %5485 = vmatpush1.bf16.msra.mxu0 0
        %5486 = vmatprep.subr.bf16.mxu0 0
        %5487 = vmatpush1.bf16.msra.mxu0 0
        %5488 = vmatprep.subr.bf16.mxu0 0
        %5489 = vmatpush1.bf16.msra.mxu0 0
        %5490 = vmatprep.subr.bf16.mxu0 0
        %5491 = vmatpush1.bf16.msra.mxu0 0
        %5492 = vmatprep.mubr.bf16.mxu0 0
        %5493 = vmatmul.mubr.bf16.gmra.mrb[0].mxu0 %v5452
        %v5494 = vpop.f32.mrb[0].mxu0
        %v5495 = vadd.f32 %v5399, %v5494
        %v5496 = vpop.f32.mrb[0].mxu0
        %v5497 = vpop.f32.mrb[0].mxu0
        %v5498 = vadd.f32 %v5404, %v5497
        %v5499 = vpop.f32.mrb[0].mxu0
        %5500 = vmatprep.mubr.bf16.mxu0 0
        %5501 = vmatmul.mubr.bf16.gmra.mrb[0].mxu0 %v5453
        %v5502 = vpop.f32.mrb[0].mxu0
        %v5503 = vadd.f32 %v5409, %v5502
        %v5504 = vpop.f32.mrb[0].mxu0
        %v5505 = vpop.f32.mrb[0].mxu0
        %v5506 = vadd.f32 %v5414, %v5505
        %v5507 = vpop.f32.mrb[0].mxu0
        %5508 = vmatprep.mubr.bf16.mxu0 0
        %5509 = vmatmul.mubr.bf16.gmra.mrb[0].mxu0 %v5454
        %v5510 = vpop.f32.mrb[0].mxu0
        %v5511 = vadd.f32 %v5419, %v5510
        %v5512 = vpop.f32.mrb[0].mxu0
        %v5513 = vpop.f32.mrb[0].mxu0
        %v5514 = vadd.f32 %v5424, %v5513
        %v5515 = vpop.f32.mrb[0].mxu0
        %5516 = vmatprep.mubr.bf16.mxu0 0
        %5517 = vmatmul.mubr.bf16.gmra.mrb[0].mxu0 %v5455
        %v5518 = vpop.f32.mrb[0].mxu0
        %v5519 = vadd.f32 %v5429, %v5518
        %v5520 = vpop.f32.mrb[0].mxu0
        %v5521 = vpop.f32.mrb[0].mxu0
        %v5522 = vadd.f32 %v5434, %v5521
        %v5523 = vpop.f32.mrb[0].mxu0
        %5524 = vdwg.mxu0
        %v5525 = vadd.f32 %v5495, %v4249
        %v5526 = vadd.f32 %v5498, %v4250
        %v5527 = vadd.f32 %v5503, %v4251
        %v5528 = vadd.f32 %v5506, %v4252
        %v5529 = vadd.f32 %v5511, %v4253
        %v5530 = vadd.f32 %v5514, %v4254
        %v5531 = vadd.f32 %v5519, %v4255
        %v5532 = vadd.f32 %v5522, %v4256
        %5533 = vst [vmem:[%s568] sm:$0xff] %v5525
        %5534 = vst [vmem:[%s568 + $0x8] sm:$0xff] %v5526
        %5535 = vst [vmem:[%s568 + $0x10] sm:$0xff] %v5527
        %5536 = vst [vmem:[%s568 + $0x18] sm:$0xff] %v5528
        %5537 = vst [vmem:[%s568 + $0x20] sm:$0xff] %v5529
        %5538 = vst [vmem:[%s568 + $0x28] sm:$0xff] %v5530
        %5539 = vst [vmem:[%s568 + $0x30] sm:$0xff] %v5531
        %5540 = vst [vmem:[%s568 + $0x38] sm:$0xff] %v5532
        %s5541 = sand.u32 %s423, 1
        %s5542 = scalar_lea.sflag [#allocation3], %s5541
        %s5543 = sand.u32 %s423, 1
        %s5544 = smul.addr %s5543, 64
        %s5545 = scalar_lea.vmem [#allocation2], %s5544
        // Predicated region
        $region93: #{tpu_custom_call.1} parent=91 // pred_check
          %p5546 = pneg %p433
        $region94: #{tpu_custom_call.1} parent=91 // pred_check_branch
          %5548 = sbr.rel (%p5546) target = $region96
        $region95: #{tpu_custom_call.1} parent=91 // pred_region
          %s5550 = ssub.s32 1024, 1024
          %5551 = vsyncadd %s5542, %s5550
          %s5552 = smul.addr %s32, 8
          %s5553 = smul.addr %s5552, 128
          %s5554 = scalar_lea.hbm %s18, %s5553
          %s5555 = sshll.u32 %s5545, 4
          %s5556 = int_to_ptr.vmem [resolvable:$true] %s5555
          %5561 = dma.vmem_to_hbm [thread:$0]  %s5556, 1024, %s5554, %s5542, 128, 128, 8
        $region96: #{tpu_custom_call.1} parent=91 // pred_fallthru
          _
      $region92: #{tpu_custom_call.1} parent=5 // pred_fallthru
        _
      %p5562 = scmp.le.s32.totalorder 2, %s27
      // Predicated region
      $region97: #{tpu_custom_call.1} parent=5 // pred_check
        %p5563 = pneg %p5562
      $region98: #{tpu_custom_call.1} parent=5 // pred_check_branch
        %5565 = sbr.rel (%p5563) target = $region100
      $region99: #{tpu_custom_call.1} parent=5 // pred_region
        %s5566 = ssub.s32 %s27, 2
        // Predicated region
        $region101: #{tpu_custom_call.1} parent=99 // pred_check
          %p5567 = pneg %p439
        $region102: #{tpu_custom_call.1} parent=99 // pred_check_branch
          %5569 = sbr.rel (%p5567) target = $region104
        $region103: #{tpu_custom_call.1} parent=99 // pred_region
          %s5570 = sand.u32 %s424, 1
          %s5571 = scalar_lea.sflag [#allocation3], %s5570
          %s5572 = sand.u32 %s424, 1
          %s5573 = smul.addr %s5572, 64
          %s5574 = scalar_lea.vmem [#allocation2], %s5573
          %5575 = dma.done %s5571, 1024
        $region104: #{tpu_custom_call.1} parent=99 // pred_fallthru
          _
      $region100: #{tpu_custom_call.1} parent=5 // pred_fallthru
        _
    $region6: #{tpu_custom_call.1} parent=1 // loop_footer
      %s31 = sadd.s32 1, %s27
    $region7: #{tpu_custom_call.1} parent=1 // loop_footer_branch
      %26 = sbr.rel target = $region3
    $region8: #{tpu_custom_call.1} parent=1 // loop_exit
      _
    %5576 = vsyncpa [#allocation3], 1
    %s5577 = scalar_lea.sflag [#allocation3], 1
    %5578 = vsyncpa %s5577, 1

</llo_original>
